<compile_context>
chip_gen: v7x
topology: tpu7x:2x2x1
jax: 0.10.0
libtpu: 0.0.40
codegen_flags: <defaults>
</compile_context>

<pallas_src>
import math
import functools

import jax
import jax.numpy as jnp
from jax.experimental import pallas as pl
from jax.experimental.pallas import tpu as pltpu


def _bf16(x):
    return x.astype(jnp.bfloat16)


def _layernorm(y, g, b, eps):
    # Single-pass statistics: saves one cross-lane reduction per LayerNorm.
    mu = jnp.mean(y, axis=-1, keepdims=True)
    var = jnp.mean(y * y, axis=-1, keepdims=True) - mu * mu
    return (y - mu) * jax.lax.rsqrt(var + eps) * g + b


# ---------------------------------------------------------------------------
# Fused forward kernel: one grid step = (batch tile bt, encoder layer l).
# ---------------------------------------------------------------------------
def _fused_forward_kernel(
        x_ref, in_w_ref, in_b_ref,
        qkv_w_ref, qkv_b_ref, ao_w_ref, ao_b_ref,
        ln1_g_ref, ln1_b_ref,
        ff1_w_ref, ff1_b_ref, ff2_w_ref, ff2_b_ref,
        ln2_g_ref, ln2_b_ref,
        out_w_ref, out_b_ref,
        o_ref,
        h_ref,
        *, num_heads, seq_len, eps):
    l = pl.program_id(1)
    last = pl.num_programs(1) - 1

    R, D = h_ref.shape            # R = Bt * S rows, D = embed dim
    S = seq_len
    Bt = R // S
    dh = D // num_heads
    scale = 1.0 / math.sqrt(dh)

    # ---- layer-0 prologue: input projection, result kept resident in VMEM ----
    @pl.when(l == 0)
    def _():
        h_ref[...] = (jnp.dot(_bf16(x_ref[...]), in_w_ref[...],
                              preferred_element_type=jnp.float32)
                      + in_b_ref[...])

    h = h_ref[...]                                          # (R, D) f32

    # ---- self-attention block (all heads, whole batch tile, in one step) ----
    qkv = (jnp.dot(_bf16(h), qkv_w_ref[...],
                   preferred_element_type=jnp.float32)
           + qkv_b_ref[...])                                 # (R, 3D) f32

    a_acc = jnp.zeros((R, D), jnp.float32)
    for hh in range(num_heads):                              # static unroll, H = 4
        lo = hh * dh
        q = qkv[:, lo:lo + dh].reshape(Bt, S, dh)            # (Bt, S, dh)
        k = qkv[:, D + lo:D + lo + dh].reshape(Bt, S, dh)
        v = qkv[:, 2 * D + lo:2 * D + lo + dh].reshape(Bt, S, dh)

        s = jnp.einsum('bqd,bkd->bqk', _bf16(q), _bf16(k),
                       preferred_element_type=jnp.float32) * scale   # (Bt, S, S)
        s = s - jnp.max(s, axis=-1, keepdims=True)
        p = jnp.exp(s)
        p = p * pl.reciprocal(jnp.sum(p, axis=-1, keepdims=True), approx=True)
        o_h = jnp.einsum('bqk,bkd->bqd', _bf16(p), _bf16(v),
                         preferred_element_type=jnp.float32)          # (Bt, S, dh)
        # concat(o_0..o_{H-1}) @ ao_w  ==  sum_h o_h @ ao_w[h*dh:(h+1)*dh, :]
        a_acc = a_acc + jnp.dot(_bf16(o_h.reshape(R, dh)),
                                ao_w_ref[lo:lo + dh, :],
                                preferred_element_type=jnp.float32)
    a = a_acc + ao_b_ref[...]
    h = _layernorm(h + a, ln1_g_ref[...], ln1_b_ref[...], eps)   # norm1(x + sa(x))

    # ---- feed-forward block (bf16 intermediate: halves the largest live buf) ----
    f = (jnp.dot(_bf16(h), ff1_w_ref[...],
                 preferred_element_type=jnp.float32) + ff1_b_ref[...])
    f = jnp.maximum(f, 0.0).astype(jnp.bfloat16)                  # (R, F) bf16
    f = (jnp.dot(f, ff2_w_ref[...],
                 preferred_element_type=jnp.float32) + ff2_b_ref[...])
    h = _layernorm(h + f, ln2_g_ref[...], ln2_b_ref[...], eps)    # norm2(x + ff(x))
    h_ref[...] = h

    # ---- last-layer epilogue: mean-pool over sequence + output projection ----
    # NOTE: the (Bt, D) output block is only written here; correct because the
    # layer axis is sequential ("arbitrary") and last for each batch tile.
    @pl.when(l == last)
    def _():
        pooled = jnp.mean(h.reshape(Bt, S, D), axis=1)            # (Bt, D)
        o_ref[...] = (jnp.dot(_bf16(pooled), out_w_ref[...],
                              preferred_element_type=jnp.float32)
                      + out_b_ref[...])


# ---------------------------------------------------------------------------
# Parameters (per-layer weights stacked on a leading layer axis; matmul weights
# stored bf16, biases / LN params f32).
# ---------------------------------------------------------------------------
def init_params(key, input_dim=7, embed_dim=128, num_layers=2, ffn_dim=2048):
    Fp = 8                      # input_dim padded to 8 (extra row is zero)
    L, D, F = num_layers, embed_dim, ffn_dim
    ks = iter(jax.random.split(key, 8))

    def w(shape):
        return (0.02 * jax.random.normal(next(ks), shape)).astype(jnp.bfloat16)

    def zeros(shape):
        return jnp.zeros(shape, jnp.float32)

    def ones(shape):
        return jnp.ones(shape, jnp.float32)

    in_w = jnp.zeros((Fp, D), jnp.float32).at[:input_dim].set(
        0.02 * jax.random.normal(next(ks), (input_dim, D)))

    return {
        "in_w": in_w.astype(jnp.bfloat16), "in_b": zeros((1, D)),
        "qkv_w": w((L, D, 3 * D)),         "qkv_b": zeros((L, 1, 3 * D)),
        "ao_w":  w((L, D, D)),             "ao_b":  zeros((L, 1, D)),
        "ff1_w": w((L, D, F)),             "ff1_b": zeros((L, 1, F)),
        "ff2_w": w((L, F, D)),             "ff2_b": zeros((L, 1, D)),
        "ln1_g": ones((L, 1, D)),          "ln1_b": zeros((L, 1, D)),
        "ln2_g": ones((L, 1, D)),          "ln2_b": zeros((L, 1, D)),
        "out_w": w((D, D)),                "out_b": zeros((1, D)),
    }


# ---------------------------------------------------------------------------
# Forward pass: pad/truncate feature dim (PyTorch semantics), one pallas_call.
# block_b: batch-tile size (v5e: 32-64, v7x: 64-128, v6e: up to 256).  Should
# be a multiple of 8 when B > block_b.
# ---------------------------------------------------------------------------
def event_transformer_forward(params, x, num_heads=4, block_b=64):
    B, S, F = x.shape
    # Match the PyTorch forward: pad / truncate the last dim to 7, then add one
    # extra zero column so the input-proj contraction is 8-aligned (the matching
    # in_w row is zero, so the result is identical).
    if F < 7:
        x = jnp.concatenate([x, jnp.zeros((B, S, 7 - F), x.dtype)], axis=-1)
    elif F > 7:
        x = x[..., :7]
    x = jnp.concatenate([x, jnp.zeros((B, S, 1), x.dtype)], axis=-1)   # (B, S, 8)

    L = params["qkv_w"].shape[0]
    D = params["in_w"].shape[1]
    Fp = params["in_w"].shape[0]
    Fd = params["ff1_w"].shape[2]

    # ---- batch tiling ----
    Bt = B if B <= block_b else block_b
    nbt = pl.cdiv(B, Bt)
    B_pad = nbt * Bt
    if B_pad != B:
        x = jnp.concatenate([x, jnp.zeros((B_pad - B, S, Fp), x.dtype)], axis=0)
    x2 = x.reshape(B_pad * S, Fp)         # host-flattened: kernel sees (Bt*S, Fp) rows

    full2 = lambda bt, l: (0, 0)
    per_layer = lambda bt, l: (l, 0, 0)
    sq = pl.Squeezed()

    in_specs = [
        pl.BlockSpec((Bt * S, Fp), lambda bt, l: (bt, 0)),   # x rows (per batch tile)
        pl.BlockSpec((Fp, D), full2),                        # in_w
        pl.BlockSpec((1, D), full2),                         # in_b
        pl.BlockSpec((sq, D, 3 * D), per_layer),             # qkv_w
        pl.BlockSpec((sq, 1, 3 * D), per_layer),             # qkv_b
        pl.BlockSpec((sq, D, D), per_layer),                 # ao_w
        pl.BlockSpec((sq, 1, D), per_layer),                 # ao_b
        pl.BlockSpec((sq, 1, D), per_layer),                 # ln1_g
        pl.BlockSpec((sq, 1, D), per_layer),                 # ln1_b
        pl.BlockSpec((sq, D, Fd), per_layer),                # ff1_w
        pl.BlockSpec((sq, 1, Fd), per_layer),                # ff1_b
        pl.BlockSpec((sq, Fd, D), per_layer),                # ff2_w
        pl.BlockSpec((sq, 1, D), per_layer),                 # ff2_b
        pl.BlockSpec((sq, 1, D), per_layer),                 # ln2_g
        pl.BlockSpec((sq, 1, D), per_layer),                 # ln2_b
        pl.BlockSpec((D, D), full2),                         # out_w
        pl.BlockSpec((1, D), full2),                         # out_b
    ]
    # Lane-dense (Bt, D) output slab.
    out_spec = pl.BlockSpec((Bt, D), lambda bt, l: (bt, 0))

    # Advisory cost estimate for the XLA scheduler.
    per_tok_layer = 2 * D * 3 * D + 2 * D * D + 4 * D * Fd + 4 * S * D
    flops = B_pad * S * (2 * Fp * D + L * per_tok_layer) + B_pad * 2 * D * D
    transc = B_pad * L * num_heads * S * S
    w_bytes_layer = 2 * (D * 3 * D + D * D + 2 * D * Fd)     # bf16 per-layer weights
    bytes_accessed = (nbt * L * w_bytes_layer
                      + B_pad * S * Fp * 4
                      + B_pad * D * 4
                      + 2 * (Fp * D + D * D))

    out = pl.pallas_call(
        functools.partial(_fused_forward_kernel,
                          num_heads=num_heads, seq_len=S, eps=1e-5),
        out_shape=jax.ShapeDtypeStruct((B_pad, D), jnp.float32),
        grid_spec=pltpu.PrefetchScalarGridSpec(
            num_scalar_prefetch=0,
            grid=(nbt, L),
            in_specs=in_specs,
            out_specs=out_spec,
            scratch_shapes=[pltpu.VMEM((Bt * S, D), jnp.float32)],
        ),
        compiler_params=pltpu.CompilerParams(
            dimension_semantics=("parallel", "arbitrary"),
            vmem_limit_bytes=48 * 1024 * 1024),
        cost_estimate=pl.CostEstimate(
            flops=flops, transcendentals=transc, bytes_accessed=bytes_accessed),
    )(x2,
      params["in_w"], params["in_b"],
      params["qkv_w"], params["qkv_b"], params["ao_w"], params["ao_b"],
      params["ln1_g"], params["ln1_b"],
      params["ff1_w"], params["ff1_b"], params["ff2_w"], params["ff2_b"],
      params["ln2_g"], params["ln2_b"],
      params["out_w"], params["out_b"])
    return out[:B]


if __name__ == "__main__":
    key = jax.random.PRNGKey(0)
    pkey, xkey = jax.random.split(key)
    params = init_params(pkey)

    # batch=2, seq=8, input_dim=7 (embed_dim=128, num_heads=4, num_layers=2)
    x = jax.random.normal(xkey, (2, 8, 7), dtype=jnp.float32)

    out = jax.jit(event_transformer_forward)(params, x)
    jax.block_until_ready(out)
    assert out.shape == (2, 128) and out.dtype == jnp.float32
    print("KERNEL_OK")
</pallas_src>

<mosaic_0001>
module attributes {stable_mosaic.version = 11 : i64} {
  func.func @_fused_forward_kernel(%arg0: i32, %arg1: i32, %arg2: memref<16x8xf32, #tpu.memory_space<vmem>>, %arg3: memref<8x128xbf16, #tpu.memory_space<vmem>>, %arg4: memref<1x128xf32, #tpu.memory_space<vmem>>, %arg5: memref<1x128x384xbf16, #tpu.memory_space<vmem>>, %arg6: memref<1x1x384xf32, #tpu.memory_space<vmem>>, %arg7: memref<1x128x128xbf16, #tpu.memory_space<vmem>>, %arg8: memref<1x1x128xf32, #tpu.memory_space<vmem>>, %arg9: memref<1x1x128xf32, #tpu.memory_space<vmem>>, %arg10: memref<1x1x128xf32, #tpu.memory_space<vmem>>, %arg11: memref<1x128x2048xbf16, #tpu.memory_space<vmem>>, %arg12: memref<1x1x2048xf32, #tpu.memory_space<vmem>>, %arg13: memref<1x2048x128xbf16, #tpu.memory_space<vmem>>, %arg14: memref<1x1x128xf32, #tpu.memory_space<vmem>>, %arg15: memref<1x1x128xf32, #tpu.memory_space<vmem>>, %arg16: memref<1x1x128xf32, #tpu.memory_space<vmem>>, %arg17: memref<128x128xbf16, #tpu.memory_space<vmem>>, %arg18: memref<1x128xf32, #tpu.memory_space<vmem>>, %arg19: memref<2x128xf32, #tpu.memory_space<vmem>>, %arg20: memref<16x128xf32, #tpu.memory_space<vmem>>) attributes {dimension_semantics = [#tpu.dimension_semantics<parallel>, #tpu.dimension_semantics<arbitrary>], iteration_bounds = array<i64: 1, 2>, scalar_prefetch = 0 : i64, scratch_operands = 1 : i64, tpu.core_type = #tpu.core_type<tc>, window_params = [{transform_indices = @transform_0, window_bounds = array<i64: 16, 8>}, {pipeline_mode = #tpu.pipeline_mode<synchronous>, transform_indices = @transform_1, window_bounds = array<i64: 8, 128>}, {pipeline_mode = #tpu.pipeline_mode<synchronous>, transform_indices = @transform_2, window_bounds = array<i64: 1, 128>}, {transform_indices = @transform_3, window_bounds = array<i64: 1, 128, 384>}, {transform_indices = @transform_4, window_bounds = array<i64: 1, 1, 384>}, {transform_indices = @transform_5, window_bounds = array<i64: 1, 128, 128>}, {transform_indices = @transform_6, window_bounds = array<i64: 1, 1, 128>}, {transform_indices = @transform_7, window_bounds = array<i64: 1, 1, 128>}, {transform_indices = @transform_8, window_bounds = array<i64: 1, 1, 128>}, {transform_indices = @transform_9, window_bounds = array<i64: 1, 128, 2048>}, {transform_indices = @transform_10, window_bounds = array<i64: 1, 1, 2048>}, {transform_indices = @transform_11, window_bounds = array<i64: 1, 2048, 128>}, {transform_indices = @transform_12, window_bounds = array<i64: 1, 1, 128>}, {transform_indices = @transform_13, window_bounds = array<i64: 1, 1, 128>}, {transform_indices = @transform_14, window_bounds = array<i64: 1, 1, 128>}, {pipeline_mode = #tpu.pipeline_mode<synchronous>, transform_indices = @transform_15, window_bounds = array<i64: 128, 128>}, {pipeline_mode = #tpu.pipeline_mode<synchronous>, transform_indices = @transform_16, window_bounds = array<i64: 1, 128>}, {transform_indices = @transform_17, window_bounds = array<i64: 2, 128>}]} {
    %c0_i32 = arith.constant 0 : i32
    %0 = arith.cmpi eq, %arg1, %c0_i32 : i32
    %1 = arith.extui %0 : i1 to i32
    %c0_i32_0 = arith.constant 0 : i32
    %2 = arith.cmpi ne, %1, %c0_i32_0 : i32
    scf.if %2 {
      %c0_85 = arith.constant 0 : index
      %c0_86 = arith.constant 0 : index
      %213 = vector.load %arg2[%c0_85, %c0_86] : memref<16x8xf32, #tpu.memory_space<vmem>>, vector<16x8xf32>
      %214 = arith.truncf %213 : vector<16x8xf32> to vector<16x8xbf16>
      %c0_87 = arith.constant 0 : index
      %c0_88 = arith.constant 0 : index
      %215 = vector.load %arg3[%c0_87, %c0_88] : memref<8x128xbf16, #tpu.memory_space<vmem>>, vector<8x128xbf16>
      %cst_89 = arith.constant dense<0.000000e+00> : vector<16x128xf32>
      %216 = tpu.matmul %214, %215, %cst_89 {dimension_numbers = #tpu.dot_dimension_numbers<[1], [0], [0], [1], [0, 0, 1, 1], [], []>} : vector<16x8xbf16>, vector<8x128xbf16>, vector<16x128xf32> -> vector<16x128xf32>
      %c0_90 = arith.constant 0 : index
      %c0_91 = arith.constant 0 : index
      %217 = vector.load %arg4[%c0_90, %c0_91] : memref<1x128xf32, #tpu.memory_space<vmem>>, vector<1x128xf32>
      %218 = vector.broadcast %217 : vector<1x128xf32> to vector<16x128xf32>
      %219 = arith.addf %216, %218 : vector<16x128xf32>
      %c0_92 = arith.constant 0 : index
      %c0_93 = arith.constant 0 : index
      %220 = vector.load %arg20[%c0_92, %c0_93] : memref<16x128xf32, #tpu.memory_space<vmem>>, vector<16x128xf32>
      tpu.vector_store %arg20[%c0_92, %c0_93], %219 {strides = array<i32>} : memref<16x128xf32, #tpu.memory_space<vmem>>, vector<16x128xf32>,
    } else {
    }
    %c0 = arith.constant 0 : index
    %c0_1 = arith.constant 0 : index
    %3 = vector.load %arg20[%c0, %c0_1] : memref<16x128xf32, #tpu.memory_space<vmem>>, vector<16x128xf32>
    %4 = arith.truncf %3 : vector<16x128xf32> to vector<16x128xbf16>
    %c0_2 = arith.constant 0 : index
    %c0_3 = arith.constant 0 : index
    %c0_4 = arith.constant 0 : index
    %5 = vector.load %arg5[%c0_2, %c0_3, %c0_4] : memref<1x128x384xbf16, #tpu.memory_space<vmem>>, vector<1x128x384xbf16>
    %6 = vector.shape_cast %5 : vector<1x128x384xbf16> to vector<128x384xbf16>
    %cst = arith.constant dense<0.000000e+00> : vector<16x384xf32>
    %7 = tpu.matmul %4, %6, %cst {dimension_numbers = #tpu.dot_dimension_numbers<[1], [0], [0], [1], [0, 0, 1, 1], [], []>} : vector<16x128xbf16>, vector<128x384xbf16>, vector<16x384xf32> -> vector<16x384xf32>
    %c0_5 = arith.constant 0 : index
    %c0_6 = arith.constant 0 : index
    %c0_7 = arith.constant 0 : index
    %8 = vector.load %arg6[%c0_5, %c0_6, %c0_7] : memref<1x1x384xf32, #tpu.memory_space<vmem>>, vector<1x1x384xf32>
    %9 = vector.shape_cast %8 : vector<1x1x384xf32> to vector<1x384xf32>
    %10 = vector.broadcast %9 : vector<1x384xf32> to vector<16x384xf32>
    %11 = arith.addf %7, %10 : vector<16x384xf32>
    %cst_8 = arith.constant 0.000000e+00 : f32
    %12 = vector.broadcast %cst_8 : f32 to vector<16x128xf32>
    %13 = vector.extract_strided_slice %11 {offsets = [0, 0], sizes = [16, 32], strides = [1, 1]} : vector<16x384xf32> to vector<16x32xf32>
    %14 = vector.shape_cast %13 : vector<16x32xf32> to vector<2x8x32xf32>
    %15 = vector.extract_strided_slice %11 {offsets = [0, 128], sizes = [16, 32], strides = [1, 1]} : vector<16x384xf32> to vector<16x32xf32>
    %16 = vector.shape_cast %15 : vector<16x32xf32> to vector<2x8x32xf32>
    %17 = vector.extract_strided_slice %11 {offsets = [0, 256], sizes = [16, 32], strides = [1, 1]} : vector<16x384xf32> to vector<16x32xf32>
    %18 = vector.shape_cast %17 : vector<16x32xf32> to vector<2x8x32xf32>
    %19 = arith.truncf %14 : vector<2x8x32xf32> to vector<2x8x32xbf16>
    %20 = arith.truncf %16 : vector<2x8x32xf32> to vector<2x8x32xbf16>
    "tpu.trace_start"() <{level = 10 : i32, message = "bqd,bkd->bqk"}> : () -> ()
    %cst_9 = arith.constant dense<0.000000e+00> : vector<2x8x8xf32>
    %21 = tpu.matmul %19, %20, %cst_9 {dimension_numbers = #tpu.dot_dimension_numbers<[2], [2], [1], [1], [0, 0, 0, 1, 1, 1], [0], [0]>} : vector<2x8x32xbf16>, vector<2x8x32xbf16>, vector<2x8x8xf32> -> vector<2x8x8xf32>
    "tpu.trace_stop"() : () -> ()
    %cst_10 = arith.constant 0.176776692 : f32
    %22 = vector.broadcast %cst_10 : f32 to vector<2x8x8xf32>
    %23 = arith.mulf %21, %22 : vector<2x8x8xf32>
    %cst_11 = arith.constant dense<0xFF800000> : vector<2x8xf32>
    %24 = vector.multi_reduction <maximumf>, %23, %cst_11 [2] : vector<2x8x8xf32> to vector<2x8xf32>
    %25 = vector.shape_cast %24 : vector<2x8xf32> to vector<2x8x1xf32>
    %26 = vector.broadcast %25 : vector<2x8x1xf32> to vector<2x8x8xf32>
    %27 = arith.subf %23, %26 : vector<2x8x8xf32>
    %28 = math.exp %27 : vector<2x8x8xf32>
    %cst_12 = arith.constant dense<0.000000e+00> : vector<2x8xf32>
    %29 = vector.multi_reduction <add>, %28, %cst_12 [2] : vector<2x8x8xf32> to vector<2x8xf32>
    %30 = vector.shape_cast %29 : vector<2x8xf32> to vector<2x8x1xf32>
    %31 = tpu.reciprocal %30 {approx = true} : vector<2x8x1xf32> -> vector<2x8x1xf32>
    %32 = vector.broadcast %31 : vector<2x8x1xf32> to vector<2x8x8xf32>
    %33 = arith.mulf %28, %32 : vector<2x8x8xf32>
    %34 = arith.truncf %33 : vector<2x8x8xf32> to vector<2x8x8xbf16>
    %35 = arith.truncf %18 : vector<2x8x32xf32> to vector<2x8x32xbf16>
    "tpu.trace_start"() <{level = 10 : i32, message = "bqk,bkd->bqd"}> : () -> ()
    %cst_13 = arith.constant dense<0.000000e+00> : vector<2x8x32xf32>
    %36 = tpu.matmul %34, %35, %cst_13 {dimension_numbers = #tpu.dot_dimension_numbers<[2], [1], [1], [2], [0, 0, 0, 1, 1, 2], [0], [0]>} : vector<2x8x8xbf16>, vector<2x8x32xbf16>, vector<2x8x32xf32> -> vector<2x8x32xf32>
    "tpu.trace_stop"() : () -> ()
    %37 = vector.shape_cast %36 : vector<2x8x32xf32> to vector<16x32xf32>
    %38 = arith.truncf %37 : vector<16x32xf32> to vector<16x32xbf16>
    %c0_14 = arith.constant 0 : index
    %c0_15 = arith.constant 0 : index
    %c0_16 = arith.constant 0 : index
    %39 = vector.load %arg7[%c0_14, %c0_15, %c0_16] : memref<1x128x128xbf16, #tpu.memory_space<vmem>>, vector<1x32x128xbf16>
    %40 = vector.shape_cast %39 : vector<1x32x128xbf16> to vector<32x128xbf16>
    %cst_17 = arith.constant dense<0.000000e+00> : vector<16x128xf32>
    %41 = tpu.matmul %38, %40, %cst_17 {dimension_numbers = #tpu.dot_dimension_numbers<[1], [0], [0], [1], [0, 0, 1, 1], [], []>} : vector<16x32xbf16>, vector<32x128xbf16>, vector<16x128xf32> -> vector<16x128xf32>
    %42 = arith.addf %12, %41 : vector<16x128xf32>
    %43 = vector.extract_strided_slice %11 {offsets = [0, 32], sizes = [16, 32], strides = [1, 1]} : vector<16x384xf32> to vector<16x32xf32>
    %44 = vector.shape_cast %43 : vector<16x32xf32> to vector<2x8x32xf32>
    %45 = vector.extract_strided_slice %11 {offsets = [0, 160], sizes = [16, 32], strides = [1, 1]} : vector<16x384xf32> to vector<16x32xf32>
    %46 = vector.shape_cast %45 : vector<16x32xf32> to vector<2x8x32xf32>
    %47 = vector.extract_strided_slice %11 {offsets = [0, 288], sizes = [16, 32], strides = [1, 1]} : vector<16x384xf32> to vector<16x32xf32>
    %48 = vector.shape_cast %47 : vector<16x32xf32> to vector<2x8x32xf32>
    %49 = arith.truncf %44 : vector<2x8x32xf32> to vector<2x8x32xbf16>
    %50 = arith.truncf %46 : vector<2x8x32xf32> to vector<2x8x32xbf16>
    "tpu.trace_start"() <{level = 10 : i32, message = "bqd,bkd->bqk"}> : () -> ()
    %cst_18 = arith.constant dense<0.000000e+00> : vector<2x8x8xf32>
    %51 = tpu.matmul %49, %50, %cst_18 {dimension_numbers = #tpu.dot_dimension_numbers<[2], [2], [1], [1], [0, 0, 0, 1, 1, 1], [0], [0]>} : vector<2x8x32xbf16>, vector<2x8x32xbf16>, vector<2x8x8xf32> -> vector<2x8x8xf32>
    "tpu.trace_stop"() : () -> ()
    %cst_19 = arith.constant 0.176776692 : f32
    %52 = vector.broadcast %cst_19 : f32 to vector<2x8x8xf32>
    %53 = arith.mulf %51, %52 : vector<2x8x8xf32>
    %cst_20 = arith.constant dense<0xFF800000> : vector<2x8xf32>
    %54 = vector.multi_reduction <maximumf>, %53, %cst_20 [2] : vector<2x8x8xf32> to vector<2x8xf32>
    %55 = vector.shape_cast %54 : vector<2x8xf32> to vector<2x8x1xf32>
    %56 = vector.broadcast %55 : vector<2x8x1xf32> to vector<2x8x8xf32>
    %57 = arith.subf %53, %56 : vector<2x8x8xf32>
    %58 = math.exp %57 : vector<2x8x8xf32>
    %cst_21 = arith.constant dense<0.000000e+00> : vector<2x8xf32>
    %59 = vector.multi_reduction <add>, %58, %cst_21 [2] : vector<2x8x8xf32> to vector<2x8xf32>
    %60 = vector.shape_cast %59 : vector<2x8xf32> to vector<2x8x1xf32>
    %61 = tpu.reciprocal %60 {approx = true} : vector<2x8x1xf32> -> vector<2x8x1xf32>
    %62 = vector.broadcast %61 : vector<2x8x1xf32> to vector<2x8x8xf32>
    %63 = arith.mulf %58, %62 : vector<2x8x8xf32>
    %64 = arith.truncf %63 : vector<2x8x8xf32> to vector<2x8x8xbf16>
    %65 = arith.truncf %48 : vector<2x8x32xf32> to vector<2x8x32xbf16>
    "tpu.trace_start"() <{level = 10 : i32, message = "bqk,bkd->bqd"}> : () -> ()
    %cst_22 = arith.constant dense<0.000000e+00> : vector<2x8x32xf32>
    %66 = tpu.matmul %64, %65, %cst_22 {dimension_numbers = #tpu.dot_dimension_numbers<[2], [1], [1], [2], [0, 0, 0, 1, 1, 2], [0], [0]>} : vector<2x8x8xbf16>, vector<2x8x32xbf16>, vector<2x8x32xf32> -> vector<2x8x32xf32>
    "tpu.trace_stop"() : () -> ()
    %67 = vector.shape_cast %66 : vector<2x8x32xf32> to vector<16x32xf32>
    %68 = arith.truncf %67 : vector<16x32xf32> to vector<16x32xbf16>
    %c0_23 = arith.constant 0 : index
    %c32 = arith.constant 32 : index
    %c0_24 = arith.constant 0 : index
    %69 = vector.load %arg7[%c0_23, %c32, %c0_24] : memref<1x128x128xbf16, #tpu.memory_space<vmem>>, vector<1x32x128xbf16>
    %70 = vector.shape_cast %69 : vector<1x32x128xbf16> to vector<32x128xbf16>
    %cst_25 = arith.constant dense<0.000000e+00> : vector<16x128xf32>
    %71 = tpu.matmul %68, %70, %cst_25 {dimension_numbers = #tpu.dot_dimension_numbers<[1], [0], [0], [1], [0, 0, 1, 1], [], []>} : vector<16x32xbf16>, vector<32x128xbf16>, vector<16x128xf32> -> vector<16x128xf32>
    %72 = arith.addf %42, %71 : vector<16x128xf32>
    %73 = vector.extract_strided_slice %11 {offsets = [0, 64], sizes = [16, 32], strides = [1, 1]} : vector<16x384xf32> to vector<16x32xf32>
    %74 = vector.shape_cast %73 : vector<16x32xf32> to vector<2x8x32xf32>
    %75 = vector.extract_strided_slice %11 {offsets = [0, 192], sizes = [16, 32], strides = [1, 1]} : vector<16x384xf32> to vector<16x32xf32>
    %76 = vector.shape_cast %75 : vector<16x32xf32> to vector<2x8x32xf32>
    %77 = vector.extract_strided_slice %11 {offsets = [0, 320], sizes = [16, 32], strides = [1, 1]} : vector<16x384xf32> to vector<16x32xf32>
    %78 = vector.shape_cast %77 : vector<16x32xf32> to vector<2x8x32xf32>
    %79 = arith.truncf %74 : vector<2x8x32xf32> to vector<2x8x32xbf16>
    %80 = arith.truncf %76 : vector<2x8x32xf32> to vector<2x8x32xbf16>
    "tpu.trace_start"() <{level = 10 : i32, message = "bqd,bkd->bqk"}> : () -> ()
    %cst_26 = arith.constant dense<0.000000e+00> : vector<2x8x8xf32>
    %81 = tpu.matmul %79, %80, %cst_26 {dimension_numbers = #tpu.dot_dimension_numbers<[2], [2], [1], [1], [0, 0, 0, 1, 1, 1], [0], [0]>} : vector<2x8x32xbf16>, vector<2x8x32xbf16>, vector<2x8x8xf32> -> vector<2x8x8xf32>
    "tpu.trace_stop"() : () -> ()
    %cst_27 = arith.constant 0.176776692 : f32
    %82 = vector.broadcast %cst_27 : f32 to vector<2x8x8xf32>
    %83 = arith.mulf %81, %82 : vector<2x8x8xf32>
    %cst_28 = arith.constant dense<0xFF800000> : vector<2x8xf32>
    %84 = vector.multi_reduction <maximumf>, %83, %cst_28 [2] : vector<2x8x8xf32> to vector<2x8xf32>
    %85 = vector.shape_cast %84 : vector<2x8xf32> to vector<2x8x1xf32>
    %86 = vector.broadcast %85 : vector<2x8x1xf32> to vector<2x8x8xf32>
    %87 = arith.subf %83, %86 : vector<2x8x8xf32>
    %88 = math.exp %87 : vector<2x8x8xf32>
    %cst_29 = arith.constant dense<0.000000e+00> : vector<2x8xf32>
    %89 = vector.multi_reduction <add>, %88, %cst_29 [2] : vector<2x8x8xf32> to vector<2x8xf32>
    %90 = vector.shape_cast %89 : vector<2x8xf32> to vector<2x8x1xf32>
    %91 = tpu.reciprocal %90 {approx = true} : vector<2x8x1xf32> -> vector<2x8x1xf32>
    %92 = vector.broadcast %91 : vector<2x8x1xf32> to vector<2x8x8xf32>
    %93 = arith.mulf %88, %92 : vector<2x8x8xf32>
    %94 = arith.truncf %93 : vector<2x8x8xf32> to vector<2x8x8xbf16>
    %95 = arith.truncf %78 : vector<2x8x32xf32> to vector<2x8x32xbf16>
    "tpu.trace_start"() <{level = 10 : i32, message = "bqk,bkd->bqd"}> : () -> ()
    %cst_30 = arith.constant dense<0.000000e+00> : vector<2x8x32xf32>
    %96 = tpu.matmul %94, %95, %cst_30 {dimension_numbers = #tpu.dot_dimension_numbers<[2], [1], [1], [2], [0, 0, 0, 1, 1, 2], [0], [0]>} : vector<2x8x8xbf16>, vector<2x8x32xbf16>, vector<2x8x32xf32> -> vector<2x8x32xf32>
    "tpu.trace_stop"() : () -> ()
    %97 = vector.shape_cast %96 : vector<2x8x32xf32> to vector<16x32xf32>
    %98 = arith.truncf %97 : vector<16x32xf32> to vector<16x32xbf16>
    %c0_31 = arith.constant 0 : index
    %c64 = arith.constant 64 : index
    %c0_32 = arith.constant 0 : index
    %99 = vector.load %arg7[%c0_31, %c64, %c0_32] : memref<1x128x128xbf16, #tpu.memory_space<vmem>>, vector<1x32x128xbf16>
    %100 = vector.shape_cast %99 : vector<1x32x128xbf16> to vector<32x128xbf16>
    %cst_33 = arith.constant dense<0.000000e+00> : vector<16x128xf32>
    %101 = tpu.matmul %98, %100, %cst_33 {dimension_numbers = #tpu.dot_dimension_numbers<[1], [0], [0], [1], [0, 0, 1, 1], [], []>} : vector<16x32xbf16>, vector<32x128xbf16>, vector<16x128xf32> -> vector<16x128xf32>
    %102 = arith.addf %72, %101 : vector<16x128xf32>
    %103 = vector.extract_strided_slice %11 {offsets = [0, 96], sizes = [16, 32], strides = [1, 1]} : vector<16x384xf32> to vector<16x32xf32>
    %104 = vector.shape_cast %103 : vector<16x32xf32> to vector<2x8x32xf32>
    %105 = vector.extract_strided_slice %11 {offsets = [0, 224], sizes = [16, 32], strides = [1, 1]} : vector<16x384xf32> to vector<16x32xf32>
    %106 = vector.shape_cast %105 : vector<16x32xf32> to vector<2x8x32xf32>
    %107 = vector.extract_strided_slice %11 {offsets = [0, 352], sizes = [16, 32], strides = [1, 1]} : vector<16x384xf32> to vector<16x32xf32>
    %108 = vector.shape_cast %107 : vector<16x32xf32> to vector<2x8x32xf32>
    %109 = arith.truncf %104 : vector<2x8x32xf32> to vector<2x8x32xbf16>
    %110 = arith.truncf %106 : vector<2x8x32xf32> to vector<2x8x32xbf16>
    "tpu.trace_start"() <{level = 10 : i32, message = "bqd,bkd->bqk"}> : () -> ()
    %cst_34 = arith.constant dense<0.000000e+00> : vector<2x8x8xf32>
    %111 = tpu.matmul %109, %110, %cst_34 {dimension_numbers = #tpu.dot_dimension_numbers<[2], [2], [1], [1], [0, 0, 0, 1, 1, 1], [0], [0]>} : vector<2x8x32xbf16>, vector<2x8x32xbf16>, vector<2x8x8xf32> -> vector<2x8x8xf32>
    "tpu.trace_stop"() : () -> ()
    %cst_35 = arith.constant 0.176776692 : f32
    %112 = vector.broadcast %cst_35 : f32 to vector<2x8x8xf32>
    %113 = arith.mulf %111, %112 : vector<2x8x8xf32>
    %cst_36 = arith.constant dense<0xFF800000> : vector<2x8xf32>
    %114 = vector.multi_reduction <maximumf>, %113, %cst_36 [2] : vector<2x8x8xf32> to vector<2x8xf32>
    %115 = vector.shape_cast %114 : vector<2x8xf32> to vector<2x8x1xf32>
    %116 = vector.broadcast %115 : vector<2x8x1xf32> to vector<2x8x8xf32>
    %117 = arith.subf %113, %116 : vector<2x8x8xf32>
    %118 = math.exp %117 : vector<2x8x8xf32>
    %cst_37 = arith.constant dense<0.000000e+00> : vector<2x8xf32>
    %119 = vector.multi_reduction <add>, %118, %cst_37 [2] : vector<2x8x8xf32> to vector<2x8xf32>
    %120 = vector.shape_cast %119 : vector<2x8xf32> to vector<2x8x1xf32>
    %121 = tpu.reciprocal %120 {approx = true} : vector<2x8x1xf32> -> vector<2x8x1xf32>
    %122 = vector.broadcast %121 : vector<2x8x1xf32> to vector<2x8x8xf32>
    %123 = arith.mulf %118, %122 : vector<2x8x8xf32>
    %124 = arith.truncf %123 : vector<2x8x8xf32> to vector<2x8x8xbf16>
    %125 = arith.truncf %108 : vector<2x8x32xf32> to vector<2x8x32xbf16>
    "tpu.trace_start"() <{level = 10 : i32, message = "bqk,bkd->bqd"}> : () -> ()
    %cst_38 = arith.constant dense<0.000000e+00> : vector<2x8x32xf32>
    %126 = tpu.matmul %124, %125, %cst_38 {dimension_numbers = #tpu.dot_dimension_numbers<[2], [1], [1], [2], [0, 0, 0, 1, 1, 2], [0], [0]>} : vector<2x8x8xbf16>, vector<2x8x32xbf16>, vector<2x8x32xf32> -> vector<2x8x32xf32>
    "tpu.trace_stop"() : () -> ()
    %127 = vector.shape_cast %126 : vector<2x8x32xf32> to vector<16x32xf32>
    %128 = arith.truncf %127 : vector<16x32xf32> to vector<16x32xbf16>
    %c0_39 = arith.constant 0 : index
    %c96 = arith.constant 96 : index
    %c0_40 = arith.constant 0 : index
    %129 = vector.load %arg7[%c0_39, %c96, %c0_40] : memref<1x128x128xbf16, #tpu.memory_space<vmem>>, vector<1x32x128xbf16>
    %130 = vector.shape_cast %129 : vector<1x32x128xbf16> to vector<32x128xbf16>
    %cst_41 = arith.constant dense<0.000000e+00> : vector<16x128xf32>
    %131 = tpu.matmul %128, %130, %cst_41 {dimension_numbers = #tpu.dot_dimension_numbers<[1], [0], [0], [1], [0, 0, 1, 1], [], []>} : vector<16x32xbf16>, vector<32x128xbf16>, vector<16x128xf32> -> vector<16x128xf32>
    %132 = arith.addf %102, %131 : vector<16x128xf32>
    %c0_42 = arith.constant 0 : index
    %c0_43 = arith.constant 0 : index
    %c0_44 = arith.constant 0 : index
    %133 = vector.load %arg8[%c0_42, %c0_43, %c0_44] : memref<1x1x128xf32, #tpu.memory_space<vmem>>, vector<1x1x128xf32>
    %134 = vector.shape_cast %133 : vector<1x1x128xf32> to vector<1x128xf32>
    %135 = vector.broadcast %134 : vector<1x128xf32> to vector<16x128xf32>
    %136 = arith.addf %132, %135 : vector<16x128xf32>
    %137 = arith.addf %3, %136 : vector<16x128xf32>
    %c0_45 = arith.constant 0 : index
    %c0_46 = arith.constant 0 : index
    %c0_47 = arith.constant 0 : index
    %138 = vector.load %arg9[%c0_45, %c0_46, %c0_47] : memref<1x1x128xf32, #tpu.memory_space<vmem>>, vector<1x1x128xf32>
    %139 = vector.shape_cast %138 : vector<1x1x128xf32> to vector<1x128xf32>
    %c0_48 = arith.constant 0 : index
    %c0_49 = arith.constant 0 : index
    %c0_50 = arith.constant 0 : index
    %140 = vector.load %arg10[%c0_48, %c0_49, %c0_50] : memref<1x1x128xf32, #tpu.memory_space<vmem>>, vector<1x1x128xf32>
    %141 = vector.shape_cast %140 : vector<1x1x128xf32> to vector<1x128xf32>
    %cst_51 = arith.constant dense<0.000000e+00> : vector<16xf32>
    %142 = vector.multi_reduction <add>, %137, %cst_51 [1] : vector<16x128xf32> to vector<16xf32>
    %143 = vector.shape_cast %142 : vector<16xf32> to vector<16x1xf32>
    %cst_52 = arith.constant 1.280000e+02 : f32
    %144 = vector.broadcast %cst_52 : f32 to vector<16x1xf32>
    %145 = arith.divf %143, %144 : vector<16x1xf32>
    %146 = arith.mulf %137, %137 : vector<16x128xf32>
    %cst_53 = arith.constant dense<0.000000e+00> : vector<16xf32>
    %147 = vector.multi_reduction <add>, %146, %cst_53 [1] : vector<16x128xf32> to vector<16xf32>
    %148 = vector.shape_cast %147 : vector<16xf32> to vector<16x1xf32>
    %cst_54 = arith.constant 1.280000e+02 : f32
    %149 = vector.broadcast %cst_54 : f32 to vector<16x1xf32>
    %150 = arith.divf %148, %149 : vector<16x1xf32>
    %151 = arith.mulf %145, %145 : vector<16x1xf32>
    %152 = arith.subf %150, %151 : vector<16x1xf32>
    %153 = vector.broadcast %145 : vector<16x1xf32> to vector<16x128xf32>
    %154 = arith.subf %137, %153 : vector<16x128xf32>
    %cst_55 = arith.constant 9.99999974E-6 : f32
    %155 = vector.broadcast %cst_55 : f32 to vector<16x1xf32>
    %156 = arith.addf %152, %155 : vector<16x1xf32>
    %157 = math.rsqrt %156 : vector<16x1xf32>
    %158 = vector.broadcast %157 : vector<16x1xf32> to vector<16x128xf32>
    %159 = arith.mulf %154, %158 : vector<16x128xf32>
    %160 = vector.broadcast %139 : vector<1x128xf32> to vector<16x128xf32>
    %161 = arith.mulf %159, %160 : vector<16x128xf32>
    %162 = vector.broadcast %141 : vector<1x128xf32> to vector<16x128xf32>
    %163 = arith.addf %161, %162 : vector<16x128xf32>
    %164 = arith.truncf %163 : vector<16x128xf32> to vector<16x128xbf16>
    %c0_56 = arith.constant 0 : index
    %c0_57 = arith.constant 0 : index
    %c0_58 = arith.constant 0 : index
    %165 = vector.load %arg11[%c0_56, %c0_57, %c0_58] : memref<1x128x2048xbf16, #tpu.memory_space<vmem>>, vector<1x128x2048xbf16>
    %166 = vector.shape_cast %165 : vector<1x128x2048xbf16> to vector<128x2048xbf16>
    %cst_59 = arith.constant dense<0.000000e+00> : vector<16x2048xf32>
    %167 = tpu.matmul %164, %166, %cst_59 {dimension_numbers = #tpu.dot_dimension_numbers<[1], [0], [0], [1], [0, 0, 1, 1], [], []>} : vector<16x128xbf16>, vector<128x2048xbf16>, vector<16x2048xf32> -> vector<16x2048xf32>
    %c0_60 = arith.constant 0 : index
    %c0_61 = arith.constant 0 : index
    %c0_62 = arith.constant 0 : index
    %168 = vector.load %arg12[%c0_60, %c0_61, %c0_62] : memref<1x1x2048xf32, #tpu.memory_space<vmem>>, vector<1x1x2048xf32>
    %169 = vector.shape_cast %168 : vector<1x1x2048xf32> to vector<1x2048xf32>
    %170 = vector.broadcast %169 : vector<1x2048xf32> to vector<16x2048xf32>
    %171 = arith.addf %167, %170 : vector<16x2048xf32>
    %cst_63 = arith.constant 0.000000e+00 : f32
    %172 = vector.broadcast %cst_63 : f32 to vector<16x2048xf32>
    %173 = arith.maximumf %171, %172 : vector<16x2048xf32>
    %174 = arith.truncf %173 : vector<16x2048xf32> to vector<16x2048xbf16>
    %c0_64 = arith.constant 0 : index
    %c0_65 = arith.constant 0 : index
    %c0_66 = arith.constant 0 : index
    %175 = vector.load %arg13[%c0_64, %c0_65, %c0_66] : memref<1x2048x128xbf16, #tpu.memory_space<vmem>>, vector<1x2048x128xbf16>
    %176 = vector.shape_cast %175 : vector<1x2048x128xbf16> to vector<2048x128xbf16>
    %cst_67 = arith.constant dense<0.000000e+00> : vector<16x128xf32>
    %177 = tpu.matmul %174, %176, %cst_67 {dimension_numbers = #tpu.dot_dimension_numbers<[1], [0], [0], [1], [0, 0, 1, 1], [], []>} : vector<16x2048xbf16>, vector<2048x128xbf16>, vector<16x128xf32> -> vector<16x128xf32>
    %c0_68 = arith.constant 0 : index
    %c0_69 = arith.constant 0 : index
    %c0_70 = arith.constant 0 : index
    %178 = vector.load %arg14[%c0_68, %c0_69, %c0_70] : memref<1x1x128xf32, #tpu.memory_space<vmem>>, vector<1x1x128xf32>
    %179 = vector.shape_cast %178 : vector<1x1x128xf32> to vector<1x128xf32>
    %180 = vector.broadcast %179 : vector<1x128xf32> to vector<16x128xf32>
    %181 = arith.addf %177, %180 : vector<16x128xf32>
    %182 = arith.addf %163, %181 : vector<16x128xf32>
    %c0_71 = arith.constant 0 : index
    %c0_72 = arith.constant 0 : index
    %c0_73 = arith.constant 0 : index
    %183 = vector.load %arg15[%c0_71, %c0_72, %c0_73] : memref<1x1x128xf32, #tpu.memory_space<vmem>>, vector<1x1x128xf32>
    %184 = vector.shape_cast %183 : vector<1x1x128xf32> to vector<1x128xf32>
    %c0_74 = arith.constant 0 : index
    %c0_75 = arith.constant 0 : index
    %c0_76 = arith.constant 0 : index
    %185 = vector.load %arg16[%c0_74, %c0_75, %c0_76] : memref<1x1x128xf32, #tpu.memory_space<vmem>>, vector<1x1x128xf32>
    %186 = vector.shape_cast %185 : vector<1x1x128xf32> to vector<1x128xf32>
    %cst_77 = arith.constant dense<0.000000e+00> : vector<16xf32>
    %187 = vector.multi_reduction <add>, %182, %cst_77 [1] : vector<16x128xf32> to vector<16xf32>
    %188 = vector.shape_cast %187 : vector<16xf32> to vector<16x1xf32>
    %cst_78 = arith.constant 1.280000e+02 : f32
    %189 = vector.broadcast %cst_78 : f32 to vector<16x1xf32>
    %190 = arith.divf %188, %189 : vector<16x1xf32>
    %191 = arith.mulf %182, %182 : vector<16x128xf32>
    %cst_79 = arith.constant dense<0.000000e+00> : vector<16xf32>
    %192 = vector.multi_reduction <add>, %191, %cst_79 [1] : vector<16x128xf32> to vector<16xf32>
    %193 = vector.shape_cast %192 : vector<16xf32> to vector<16x1xf32>
    %cst_80 = arith.constant 1.280000e+02 : f32
    %194 = vector.broadcast %cst_80 : f32 to vector<16x1xf32>
    %195 = arith.divf %193, %194 : vector<16x1xf32>
    %196 = arith.mulf %190, %190 : vector<16x1xf32>
    %197 = arith.subf %195, %196 : vector<16x1xf32>
    %198 = vector.broadcast %190 : vector<16x1xf32> to vector<16x128xf32>
    %199 = arith.subf %182, %198 : vector<16x128xf32>
    %cst_81 = arith.constant 9.99999974E-6 : f32
    %200 = vector.broadcast %cst_81 : f32 to vector<16x1xf32>
    %201 = arith.addf %197, %200 : vector<16x1xf32>
    %202 = math.rsqrt %201 : vector<16x1xf32>
    %203 = vector.broadcast %202 : vector<16x1xf32> to vector<16x128xf32>
    %204 = arith.mulf %199, %203 : vector<16x128xf32>
    %205 = vector.broadcast %184 : vector<1x128xf32> to vector<16x128xf32>
    %206 = arith.mulf %204, %205 : vector<16x128xf32>
    %207 = vector.broadcast %186 : vector<1x128xf32> to vector<16x128xf32>
    %208 = arith.addf %206, %207 : vector<16x128xf32>
    %c0_82 = arith.constant 0 : index
    %c0_83 = arith.constant 0 : index
    %209 = vector.load %arg20[%c0_82, %c0_83] : memref<16x128xf32, #tpu.memory_space<vmem>>, vector<16x128xf32>
    tpu.vector_store %arg20[%c0_82, %c0_83], %208 {strides = array<i32>} : memref<16x128xf32, #tpu.memory_space<vmem>>, vector<16x128xf32>,
    %c1_i32 = arith.constant 1 : i32
    %210 = arith.cmpi eq, %arg1, %c1_i32 : i32
    %211 = arith.extui %210 : i1 to i32
    %c0_i32_84 = arith.constant 0 : i32
    %212 = arith.cmpi ne, %211, %c0_i32_84 : i32
    scf.if %212 {
      %213 = vector.shape_cast %208 : vector<16x128xf32> to vector<2x8x128xf32>
      %cst_85 = arith.constant dense<0.000000e+00> : vector<2x128xf32>
      %214 = vector.multi_reduction <add>, %213, %cst_85 [1] : vector<2x8x128xf32> to vector<2x128xf32>
      %cst_86 = arith.constant 8.000000e+00 : f32
      %215 = vector.broadcast %cst_86 : f32 to vector<2x128xf32>
      %216 = arith.divf %214, %215 : vector<2x128xf32>
      %217 = arith.truncf %216 : vector<2x128xf32> to vector<2x128xbf16>
      %c0_87 = arith.constant 0 : index
      %c0_88 = arith.constant 0 : index
      %218 = vector.load %arg17[%c0_87, %c0_88] : memref<128x128xbf16, #tpu.memory_space<vmem>>, vector<128x128xbf16>
      %cst_89 = arith.constant dense<0.000000e+00> : vector<2x128xf32>
      %219 = tpu.matmul %217, %218, %cst_89 {dimension_numbers = #tpu.dot_dimension_numbers<[1], [0], [0], [1], [0, 0, 1, 1], [], []>} : vector<2x128xbf16>, vector<128x128xbf16>, vector<2x128xf32> -> vector<2x128xf32>
      %c0_90 = arith.constant 0 : index
      %c0_91 = arith.constant 0 : index
      %220 = vector.load %arg18[%c0_90, %c0_91] : memref<1x128xf32, #tpu.memory_space<vmem>>, vector<1x128xf32>
      %221 = vector.broadcast %220 : vector<1x128xf32> to vector<2x128xf32>
      %222 = arith.addf %219, %221 : vector<2x128xf32>
      %c0_92 = arith.constant 0 : index
      %c0_93 = arith.constant 0 : index
      %223 = vector.load %arg19[%c0_92, %c0_93] : memref<2x128xf32, #tpu.memory_space<vmem>>, vector<2x128xf32>
      tpu.vector_store %arg19[%c0_92, %c0_93], %222 {strides = array<i32>} : memref<2x128xf32, #tpu.memory_space<vmem>>, vector<2x128xf32>,
    } else {
    }
    return
  }
  func.func @transform_0(%arg0: i32, %arg1: i32) -> (i32, i32) {
    %c0_i32 = arith.constant 0 : i32
    %c0_i32_0 = arith.constant 0 : i32
    return %arg0, %c0_i32 : i32, i32
  }
  func.func @transform_1(%arg0: i32, %arg1: i32) -> (i32, i32) {
    %c0_i32 = arith.constant 0 : i32
    %c0_i32_0 = arith.constant 0 : i32
    %c0_i32_1 = arith.constant 0 : i32
    return %c0_i32, %c0_i32_0 : i32, i32
  }
  func.func @transform_2(%arg0: i32, %arg1: i32) -> (i32, i32) {
    %c0_i32 = arith.constant 0 : i32
    %c0_i32_0 = arith.constant 0 : i32
    %c0_i32_1 = arith.constant 0 : i32
    return %c0_i32, %c0_i32_0 : i32, i32
  }
  func.func @transform_3(%arg0: i32, %arg1: i32) -> (i32, i32, i32) {
    %c0_i32 = arith.constant 0 : i32
    %c0_i32_0 = arith.constant 0 : i32
    %c0_i32_1 = arith.constant 0 : i32
    return %arg1, %c0_i32, %c0_i32_0 : i32, i32, i32
  }
  func.func @transform_4(%arg0: i32, %arg1: i32) -> (i32, i32, i32) {
    %c0_i32 = arith.constant 0 : i32
    %c0_i32_0 = arith.constant 0 : i32
    %c0_i32_1 = arith.constant 0 : i32
    return %arg1, %c0_i32, %c0_i32_0 : i32, i32, i32
  }
  func.func @transform_5(%arg0: i32, %arg1: i32) -> (i32, i32, i32) {
    %c0_i32 = arith.constant 0 : i32
    %c0_i32_0 = arith.constant 0 : i32
    %c0_i32_1 = arith.constant 0 : i32
    return %arg1, %c0_i32, %c0_i32_0 : i32, i32, i32
  }
  func.func @transform_6(%arg0: i32, %arg1: i32) -> (i32, i32, i32) {
    %c0_i32 = arith.constant 0 : i32
    %c0_i32_0 = arith.constant 0 : i32
    %c0_i32_1 = arith.constant 0 : i32
    return %arg1, %c0_i32, %c0_i32_0 : i32, i32, i32
  }
  func.func @transform_7(%arg0: i32, %arg1: i32) -> (i32, i32, i32) {
    %c0_i32 = arith.constant 0 : i32
    %c0_i32_0 = arith.constant 0 : i32
    %c0_i32_1 = arith.constant 0 : i32
    return %arg1, %c0_i32, %c0_i32_0 : i32, i32, i32
  }
  func.func @transform_8(%arg0: i32, %arg1: i32) -> (i32, i32, i32) {
    %c0_i32 = arith.constant 0 : i32
    %c0_i32_0 = arith.constant 0 : i32
    %c0_i32_1 = arith.constant 0 : i32
    return %arg1, %c0_i32, %c0_i32_0 : i32, i32, i32
  }
  func.func @transform_9(%arg0: i32, %arg1: i32) -> (i32, i32, i32) {
    %c0_i32 = arith.constant 0 : i32
    %c0_i32_0 = arith.constant 0 : i32
    %c0_i32_1 = arith.constant 0 : i32
    return %arg1, %c0_i32, %c0_i32_0 : i32, i32, i32
  }
  func.func @transform_10(%arg0: i32, %arg1: i32) -> (i32, i32, i32) {
    %c0_i32 = arith.constant 0 : i32
    %c0_i32_0 = arith.constant 0 : i32
    %c0_i32_1 = arith.constant 0 : i32
    return %arg1, %c0_i32, %c0_i32_0 : i32, i32, i32
  }
  func.func @transform_11(%arg0: i32, %arg1: i32) -> (i32, i32, i32) {
    %c0_i32 = arith.constant 0 : i32
    %c0_i32_0 = arith.constant 0 : i32
    %c0_i32_1 = arith.constant 0 : i32
    return %arg1, %c0_i32, %c0_i32_0 : i32, i32, i32
  }
  func.func @transform_12(%arg0: i32, %arg1: i32) -> (i32, i32, i32) {
    %c0_i32 = arith.constant 0 : i32
    %c0_i32_0 = arith.constant 0 : i32
    %c0_i32_1 = arith.constant 0 : i32
    return %arg1, %c0_i32, %c0_i32_0 : i32, i32, i32
  }
  func.func @transform_13(%arg0: i32, %arg1: i32) -> (i32, i32, i32) {
    %c0_i32 = arith.constant 0 : i32
    %c0_i32_0 = arith.constant 0 : i32
    %c0_i32_1 = arith.constant 0 : i32
    return %arg1, %c0_i32, %c0_i32_0 : i32, i32, i32
  }
  func.func @transform_14(%arg0: i32, %arg1: i32) -> (i32, i32, i32) {
    %c0_i32 = arith.constant 0 : i32
    %c0_i32_0 = arith.constant 0 : i32
    %c0_i32_1 = arith.constant 0 : i32
    return %arg1, %c0_i32, %c0_i32_0 : i32, i32, i32
  }
  func.func @transform_15(%arg0: i32, %arg1: i32) -> (i32, i32) {
    %c0_i32 = arith.constant 0 : i32
    %c0_i32_0 = arith.constant 0 : i32
    %c0_i32_1 = arith.constant 0 : i32
    return %c0_i32, %c0_i32_0 : i32, i32
  }
  func.func @transform_16(%arg0: i32, %arg1: i32) -> (i32, i32) {
    %c0_i32 = arith.constant 0 : i32
    %c0_i32_0 = arith.constant 0 : i32
    %c0_i32_1 = arith.constant 0 : i32
    return %c0_i32, %c0_i32_0 : i32, i32
  }
  func.func @transform_17(%arg0: i32, %arg1: i32) -> (i32, i32) {
    %c0_i32 = arith.constant 0 : i32
    %c0_i32_0 = arith.constant 0 : i32
    return %arg0, %c0_i32 : i32, i32
  }
}

</mosaic_0001>

<llo_original>
// kernel: event_transformer_forward.1
$region0: #{event_transformer_forward.1}
  #allocation0 [shape = 'u32[]', space=smem, size = 0x4, offset = 0x4, fixed_abs, tag = 'smem constant byte address 0x4 - core index']
  #allocation1 [shape = 'u32[144,128]{1,0:T(1,128)}', space=vmem, size = 0x12000, scoped, tag = 'internal scratch']
  #allocation2 [shape = 'f32[16,128]{1,0:T(8,128)}', space=vmem, size = 0x2000, scoped, tag = 'scratch operand']
  %s0 = inlined_call_operand.vmem [shape: f32[16,8], index: 0, kind: input, shape index: {}]
  %s1 = inlined_call_operand.vmem [shape: bf16[8,128], index: 1, kind: input, shape index: {}]
  %s2 = inlined_call_operand.hbm [shape: f32[1,128], index: 2, kind: input, shape index: {}]
  %s3 = inlined_call_operand.hbm [shape: bf16[2,128,384], index: 3, kind: input, shape index: {}]
  %s4 = inlined_call_operand.hbm [shape: f32[2,1,384], index: 4, kind: input, shape index: {}]
  %s5 = inlined_call_operand.hbm [shape: bf16[2,128,128], index: 5, kind: input, shape index: {}]
  %s6 = inlined_call_operand.hbm [shape: f32[2,1,128], index: 6, kind: input, shape index: {}]
  %s7 = inlined_call_operand.hbm [shape: f32[2,1,128], index: 7, kind: input, shape index: {}]
  %s8 = inlined_call_operand.hbm [shape: f32[2,1,128], index: 8, kind: input, shape index: {}]
  %s9 = inlined_call_operand.hbm [shape: bf16[2,128,2048], index: 9, kind: input, shape index: {}]
  %s10 = inlined_call_operand.vmem [shape: f32[2,1,2048], index: 10, kind: input, shape index: {}]
  %s11 = inlined_call_operand.hbm [shape: bf16[2,2048,128], index: 11, kind: input, shape index: {}]
  %s12 = inlined_call_operand.hbm [shape: f32[2,1,128], index: 12, kind: input, shape index: {}]
  %s13 = inlined_call_operand.hbm [shape: f32[2,1,128], index: 13, kind: input, shape index: {}]
  %s14 = inlined_call_operand.hbm [shape: f32[2,1,128], index: 14, kind: input, shape index: {}]
  %s15 = inlined_call_operand.vmem [shape: bf16[128,128], index: 15, kind: input, shape index: {}]
  %s16 = inlined_call_operand.hbm [shape: f32[1,128], index: 16, kind: input, shape index: {}]
  %s17 = inlined_call_operand.hbm [shape: f32[2,128], index: 17, kind: output, shape index: {}]
  %s18 = sld [smem:[#allocation0]]
  $region161: #{event_transformer_forward.1} parent=0
    _
  %s20 = ssub.s32 1, %s18
  %s21 = scalar_select 0, %s20, %s18
  $region1: #{event_transformer_forward.1} parent=0
    #allocation3 [shape = 'u8[512]{0}', space=vmem, size = 0x400, scoped, tag = 'input window, operand 2, single buffered']
    #allocation4 [shape = 's32[2]{0}', space=sflag, size = 0x8, scoped, tag = 'scoped memory for event_transformer_forward.1']
    #allocation5 [shape = 's32[2]{0}', space=sflag, size = 0x8, scoped, tag = 'scoped memory for event_transformer_forward.1']
    #allocation6 [shape = 'u8[196608]{0}', space=vmem, size = 0x30000, scoped, tag = 'input window, operand 3']
    #allocation7 [shape = 's32[2]{0}', space=sflag, size = 0x8, scoped, tag = 'scoped memory for event_transformer_forward.1']
    #allocation8 [shape = 'u8[3072]{0}', space=vmem, size = 0xc00, scoped, tag = 'input window, operand 4']
    #allocation9 [shape = 'u8[65536]{0}', space=vmem, size = 0x10000, scoped, tag = 'input window, operand 5']
    #allocation10 [shape = 's32[2]{0}', space=sflag, size = 0x8, scoped, tag = 'scoped memory for event_transformer_forward.1']
    #allocation11 [shape = 'u8[1024]{0}', space=vmem, size = 0x400, scoped, tag = 'input window, operand 6']
    #allocation12 [shape = 'u8[1024]{0}', space=vmem, size = 0x400, scoped, tag = 'input window, operand 7']
    #allocation13 [shape = 's32[2]{0}', space=sflag, size = 0x8, scoped, tag = 'scoped memory for event_transformer_forward.1']
    #allocation14 [shape = 'u8[1024]{0}', space=vmem, size = 0x400, scoped, tag = 'input window, operand 8']
    #allocation15 [shape = 'u8[1048576]{0}', space=vmem, size = 0x100000, scoped, tag = 'input window, operand 9']
    #allocation16 [shape = 's32[2]{0}', space=sflag, size = 0x8, scoped, tag = 'scoped memory for event_transformer_forward.1']
    #allocation17 [shape = 'u8[1048576]{0}', space=vmem, size = 0x100000, scoped, tag = 'input window, operand 11']
    #allocation18 [shape = 'u8[1024]{0}', space=vmem, size = 0x400, scoped, tag = 'input window, operand 12']
    #allocation19 [shape = 's32[2]{0}', space=sflag, size = 0x8, scoped, tag = 'scoped memory for event_transformer_forward.1']
    #allocation20 [shape = 'u8[1024]{0}', space=vmem, size = 0x400, scoped, tag = 'input window, operand 13']
    #allocation21 [shape = 'u8[1024]{0}', space=vmem, size = 0x400, scoped, tag = 'input window, operand 14']
    #allocation22 [shape = 's32[2]{0}', space=sflag, size = 0x8, scoped, tag = 'scoped memory for event_transformer_forward.1']
    #allocation23 [shape = 'u8[512]{0}', space=vmem, size = 0x400, scoped, tag = 'input window, operand 16, single buffered']
    #allocation24 [shape = 'u8[1024]{0}', space=vmem, size = 0x400, scoped, tag = 'output window, operand 0, single buffered']
    %22 = vsyncpa [#allocation4], 0
    %23 = vsyncpa [#allocation7], 0
    %s24 = scalar_lea.sflag [#allocation7], 1
    %25 = vsyncpa %s24, 0
    %26 = vsyncpa [#allocation10], 0
    %s27 = scalar_lea.sflag [#allocation10], 1
    %28 = vsyncpa %s27, 0
    %29 = vsyncpa [#allocation13], 0
    %s30 = scalar_lea.sflag [#allocation13], 1
    %31 = vsyncpa %s30, 0
    %32 = vsyncpa [#allocation16], 0
    %s33 = scalar_lea.sflag [#allocation16], 1
    %34 = vsyncpa %s33, 0
    %35 = vsyncpa [#allocation19], 0
    %s36 = scalar_lea.sflag [#allocation19], 1
    %37 = vsyncpa %s36, 0
    %38 = vsyncpa [#allocation22], 0
    %s39 = scalar_lea.sflag [#allocation22], 1
    %40 = vsyncpa %s39, 0
    %41 = vsyncpa [#allocation5], 0
    loop: start=0, step=1, limit=4
    $region2: #{event_transformer_forward.1} parent=1 // loop_pre_header
      _
    $region3: #{event_transformer_forward.1} parent=1 // loop_header
      %s43 = sphi 0, %s47
      %p44 = scmp.ge.s32.totalorder %s43, 4
      %s50 = sphi 0, %s62
      %s51 = sphi 0, %s58
      %s52 = sphi 0, %s50
      %s53 = sphi 0, %s51
      %s54 = sphi 0, %s52
      %s55 = sphi 0, %s53
      %s65 = sphi 0, %s67
      %s68 = sphi 0, %s65
      %s69 = sphi 0, %s68
      %s85 = sphi 0, %s69
      %s89 = sphi 0, %s89
      %s91 = sphi 0, %s89
      %s92 = sphi 0, %s91
      %s106 = sphi 0, %s92
      %s110 = sphi 0, %s110
      %s112 = sphi 0, %s110
      %s113 = sphi 0, %s112
      %s127 = sphi 0, %s113
      %s133 = sphi 0, %s135
      %s136 = sphi 0, %s133
      %s137 = sphi 0, %s136
      %s153 = sphi 0, %s137
      %s159 = sphi 0, %s161
      %s162 = sphi 0, %s159
      %s163 = sphi 0, %s162
      %s179 = sphi 0, %s163
      %s185 = sphi 0, %s187
      %s188 = sphi 0, %s185
      %s189 = sphi 0, %s188
      %s205 = sphi 0, %s189
      %s211 = sphi 0, %s213
      %s214 = sphi 0, %s211
      %s215 = sphi 0, %s214
      %s231 = sphi 0, %s215
      %s237 = sphi 0, %s239
      %s240 = sphi 0, %s237
      %s241 = sphi 0, %s240
      %s257 = sphi 0, %s241
      %s263 = sphi 0, %s265
      %s266 = sphi 0, %s263
      %s267 = sphi 0, %s266
      %s283 = sphi 0, %s267
      %s289 = sphi 0, %s291
      %s292 = sphi 0, %s289
      %s293 = sphi 0, %s292
      %s309 = sphi 0, %s293
      %s315 = sphi 0, %s317
      %s318 = sphi 0, %s315
      %s319 = sphi 0, %s318
      %s335 = sphi 0, %s319
      %s341 = sphi 0, %s343
      %s344 = sphi 0, %s341
      %s345 = sphi 0, %s344
      %s361 = sphi 0, %s345
      %s367 = sphi 0, %s369
      %s370 = sphi 0, %s367
      %s371 = sphi 0, %s370
      %s387 = sphi 0, %s371
      %s393 = sphi 0, %s395
      %s396 = sphi 0, %s393
      %s397 = sphi 0, %s396
      %s413 = sphi 0, %s397
      %s419 = sphi 0, %s421
      %s422 = sphi 0, %s419
      %s423 = sphi 0, %s422
      %s439 = sphi 0, %s423
      %s443 = sphi 0, %s443
      %s445 = sphi 0, %s443
      %s446 = sphi 0, %s445
      %s460 = sphi 0, %s446
      %s464 = sphi 0, %s464
      %s466 = sphi 0, %s464
      %s467 = sphi 0, %s466
      %s481 = sphi 0, %s467
      %s487 = sphi 0, %s489
      %s490 = sphi 0, %s487
      %s491 = sphi 0, %s490
      %s507 = sphi 0, %s491
    $region4: #{event_transformer_forward.1} parent=1 // loop_header_branch
      %46 = sbr.rel (%p44) target = $region8
    $region5: #{event_transformer_forward.1} parent=1 // loop_body
      %s48 = ssub.s32 %s43, 1
      %s49 = ssub.s32 %s43, 2
      %s56 = sadd.s32 1, %s51
      %p57 = scmp.ge.s32.totalorder %s56, 2
      %s58 = scalar_select %p57, 0, %s56
      %s59 = sadd.s32 1, %s50
      %s60 = scalar_select %p57, %s59, %s50
      %p61 = scmp.ge.s32.totalorder %s60, 1
      %s62 = scalar_select %p61, 0, %s60
      %s63 = ssub.s32 %s50, %s62
      %p64 = scmp.eq.s32.totalorder %s63, 0
      %s66 = sadd.s32 %s65, 1
      %s67 = scalar_select %p64, %s65, %s66
      %p70 = pneg %p64
      %p71 = scmp.eq.s32.totalorder %s43, 1
      %p72 = por %p70, %p71
      %p73 = scmp.ne.s32.totalorder %s65, %s68
      %p74 = scmp.eq.s32.totalorder %s43, 0
      %p75 = por %p73, %p74
      %p76 = scmp.ne.s32.totalorder %s65, %s68
      %p77 = scmp.eq.s32.totalorder %s48, 1
      %p78 = por %p76, %p77
      %p79 = scmp.ne.s32.totalorder %s68, %s69
      %p80 = scmp.eq.s32.totalorder %s48, 0
      %p81 = por %p79, %p80
      %p82 = scmp.ne.s32.totalorder %s68, %s69
      %p83 = scmp.eq.s32.totalorder %s49, 1
      %p84 = por %p82, %p83
      %p86 = scmp.ne.s32.totalorder %s69, %s85
      %p87 = scmp.eq.s32.totalorder %s49, 0
      %p88 = por %p86, %p87
      %s90 = sadd.s32 %s89, 1
      %p93 = scmp.eq.s32.totalorder %s43, 1
      %p94 = scmp.ne.s32.totalorder %s89, %s91
      %p95 = scmp.eq.s32.totalorder %s43, 0
      %p96 = por %p94, %p95
      %p97 = scmp.ne.s32.totalorder %s89, %s91
      %p98 = scmp.eq.s32.totalorder %s48, 1
      %p99 = por %p97, %p98
      %p100 = scmp.ne.s32.totalorder %s91, %s92
      %p101 = scmp.eq.s32.totalorder %s48, 0
      %p102 = por %p100, %p101
      %p103 = scmp.ne.s32.totalorder %s91, %s92
      %p104 = scmp.eq.s32.totalorder %s49, 1
      %p105 = por %p103, %p104
      %p107 = scmp.ne.s32.totalorder %s92, %s106
      %p108 = scmp.eq.s32.totalorder %s49, 0
      %p109 = por %p107, %p108
      %s111 = sadd.s32 %s110, 1
      %p114 = scmp.eq.s32.totalorder %s43, 1
      %p115 = scmp.ne.s32.totalorder %s110, %s112
      %p116 = scmp.eq.s32.totalorder %s43, 0
      %p117 = por %p115, %p116
      %p118 = scmp.ne.s32.totalorder %s110, %s112
      %p119 = scmp.eq.s32.totalorder %s48, 1
      %p120 = por %p118, %p119
      %p121 = scmp.ne.s32.totalorder %s112, %s113
      %p122 = scmp.eq.s32.totalorder %s48, 0
      %p123 = por %p121, %p122
      %p124 = scmp.ne.s32.totalorder %s112, %s113
      %p125 = scmp.eq.s32.totalorder %s49, 1
      %p126 = por %p124, %p125
      %p128 = scmp.ne.s32.totalorder %s113, %s127
      %p129 = scmp.eq.s32.totalorder %s49, 0
      %p130 = por %p128, %p129
      %s131 = ssub.s32 %s51, %s58
      %p132 = scmp.eq.s32.totalorder %s131, 0
      %s134 = sadd.s32 %s133, 1
      %s135 = scalar_select %p132, %s133, %s134
      %p138 = pneg %p132
      %p139 = scmp.eq.s32.totalorder %s43, 1
      %p140 = por %p138, %p139
      %p141 = scmp.ne.s32.totalorder %s133, %s136
      %p142 = scmp.eq.s32.totalorder %s43, 0
      %p143 = por %p141, %p142
      %p144 = scmp.ne.s32.totalorder %s133, %s136
      %p145 = scmp.eq.s32.totalorder %s48, 1
      %p146 = por %p144, %p145
      %p147 = scmp.ne.s32.totalorder %s136, %s137
      %p148 = scmp.eq.s32.totalorder %s48, 0
      %p149 = por %p147, %p148
      %p150 = scmp.ne.s32.totalorder %s136, %s137
      %p151 = scmp.eq.s32.totalorder %s49, 1
      %p152 = por %p150, %p151
      %p154 = scmp.ne.s32.totalorder %s137, %s153
      %p155 = scmp.eq.s32.totalorder %s49, 0
      %p156 = por %p154, %p155
      %s157 = ssub.s32 %s51, %s58
      %p158 = scmp.eq.s32.totalorder %s157, 0
      %s160 = sadd.s32 %s159, 1
      %s161 = scalar_select %p158, %s159, %s160
      %p164 = pneg %p158
      %p165 = scmp.eq.s32.totalorder %s43, 1
      %p166 = por %p164, %p165
      %p167 = scmp.ne.s32.totalorder %s159, %s162
      %p168 = scmp.eq.s32.totalorder %s43, 0
      %p169 = por %p167, %p168
      %p170 = scmp.ne.s32.totalorder %s159, %s162
      %p171 = scmp.eq.s32.totalorder %s48, 1
      %p172 = por %p170, %p171
      %p173 = scmp.ne.s32.totalorder %s162, %s163
      %p174 = scmp.eq.s32.totalorder %s48, 0
      %p175 = por %p173, %p174
      %p176 = scmp.ne.s32.totalorder %s162, %s163
      %p177 = scmp.eq.s32.totalorder %s49, 1
      %p178 = por %p176, %p177
      %p180 = scmp.ne.s32.totalorder %s163, %s179
      %p181 = scmp.eq.s32.totalorder %s49, 0
      %p182 = por %p180, %p181
      %s183 = ssub.s32 %s51, %s58
      %p184 = scmp.eq.s32.totalorder %s183, 0
      %s186 = sadd.s32 %s185, 1
      %s187 = scalar_select %p184, %s185, %s186
      %p190 = pneg %p184
      %p191 = scmp.eq.s32.totalorder %s43, 1
      %p192 = por %p190, %p191
      %p193 = scmp.ne.s32.totalorder %s185, %s188
      %p194 = scmp.eq.s32.totalorder %s43, 0
      %p195 = por %p193, %p194
      %p196 = scmp.ne.s32.totalorder %s185, %s188
      %p197 = scmp.eq.s32.totalorder %s48, 1
      %p198 = por %p196, %p197
      %p199 = scmp.ne.s32.totalorder %s188, %s189
      %p200 = scmp.eq.s32.totalorder %s48, 0
      %p201 = por %p199, %p200
      %p202 = scmp.ne.s32.totalorder %s188, %s189
      %p203 = scmp.eq.s32.totalorder %s49, 1
      %p204 = por %p202, %p203
      %p206 = scmp.ne.s32.totalorder %s189, %s205
      %p207 = scmp.eq.s32.totalorder %s49, 0
      %p208 = por %p206, %p207
      %s209 = ssub.s32 %s51, %s58
      %p210 = scmp.eq.s32.totalorder %s209, 0
      %s212 = sadd.s32 %s211, 1
      %s213 = scalar_select %p210, %s211, %s212
      %p216 = pneg %p210
      %p217 = scmp.eq.s32.totalorder %s43, 1
      %p218 = por %p216, %p217
      %p219 = scmp.ne.s32.totalorder %s211, %s214
      %p220 = scmp.eq.s32.totalorder %s43, 0
      %p221 = por %p219, %p220
      %p222 = scmp.ne.s32.totalorder %s211, %s214
      %p223 = scmp.eq.s32.totalorder %s48, 1
      %p224 = por %p222, %p223
      %p225 = scmp.ne.s32.totalorder %s214, %s215
      %p226 = scmp.eq.s32.totalorder %s48, 0
      %p227 = por %p225, %p226
      %p228 = scmp.ne.s32.totalorder %s214, %s215
      %p229 = scmp.eq.s32.totalorder %s49, 1
      %p230 = por %p228, %p229
      %p232 = scmp.ne.s32.totalorder %s215, %s231
      %p233 = scmp.eq.s32.totalorder %s49, 0
      %p234 = por %p232, %p233
      %s235 = ssub.s32 %s51, %s58
      %p236 = scmp.eq.s32.totalorder %s235, 0
      %s238 = sadd.s32 %s237, 1
      %s239 = scalar_select %p236, %s237, %s238
      %p242 = pneg %p236
      %p243 = scmp.eq.s32.totalorder %s43, 1
      %p244 = por %p242, %p243
      %p245 = scmp.ne.s32.totalorder %s237, %s240
      %p246 = scmp.eq.s32.totalorder %s43, 0
      %p247 = por %p245, %p246
      %p248 = scmp.ne.s32.totalorder %s237, %s240
      %p249 = scmp.eq.s32.totalorder %s48, 1
      %p250 = por %p248, %p249
      %p251 = scmp.ne.s32.totalorder %s240, %s241
      %p252 = scmp.eq.s32.totalorder %s48, 0
      %p253 = por %p251, %p252
      %p254 = scmp.ne.s32.totalorder %s240, %s241
      %p255 = scmp.eq.s32.totalorder %s49, 1
      %p256 = por %p254, %p255
      %p258 = scmp.ne.s32.totalorder %s241, %s257
      %p259 = scmp.eq.s32.totalorder %s49, 0
      %p260 = por %p258, %p259
      %s261 = ssub.s32 %s51, %s58
      %p262 = scmp.eq.s32.totalorder %s261, 0
      %s264 = sadd.s32 %s263, 1
      %s265 = scalar_select %p262, %s263, %s264
      %p268 = pneg %p262
      %p269 = scmp.eq.s32.totalorder %s43, 1
      %p270 = por %p268, %p269
      %p271 = scmp.ne.s32.totalorder %s263, %s266
      %p272 = scmp.eq.s32.totalorder %s43, 0
      %p273 = por %p271, %p272
      %p274 = scmp.ne.s32.totalorder %s263, %s266
      %p275 = scmp.eq.s32.totalorder %s48, 1
      %p276 = por %p274, %p275
      %p277 = scmp.ne.s32.totalorder %s266, %s267
      %p278 = scmp.eq.s32.totalorder %s48, 0
      %p279 = por %p277, %p278
      %p280 = scmp.ne.s32.totalorder %s266, %s267
      %p281 = scmp.eq.s32.totalorder %s49, 1
      %p282 = por %p280, %p281
      %p284 = scmp.ne.s32.totalorder %s267, %s283
      %p285 = scmp.eq.s32.totalorder %s49, 0
      %p286 = por %p284, %p285
      %s287 = ssub.s32 %s51, %s58
      %p288 = scmp.eq.s32.totalorder %s287, 0
      %s290 = sadd.s32 %s289, 1
      %s291 = scalar_select %p288, %s289, %s290
      %p294 = pneg %p288
      %p295 = scmp.eq.s32.totalorder %s43, 1
      %p296 = por %p294, %p295
      %p297 = scmp.ne.s32.totalorder %s289, %s292
      %p298 = scmp.eq.s32.totalorder %s43, 0
      %p299 = por %p297, %p298
      %p300 = scmp.ne.s32.totalorder %s289, %s292
      %p301 = scmp.eq.s32.totalorder %s48, 1
      %p302 = por %p300, %p301
      %p303 = scmp.ne.s32.totalorder %s292, %s293
      %p304 = scmp.eq.s32.totalorder %s48, 0
      %p305 = por %p303, %p304
      %p306 = scmp.ne.s32.totalorder %s292, %s293
      %p307 = scmp.eq.s32.totalorder %s49, 1
      %p308 = por %p306, %p307
      %p310 = scmp.ne.s32.totalorder %s293, %s309
      %p311 = scmp.eq.s32.totalorder %s49, 0
      %p312 = por %p310, %p311
      %s313 = ssub.s32 %s51, %s58
      %p314 = scmp.eq.s32.totalorder %s313, 0
      %s316 = sadd.s32 %s315, 1
      %s317 = scalar_select %p314, %s315, %s316
      %p320 = pneg %p314
      %p321 = scmp.eq.s32.totalorder %s43, 1
      %p322 = por %p320, %p321
      %p323 = scmp.ne.s32.totalorder %s315, %s318
      %p324 = scmp.eq.s32.totalorder %s43, 0
      %p325 = por %p323, %p324
      %p326 = scmp.ne.s32.totalorder %s315, %s318
      %p327 = scmp.eq.s32.totalorder %s48, 1
      %p328 = por %p326, %p327
      %p329 = scmp.ne.s32.totalorder %s318, %s319
      %p330 = scmp.eq.s32.totalorder %s48, 0
      %p331 = por %p329, %p330
      %p332 = scmp.ne.s32.totalorder %s318, %s319
      %p333 = scmp.eq.s32.totalorder %s49, 1
      %p334 = por %p332, %p333
      %p336 = scmp.ne.s32.totalorder %s319, %s335
      %p337 = scmp.eq.s32.totalorder %s49, 0
      %p338 = por %p336, %p337
      %s339 = ssub.s32 %s51, %s58
      %p340 = scmp.eq.s32.totalorder %s339, 0
      %s342 = sadd.s32 %s341, 1
      %s343 = scalar_select %p340, %s341, %s342
      %p346 = pneg %p340
      %p347 = scmp.eq.s32.totalorder %s43, 1
      %p348 = por %p346, %p347
      %p349 = scmp.ne.s32.totalorder %s341, %s344
      %p350 = scmp.eq.s32.totalorder %s43, 0
      %p351 = por %p349, %p350
      %p352 = scmp.ne.s32.totalorder %s341, %s344
      %p353 = scmp.eq.s32.totalorder %s48, 1
      %p354 = por %p352, %p353
      %p355 = scmp.ne.s32.totalorder %s344, %s345
      %p356 = scmp.eq.s32.totalorder %s48, 0
      %p357 = por %p355, %p356
      %p358 = scmp.ne.s32.totalorder %s344, %s345
      %p359 = scmp.eq.s32.totalorder %s49, 1
      %p360 = por %p358, %p359
      %p362 = scmp.ne.s32.totalorder %s345, %s361
      %p363 = scmp.eq.s32.totalorder %s49, 0
      %p364 = por %p362, %p363
      %s365 = ssub.s32 %s51, %s58
      %p366 = scmp.eq.s32.totalorder %s365, 0
      %s368 = sadd.s32 %s367, 1
      %s369 = scalar_select %p366, %s367, %s368
      %p372 = pneg %p366
      %p373 = scmp.eq.s32.totalorder %s43, 1
      %p374 = por %p372, %p373
      %p375 = scmp.ne.s32.totalorder %s367, %s370
      %p376 = scmp.eq.s32.totalorder %s43, 0
      %p377 = por %p375, %p376
      %p378 = scmp.ne.s32.totalorder %s367, %s370
      %p379 = scmp.eq.s32.totalorder %s48, 1
      %p380 = por %p378, %p379
      %p381 = scmp.ne.s32.totalorder %s370, %s371
      %p382 = scmp.eq.s32.totalorder %s48, 0
      %p383 = por %p381, %p382
      %p384 = scmp.ne.s32.totalorder %s370, %s371
      %p385 = scmp.eq.s32.totalorder %s49, 1
      %p386 = por %p384, %p385
      %p388 = scmp.ne.s32.totalorder %s371, %s387
      %p389 = scmp.eq.s32.totalorder %s49, 0
      %p390 = por %p388, %p389
      %s391 = ssub.s32 %s51, %s58
      %p392 = scmp.eq.s32.totalorder %s391, 0
      %s394 = sadd.s32 %s393, 1
      %s395 = scalar_select %p392, %s393, %s394
      %p398 = pneg %p392
      %p399 = scmp.eq.s32.totalorder %s43, 1
      %p400 = por %p398, %p399
      %p401 = scmp.ne.s32.totalorder %s393, %s396
      %p402 = scmp.eq.s32.totalorder %s43, 0
      %p403 = por %p401, %p402
      %p404 = scmp.ne.s32.totalorder %s393, %s396
      %p405 = scmp.eq.s32.totalorder %s48, 1
      %p406 = por %p404, %p405
      %p407 = scmp.ne.s32.totalorder %s396, %s397
      %p408 = scmp.eq.s32.totalorder %s48, 0
      %p409 = por %p407, %p408
      %p410 = scmp.ne.s32.totalorder %s396, %s397
      %p411 = scmp.eq.s32.totalorder %s49, 1
      %p412 = por %p410, %p411
      %p414 = scmp.ne.s32.totalorder %s397, %s413
      %p415 = scmp.eq.s32.totalorder %s49, 0
      %p416 = por %p414, %p415
      %s417 = ssub.s32 %s51, %s58
      %p418 = scmp.eq.s32.totalorder %s417, 0
      %s420 = sadd.s32 %s419, 1
      %s421 = scalar_select %p418, %s419, %s420
      %p424 = pneg %p418
      %p425 = scmp.eq.s32.totalorder %s43, 1
      %p426 = por %p424, %p425
      %p427 = scmp.ne.s32.totalorder %s419, %s422
      %p428 = scmp.eq.s32.totalorder %s43, 0
      %p429 = por %p427, %p428
      %p430 = scmp.ne.s32.totalorder %s419, %s422
      %p431 = scmp.eq.s32.totalorder %s48, 1
      %p432 = por %p430, %p431
      %p433 = scmp.ne.s32.totalorder %s422, %s423
      %p434 = scmp.eq.s32.totalorder %s48, 0
      %p435 = por %p433, %p434
      %p436 = scmp.ne.s32.totalorder %s422, %s423
      %p437 = scmp.eq.s32.totalorder %s49, 1
      %p438 = por %p436, %p437
      %p440 = scmp.ne.s32.totalorder %s423, %s439
      %p441 = scmp.eq.s32.totalorder %s49, 0
      %p442 = por %p440, %p441
      %s444 = sadd.s32 %s443, 1
      %p447 = scmp.eq.s32.totalorder %s43, 1
      %p448 = scmp.ne.s32.totalorder %s443, %s445
      %p449 = scmp.eq.s32.totalorder %s43, 0
      %p450 = por %p448, %p449
      %p451 = scmp.ne.s32.totalorder %s443, %s445
      %p452 = scmp.eq.s32.totalorder %s48, 1
      %p453 = por %p451, %p452
      %p454 = scmp.ne.s32.totalorder %s445, %s446
      %p455 = scmp.eq.s32.totalorder %s48, 0
      %p456 = por %p454, %p455
      %p457 = scmp.ne.s32.totalorder %s445, %s446
      %p458 = scmp.eq.s32.totalorder %s49, 1
      %p459 = por %p457, %p458
      %p461 = scmp.ne.s32.totalorder %s446, %s460
      %p462 = scmp.eq.s32.totalorder %s49, 0
      %p463 = por %p461, %p462
      %s465 = sadd.s32 %s464, 1
      %p468 = scmp.eq.s32.totalorder %s43, 1
      %p469 = scmp.ne.s32.totalorder %s464, %s466
      %p470 = scmp.eq.s32.totalorder %s43, 0
      %p471 = por %p469, %p470
      %p472 = scmp.ne.s32.totalorder %s464, %s466
      %p473 = scmp.eq.s32.totalorder %s48, 1
      %p474 = por %p472, %p473
      %p475 = scmp.ne.s32.totalorder %s466, %s467
      %p476 = scmp.eq.s32.totalorder %s48, 0
      %p477 = por %p475, %p476
      %p478 = scmp.ne.s32.totalorder %s466, %s467
      %p479 = scmp.eq.s32.totalorder %s49, 1
      %p480 = por %p478, %p479
      %p482 = scmp.ne.s32.totalorder %s467, %s481
      %p483 = scmp.eq.s32.totalorder %s49, 0
      %p484 = por %p482, %p483
      %s485 = ssub.s32 %s50, %s62
      %p486 = scmp.eq.s32.totalorder %s485, 0
      %s488 = sadd.s32 %s487, 1
      %s489 = scalar_select %p486, %s487, %s488
      %p492 = pneg %p486
      %p493 = scmp.eq.s32.totalorder %s43, 1
      %p494 = por %p492, %p493
      %p495 = scmp.ne.s32.totalorder %s487, %s490
      %p496 = scmp.eq.s32.totalorder %s43, 0
      %p497 = por %p495, %p496
      %p498 = scmp.ne.s32.totalorder %s487, %s490
      %p499 = scmp.eq.s32.totalorder %s48, 1
      %p500 = por %p498, %p499
      %p501 = scmp.ne.s32.totalorder %s490, %s491
      %p502 = scmp.eq.s32.totalorder %s48, 0
      %p503 = por %p501, %p502
      %p504 = scmp.ne.s32.totalorder %s490, %s491
      %p505 = scmp.eq.s32.totalorder %s49, 1
      %p506 = por %p504, %p505
      %p508 = scmp.ne.s32.totalorder %s491, %s507
      %p509 = scmp.eq.s32.totalorder %s49, 0
      %p510 = por %p508, %p509
      %p511 = scmp.le.s32.totalorder 1, %s43
      %p512 = scmp.lt.s32.totalorder %s43, 3
      %p513 = pnand %p511, %p512
      %p514 = pneg %p513
      // Predicated region
      $region9: #{event_transformer_forward.1} parent=5 // pred_check
        _
      $region10: #{event_transformer_forward.1} parent=5 // pred_check_branch
        %516 = sbr.rel (%p513) target = $region12
      $region11: #{event_transformer_forward.1} parent=5 // pred_region
        %s517 = ssub.s32 %s43, 1
        // Predicated region
        $region13: #{event_transformer_forward.1} parent=11 // pred_check
          %p518 = pneg %p81
        $region14: #{event_transformer_forward.1} parent=11 // pred_check_branch
          %520 = sbr.rel (%p518) target = $region16
        $region15: #{event_transformer_forward.1} parent=11 // pred_region
          %s521 = smul.u32 2, %s52
          %p522 = scmp.lt.s32.totalorder %s521, 1
          %s523 = scalar_select %p522, %s521, 1
          %s524 = smul.addr %s523, 8
          %s525 = scalar_lea.vmem %s0, %s524
          %s526 = smul.u32 2, %s52
        $region16: #{event_transformer_forward.1} parent=11 // pred_fallthru
          _
        // Predicated region
        $region17: #{event_transformer_forward.1} parent=11 // pred_check
          %p527 = pneg %p102
        $region18: #{event_transformer_forward.1} parent=11 // pred_check_branch
          %529 = sbr.rel (%p527) target = $region20
        $region19: #{event_transformer_forward.1} parent=11 // pred_region
          _
        $region20: #{event_transformer_forward.1} parent=11 // pred_fallthru
          _
        // Predicated region
        $region21: #{event_transformer_forward.1} parent=11 // pred_check
          %p530 = pneg %p123
        $region22: #{event_transformer_forward.1} parent=11 // pred_check_branch
          %532 = sbr.rel (%p530) target = $region24
        $region23: #{event_transformer_forward.1} parent=11 // pred_region
          %s534 = ssub.s32 16, 16
          %535 = vsyncadd [#allocation4], %s534
          %s537 = sshll.u32 [#allocation3], 4
          %s538 = int_to_ptr.vmem [resolvable:$true] %s537
          %540 = dma.hbm_to_vmem [thread:$0]  %s2, 16, %s538, [#allocation4]
        $region24: #{event_transformer_forward.1} parent=11 // pred_fallthru
          _
        // Predicated region
        $region25: #{event_transformer_forward.1} parent=11 // pred_check
          %p541 = pneg %p456
        $region26: #{event_transformer_forward.1} parent=11 // pred_check_branch
          %543 = sbr.rel (%p541) target = $region28
        $region27: #{event_transformer_forward.1} parent=11 // pred_region
          _
        $region28: #{event_transformer_forward.1} parent=11 // pred_fallthru
          _
        // Predicated region
        $region29: #{event_transformer_forward.1} parent=11 // pred_check
          %p544 = pneg %p477
        $region30: #{event_transformer_forward.1} parent=11 // pred_check_branch
          %546 = sbr.rel (%p544) target = $region32
        $region31: #{event_transformer_forward.1} parent=11 // pred_region
          %s548 = ssub.s32 16, 16
          %549 = vsyncadd [#allocation22], %s548
          %s551 = sshll.u32 [#allocation23], 4
          %s552 = int_to_ptr.vmem [resolvable:$true] %s551
          %554 = dma.hbm_to_vmem [thread:$0]  %s16, 16, %s552, [#allocation22]
        $region32: #{event_transformer_forward.1} parent=11 // pred_fallthru
          _
      $region12: #{event_transformer_forward.1} parent=5 // pred_fallthru
        _
      %p555 = scmp.lt.s32.totalorder %s43, 2
      // Predicated region
      $region33: #{event_transformer_forward.1} parent=5 // pred_check
        %p556 = pneg %p555
      $region34: #{event_transformer_forward.1} parent=5 // pred_check_branch
        %558 = sbr.rel (%p556) target = $region36
      $region35: #{event_transformer_forward.1} parent=5 // pred_region
        // Predicated region
        $region37: #{event_transformer_forward.1} parent=35 // pred_check
          %p559 = pneg %p143
        $region38: #{event_transformer_forward.1} parent=35 // pred_check_branch
          %561 = sbr.rel (%p559) target = $region40
        $region39: #{event_transformer_forward.1} parent=35 // pred_region
          %s562 = sand.u32 %s43, 1
          %s563 = scalar_lea.sflag [#allocation7], %s562
          %s564 = sand.u32 %s133, 1
          %s565 = smul.addr %s564, 192
          %s566 = scalar_lea.vmem [#allocation6], %s565
          %s568 = ssub.s32 3072, 3072
          %569 = vsyncadd %s563, %s568
          %s570 = smul.addr %s51, 48
          %s571 = smul.addr %s570, 64
          %s572 = scalar_lea.hbm %s3, %s571
          %s573 = sshll.u32 %s566, 4
          %s574 = int_to_ptr.vmem [resolvable:$true] %s573
          %579 = dma.hbm_to_vmem [thread:$0]  %s572, 3072, %s574, %s563, 192, 192, 12
        $region40: #{event_transformer_forward.1} parent=35 // pred_fallthru
          _
        // Predicated region
        $region41: #{event_transformer_forward.1} parent=35 // pred_check
          %p580 = pneg %p169
        $region42: #{event_transformer_forward.1} parent=35 // pred_check_branch
          %582 = sbr.rel (%p580) target = $region44
        $region43: #{event_transformer_forward.1} parent=35 // pred_region
          %s583 = sand.u32 %s43, 1
          %s584 = scalar_lea.sflag [#allocation7], %s583
          %s585 = sand.u32 %s159, 1
          %s586 = smul.addr %s585, 3
          %s587 = scalar_lea.vmem [#allocation8], %s586
          %s589 = ssub.s32 48, 48
          %590 = vsyncadd %s584, %s589
          %s591 = smul.addr %s51, 3
          %s592 = smul.addr %s591, 16
          %s593 = scalar_lea.hbm %s4, %s592
          %s595 = sshll.u32 %s587, 4
          %s596 = int_to_ptr.vmem [resolvable:$true] %s595
          %598 = dma.hbm_to_vmem [thread:$0]  %s593, 48, %s596, %s584
        $region44: #{event_transformer_forward.1} parent=35 // pred_fallthru
          _
        // Predicated region
        $region45: #{event_transformer_forward.1} parent=35 // pred_check
          %p599 = pneg %p195
        $region46: #{event_transformer_forward.1} parent=35 // pred_check_branch
          %601 = sbr.rel (%p599) target = $region48
        $region47: #{event_transformer_forward.1} parent=35 // pred_region
          %s602 = sand.u32 %s43, 1
          %s603 = scalar_lea.sflag [#allocation10], %s602
          %s604 = sand.u32 %s185, 1
          %s605 = smul.addr %s604, 64
          %s606 = scalar_lea.vmem [#allocation9], %s605
          %s608 = ssub.s32 1024, 1024
          %609 = vsyncadd %s603, %s608
          %s610 = smul.addr %s51, 16
          %s611 = smul.addr %s610, 64
          %s612 = scalar_lea.hbm %s5, %s611
          %s613 = sshll.u32 %s606, 4
          %s614 = int_to_ptr.vmem [resolvable:$true] %s613
          %619 = dma.hbm_to_vmem [thread:$0]  %s612, 1024, %s614, %s603, 64, 64, 4
        $region48: #{event_transformer_forward.1} parent=35 // pred_fallthru
          _
        // Predicated region
        $region49: #{event_transformer_forward.1} parent=35 // pred_check
          %p620 = pneg %p221
        $region50: #{event_transformer_forward.1} parent=35 // pred_check_branch
          %622 = sbr.rel (%p620) target = $region52
        $region51: #{event_transformer_forward.1} parent=35 // pred_region
          %s623 = sand.u32 %s43, 1
          %s624 = scalar_lea.sflag [#allocation10], %s623
          %s625 = sand.u32 %s211, 1
          %s626 = scalar_lea.vmem [#allocation11], %s625
          %s628 = ssub.s32 16, 16
          %629 = vsyncadd %s624, %s628
          %s630 = smul.addr %s51, 16
          %s631 = scalar_lea.hbm %s6, %s630
          %s633 = sshll.u32 %s626, 4
          %s634 = int_to_ptr.vmem [resolvable:$true] %s633
          %636 = dma.hbm_to_vmem [thread:$0]  %s631, 16, %s634, %s624
        $region52: #{event_transformer_forward.1} parent=35 // pred_fallthru
          _
        // Predicated region
        $region53: #{event_transformer_forward.1} parent=35 // pred_check
          %p637 = pneg %p247
        $region54: #{event_transformer_forward.1} parent=35 // pred_check_branch
          %639 = sbr.rel (%p637) target = $region56
        $region55: #{event_transformer_forward.1} parent=35 // pred_region
          %s640 = sand.u32 %s43, 1
          %s641 = scalar_lea.sflag [#allocation13], %s640
          %s642 = sand.u32 %s237, 1
          %s643 = scalar_lea.vmem [#allocation12], %s642
          %s645 = ssub.s32 16, 16
          %646 = vsyncadd %s641, %s645
          %s647 = smul.addr %s51, 16
          %s648 = scalar_lea.hbm %s7, %s647
          %s650 = sshll.u32 %s643, 4
          %s651 = int_to_ptr.vmem [resolvable:$true] %s650
          %653 = dma.hbm_to_vmem [thread:$0]  %s648, 16, %s651, %s641
        $region56: #{event_transformer_forward.1} parent=35 // pred_fallthru
          _
        // Predicated region
        $region57: #{event_transformer_forward.1} parent=35 // pred_check
          %p654 = pneg %p273
        $region58: #{event_transformer_forward.1} parent=35 // pred_check_branch
          %656 = sbr.rel (%p654) target = $region60
        $region59: #{event_transformer_forward.1} parent=35 // pred_region
          %s657 = sand.u32 %s43, 1
          %s658 = scalar_lea.sflag [#allocation13], %s657
          %s659 = sand.u32 %s263, 1
          %s660 = scalar_lea.vmem [#allocation14], %s659
          %s662 = ssub.s32 16, 16
          %663 = vsyncadd %s658, %s662
          %s664 = smul.addr %s51, 16
          %s665 = scalar_lea.hbm %s8, %s664
          %s667 = sshll.u32 %s660, 4
          %s668 = int_to_ptr.vmem [resolvable:$true] %s667
          %670 = dma.hbm_to_vmem [thread:$0]  %s665, 16, %s668, %s658
        $region60: #{event_transformer_forward.1} parent=35 // pred_fallthru
          _
        // Predicated region
        $region61: #{event_transformer_forward.1} parent=35 // pred_check
          %p671 = pneg %p299
        $region62: #{event_transformer_forward.1} parent=35 // pred_check_branch
          %673 = sbr.rel (%p671) target = $region64
        $region63: #{event_transformer_forward.1} parent=35 // pred_region
          %s674 = sand.u32 %s43, 1
          %s675 = scalar_lea.sflag [#allocation16], %s674
          %s676 = sand.u32 %s289, 1
          %s677 = smul.addr %s676, 1024
          %s678 = scalar_lea.vmem [#allocation15], %s677
          %s680 = ssub.s32 16384, 16384
          %681 = vsyncadd %s675, %s680
          %s682 = smul.addr %s51, 256
          %s683 = smul.addr %s682, 64
          %s684 = scalar_lea.hbm %s9, %s683
          %s685 = sshll.u32 %s678, 4
          %s686 = int_to_ptr.vmem [resolvable:$true] %s685
          %691 = dma.hbm_to_vmem [thread:$0]  %s684, 16384, %s686, %s675, 1024, 1024, 64
        $region64: #{event_transformer_forward.1} parent=35 // pred_fallthru
          _
        // Predicated region
        $region65: #{event_transformer_forward.1} parent=35 // pred_check
          %p692 = pneg %p325
        $region66: #{event_transformer_forward.1} parent=35 // pred_check_branch
          %694 = sbr.rel (%p692) target = $region68
        $region67: #{event_transformer_forward.1} parent=35 // pred_region
          %p695 = scmp.lt.s32.totalorder %s51, 1
          %s696 = scalar_select %p695, %s51, 1
          %s697 = smul.addr %s696, 16
          %s698 = scalar_lea.vmem %s10, %s697
        $region68: #{event_transformer_forward.1} parent=35 // pred_fallthru
          _
        // Predicated region
        $region69: #{event_transformer_forward.1} parent=35 // pred_check
          %p699 = pneg %p351
        $region70: #{event_transformer_forward.1} parent=35 // pred_check_branch
          %701 = sbr.rel (%p699) target = $region72
        $region71: #{event_transformer_forward.1} parent=35 // pred_region
          %s702 = sand.u32 %s43, 1
          %s703 = scalar_lea.sflag [#allocation16], %s702
          %s704 = sand.u32 %s341, 1
          %s705 = smul.addr %s704, 1024
          %s706 = scalar_lea.vmem [#allocation17], %s705
          %s708 = ssub.s32 16384, 16384
          %709 = vsyncadd %s703, %s708
          %s710 = smul.addr %s51, 256
          %s711 = smul.addr %s710, 64
          %s712 = scalar_lea.hbm %s11, %s711
          %s713 = sshll.u32 %s706, 4
          %s714 = int_to_ptr.vmem [resolvable:$true] %s713
          %719 = dma.hbm_to_vmem [thread:$0]  %s712, 16384, %s714, %s703, 64, 64, 4
        $region72: #{event_transformer_forward.1} parent=35 // pred_fallthru
          _
        // Predicated region
        $region73: #{event_transformer_forward.1} parent=35 // pred_check
          %p720 = pneg %p377
        $region74: #{event_transformer_forward.1} parent=35 // pred_check_branch
          %722 = sbr.rel (%p720) target = $region76
        $region75: #{event_transformer_forward.1} parent=35 // pred_region
          %s723 = sand.u32 %s43, 1
          %s724 = scalar_lea.sflag [#allocation19], %s723
          %s725 = sand.u32 %s367, 1
          %s726 = scalar_lea.vmem [#allocation18], %s725
          %s728 = ssub.s32 16, 16
          %729 = vsyncadd %s724, %s728
          %s730 = smul.addr %s51, 16
          %s731 = scalar_lea.hbm %s12, %s730
          %s733 = sshll.u32 %s726, 4
          %s734 = int_to_ptr.vmem [resolvable:$true] %s733
          %736 = dma.hbm_to_vmem [thread:$0]  %s731, 16, %s734, %s724
        $region76: #{event_transformer_forward.1} parent=35 // pred_fallthru
          _
        // Predicated region
        $region77: #{event_transformer_forward.1} parent=35 // pred_check
          %p737 = pneg %p403
        $region78: #{event_transformer_forward.1} parent=35 // pred_check_branch
          %739 = sbr.rel (%p737) target = $region80
        $region79: #{event_transformer_forward.1} parent=35 // pred_region
          %s740 = sand.u32 %s43, 1
          %s741 = scalar_lea.sflag [#allocation19], %s740
          %s742 = sand.u32 %s393, 1
          %s743 = scalar_lea.vmem [#allocation20], %s742
          %s745 = ssub.s32 16, 16
          %746 = vsyncadd %s741, %s745
          %s747 = smul.addr %s51, 16
          %s748 = scalar_lea.hbm %s13, %s747
          %s750 = sshll.u32 %s743, 4
          %s751 = int_to_ptr.vmem [resolvable:$true] %s750
          %753 = dma.hbm_to_vmem [thread:$0]  %s748, 16, %s751, %s741
        $region80: #{event_transformer_forward.1} parent=35 // pred_fallthru
          _
        // Predicated region
        $region81: #{event_transformer_forward.1} parent=35 // pred_check
          %p754 = pneg %p429
        $region82: #{event_transformer_forward.1} parent=35 // pred_check_branch
          %756 = sbr.rel (%p754) target = $region84
        $region83: #{event_transformer_forward.1} parent=35 // pred_region
          %s757 = sand.u32 %s43, 1
          %s758 = scalar_lea.sflag [#allocation22], %s757
          %s759 = sand.u32 %s419, 1
          %s760 = scalar_lea.vmem [#allocation21], %s759
          %s762 = ssub.s32 16, 16
          %763 = vsyncadd %s758, %s762
          %s764 = smul.addr %s51, 16
          %s765 = scalar_lea.hbm %s14, %s764
          %s767 = sshll.u32 %s760, 4
          %s768 = int_to_ptr.vmem [resolvable:$true] %s767
          %770 = dma.hbm_to_vmem [thread:$0]  %s765, 16, %s768, %s758
        $region84: #{event_transformer_forward.1} parent=35 // pred_fallthru
          _
      $region36: #{event_transformer_forward.1} parent=5 // pred_fallthru
        _
      %p771 = scmp.le.s32.totalorder 1, %s43
      %p772 = scmp.lt.s32.totalorder %s43, 3
      %p773 = pnand %p771, %p772
      %p774 = pneg %p773
      // Predicated region
      $region85: #{event_transformer_forward.1} parent=5 // pred_check
        _
      $region86: #{event_transformer_forward.1} parent=5 // pred_check_branch
        %776 = sbr.rel (%p773) target = $region88
      $region87: #{event_transformer_forward.1} parent=5 // pred_region
        %s777 = ssub.s32 %s43, 1
        // Predicated region
        $region89: #{event_transformer_forward.1} parent=87 // pred_check
          %p778 = pneg %p123
        $region90: #{event_transformer_forward.1} parent=87 // pred_check_branch
          %780 = sbr.rel (%p778) target = $region92
        $region91: #{event_transformer_forward.1} parent=87 // pred_region
          %781 = dma.done [#allocation4], 16
        $region92: #{event_transformer_forward.1} parent=87 // pred_fallthru
          _
        %s782 = sand.u32 %s48, 1
        %s783 = scalar_lea.sflag [#allocation7], %s782
        %s784 = sand.u32 %s136, 1
        %s785 = smul.addr %s784, 192
        %s786 = scalar_lea.vmem [#allocation6], %s785
        // Predicated region
        $region93: #{event_transformer_forward.1} parent=87 // pred_check
          %p787 = pneg %p149
        $region94: #{event_transformer_forward.1} parent=87 // pred_check_branch
          %789 = sbr.rel (%p787) target = $region96
        $region95: #{event_transformer_forward.1} parent=87 // pred_region
          %790 = dma.done %s783, 3072
        $region96: #{event_transformer_forward.1} parent=87 // pred_fallthru
          _
        %s791 = sand.u32 %s48, 1
        %s792 = scalar_lea.sflag [#allocation7], %s791
        %s793 = sand.u32 %s162, 1
        %s794 = smul.addr %s793, 3
        %s795 = scalar_lea.vmem [#allocation8], %s794
        // Predicated region
        $region97: #{event_transformer_forward.1} parent=87 // pred_check
          %p796 = pneg %p175
        $region98: #{event_transformer_forward.1} parent=87 // pred_check_branch
          %798 = sbr.rel (%p796) target = $region100
        $region99: #{event_transformer_forward.1} parent=87 // pred_region
          %799 = dma.done %s792, 48
        $region100: #{event_transformer_forward.1} parent=87 // pred_fallthru
          _
        %s800 = sand.u32 %s48, 1
        %s801 = scalar_lea.sflag [#allocation10], %s800
        %s802 = sand.u32 %s188, 1
        %s803 = smul.addr %s802, 64
        %s804 = scalar_lea.vmem [#allocation9], %s803
        // Predicated region
        $region101: #{event_transformer_forward.1} parent=87 // pred_check
          %p805 = pneg %p201
        $region102: #{event_transformer_forward.1} parent=87 // pred_check_branch
          %807 = sbr.rel (%p805) target = $region104
        $region103: #{event_transformer_forward.1} parent=87 // pred_region
          %808 = dma.done %s801, 1024
        $region104: #{event_transformer_forward.1} parent=87 // pred_fallthru
          _
        %s809 = sand.u32 %s48, 1
        %s810 = scalar_lea.sflag [#allocation10], %s809
        %s811 = sand.u32 %s214, 1
        %s812 = scalar_lea.vmem [#allocation11], %s811
        // Predicated region
        $region105: #{event_transformer_forward.1} parent=87 // pred_check
          %p813 = pneg %p227
        $region106: #{event_transformer_forward.1} parent=87 // pred_check_branch
          %815 = sbr.rel (%p813) target = $region108
        $region107: #{event_transformer_forward.1} parent=87 // pred_region
          %816 = dma.done %s810, 16
        $region108: #{event_transformer_forward.1} parent=87 // pred_fallthru
          _
        %s817 = sand.u32 %s48, 1
        %s818 = scalar_lea.sflag [#allocation13], %s817
        %s819 = sand.u32 %s240, 1
        %s820 = scalar_lea.vmem [#allocation12], %s819
        // Predicated region
        $region109: #{event_transformer_forward.1} parent=87 // pred_check
          %p821 = pneg %p253
        $region110: #{event_transformer_forward.1} parent=87 // pred_check_branch
          %823 = sbr.rel (%p821) target = $region112
        $region111: #{event_transformer_forward.1} parent=87 // pred_region
          %824 = dma.done %s818, 16
        $region112: #{event_transformer_forward.1} parent=87 // pred_fallthru
          _
        %s825 = sand.u32 %s48, 1
        %s826 = scalar_lea.sflag [#allocation13], %s825
        %s827 = sand.u32 %s266, 1
        %s828 = scalar_lea.vmem [#allocation14], %s827
        // Predicated region
        $region113: #{event_transformer_forward.1} parent=87 // pred_check
          %p829 = pneg %p279
        $region114: #{event_transformer_forward.1} parent=87 // pred_check_branch
          %831 = sbr.rel (%p829) target = $region116
        $region115: #{event_transformer_forward.1} parent=87 // pred_region
          %832 = dma.done %s826, 16
        $region116: #{event_transformer_forward.1} parent=87 // pred_fallthru
          _
        %s833 = sand.u32 %s48, 1
        %s834 = scalar_lea.sflag [#allocation16], %s833
        %s835 = sand.u32 %s292, 1
        %s836 = smul.addr %s835, 1024
        %s837 = scalar_lea.vmem [#allocation15], %s836
        // Predicated region
        $region117: #{event_transformer_forward.1} parent=87 // pred_check
          %p838 = pneg %p305
        $region118: #{event_transformer_forward.1} parent=87 // pred_check_branch
          %840 = sbr.rel (%p838) target = $region120
        $region119: #{event_transformer_forward.1} parent=87 // pred_region
          %841 = dma.done %s834, 16384
        $region120: #{event_transformer_forward.1} parent=87 // pred_fallthru
          _
        %s842 = sand.u32 %s48, 1
        %s843 = scalar_lea.sflag [#allocation16], %s842
        %s844 = sand.u32 %s344, 1
        %s845 = smul.addr %s844, 1024
        %s846 = scalar_lea.vmem [#allocation17], %s845
        // Predicated region
        $region121: #{event_transformer_forward.1} parent=87 // pred_check
          %p847 = pneg %p357
        $region122: #{event_transformer_forward.1} parent=87 // pred_check_branch
          %849 = sbr.rel (%p847) target = $region124
        $region123: #{event_transformer_forward.1} parent=87 // pred_region
          %850 = dma.done %s843, 16384
        $region124: #{event_transformer_forward.1} parent=87 // pred_fallthru
          _
        %s851 = sand.u32 %s48, 1
        %s852 = scalar_lea.sflag [#allocation19], %s851
        %s853 = sand.u32 %s370, 1
        %s854 = scalar_lea.vmem [#allocation18], %s853
        // Predicated region
        $region125: #{event_transformer_forward.1} parent=87 // pred_check
          %p855 = pneg %p383
        $region126: #{event_transformer_forward.1} parent=87 // pred_check_branch
          %857 = sbr.rel (%p855) target = $region128
        $region127: #{event_transformer_forward.1} parent=87 // pred_region
          %858 = dma.done %s852, 16
        $region128: #{event_transformer_forward.1} parent=87 // pred_fallthru
          _
        %s859 = sand.u32 %s48, 1
        %s860 = scalar_lea.sflag [#allocation19], %s859
        %s861 = sand.u32 %s396, 1
        %s862 = scalar_lea.vmem [#allocation20], %s861
        // Predicated region
        $region129: #{event_transformer_forward.1} parent=87 // pred_check
          %p863 = pneg %p409
        $region130: #{event_transformer_forward.1} parent=87 // pred_check_branch
          %865 = sbr.rel (%p863) target = $region132
        $region131: #{event_transformer_forward.1} parent=87 // pred_region
          %866 = dma.done %s860, 16
        $region132: #{event_transformer_forward.1} parent=87 // pred_fallthru
          _
        %s867 = sand.u32 %s48, 1
        %s868 = scalar_lea.sflag [#allocation22], %s867
        %s869 = sand.u32 %s422, 1
        %s870 = scalar_lea.vmem [#allocation21], %s869
        // Predicated region
        $region133: #{event_transformer_forward.1} parent=87 // pred_check
          %p871 = pneg %p435
        $region134: #{event_transformer_forward.1} parent=87 // pred_check_branch
          %873 = sbr.rel (%p871) target = $region136
        $region135: #{event_transformer_forward.1} parent=87 // pred_region
          %874 = dma.done %s868, 16
        $region136: #{event_transformer_forward.1} parent=87 // pred_fallthru
          _
        // Predicated region
        $region137: #{event_transformer_forward.1} parent=87 // pred_check
          %p875 = pneg %p477
        $region138: #{event_transformer_forward.1} parent=87 // pred_check_branch
          %877 = sbr.rel (%p875) target = $region140
        $region139: #{event_transformer_forward.1} parent=87 // pred_region
          %878 = dma.done [#allocation22], 16
        $region140: #{event_transformer_forward.1} parent=87 // pred_fallthru
          _
        %s879 = smul.u32 2, %s52
        %p880 = scmp.lt.s32.totalorder %s879, 1
        %s881 = scalar_select %p880, %s879, 1
        %s882 = smul.addr %s881, 8
        %s883 = scalar_lea.vmem %s0, %s882
        %p884 = pneg %p81
        %p885 = pneg %p78
        %p886 = pneg %p102
        %p887 = pneg %p99
        %p888 = pneg %p123
        %p889 = pneg %p120
        %s890 = sand.u32 %s48, 1
        %s891 = scalar_lea.sflag [#allocation7], %s890
        %s892 = sand.u32 %s136, 1
        %s893 = smul.addr %s892, 192
        %s894 = scalar_lea.vmem [#allocation6], %s893
        %p895 = pneg %p149
        %p896 = pneg %p146
        %s897 = sand.u32 %s48, 1
        %s898 = scalar_lea.sflag [#allocation7], %s897
        %s899 = sand.u32 %s162, 1
        %s900 = smul.addr %s899, 3
        %s901 = scalar_lea.vmem [#allocation8], %s900
        %p902 = pneg %p175
        %p903 = pneg %p172
        %s904 = sand.u32 %s48, 1
        %s905 = scalar_lea.sflag [#allocation10], %s904
        %s906 = sand.u32 %s188, 1
        %s907 = smul.addr %s906, 64
        %s908 = scalar_lea.vmem [#allocation9], %s907
        %p909 = pneg %p201
        %p910 = pneg %p198
        %s911 = sand.u32 %s48, 1
        %s912 = scalar_lea.sflag [#allocation10], %s911
        %s913 = sand.u32 %s214, 1
        %s914 = scalar_lea.vmem [#allocation11], %s913
        %p915 = pneg %p227
        %p916 = pneg %p224
        %s917 = sand.u32 %s48, 1
        %s918 = scalar_lea.sflag [#allocation13], %s917
        %s919 = sand.u32 %s240, 1
        %s920 = scalar_lea.vmem [#allocation12], %s919
        %p921 = pneg %p253
        %p922 = pneg %p250
        %s923 = sand.u32 %s48, 1
        %s924 = scalar_lea.sflag [#allocation13], %s923
        %s925 = sand.u32 %s266, 1
        %s926 = scalar_lea.vmem [#allocation14], %s925
        %p927 = pneg %p279
        %p928 = pneg %p276
        %s929 = sand.u32 %s48, 1
        %s930 = scalar_lea.sflag [#allocation16], %s929
        %s931 = sand.u32 %s292, 1
        %s932 = smul.addr %s931, 1024
        %s933 = scalar_lea.vmem [#allocation15], %s932
        %p934 = pneg %p305
        %p935 = pneg %p302
        %p936 = scmp.lt.s32.totalorder %s53, 1
        %s937 = scalar_select %p936, %s53, 1
        %s938 = smul.addr %s937, 16
        %s939 = scalar_lea.vmem %s10, %s938
        %p940 = pneg %p331
        %p941 = pneg %p328
        %s942 = sand.u32 %s48, 1
        %s943 = scalar_lea.sflag [#allocation16], %s942
        %s944 = sand.u32 %s344, 1
        %s945 = smul.addr %s944, 1024
        %s946 = scalar_lea.vmem [#allocation17], %s945
        %p947 = pneg %p357
        %p948 = pneg %p354
        %s949 = sand.u32 %s48, 1
        %s950 = scalar_lea.sflag [#allocation19], %s949
        %s951 = sand.u32 %s370, 1
        %s952 = scalar_lea.vmem [#allocation18], %s951
        %p953 = pneg %p383
        %p954 = pneg %p380
        %s955 = sand.u32 %s48, 1
        %s956 = scalar_lea.sflag [#allocation19], %s955
        %s957 = sand.u32 %s396, 1
        %s958 = scalar_lea.vmem [#allocation20], %s957
        %p959 = pneg %p409
        %p960 = pneg %p406
        %s961 = sand.u32 %s48, 1
        %s962 = scalar_lea.sflag [#allocation22], %s961
        %s963 = sand.u32 %s422, 1
        %s964 = scalar_lea.vmem [#allocation21], %s963
        %p965 = pneg %p435
        %p966 = pneg %p432
        %p967 = pneg %p456
        %p968 = pneg %p453
        %p969 = pneg %p477
        %p970 = pneg %p474
        %p971 = pneg %p503
        %p972 = pneg %p500
        %s973 = smul.u32 2, %s52
        %p974 = scmp.lt.s32.totalorder %s973, 1
        %s975 = scalar_select %p974, %s973, 1
        %s976 = smul.addr %s975, 8
        %s977 = scalar_lea.vmem %s0, %s976
        %s978 = smul.u32 2, %s52
        %p979 = scmp.lt.s32.totalorder %s53, 1
        %s980 = scalar_select %p979, %s53, 1
        %s981 = smul.addr %s980, 16
        %s982 = scalar_lea.vmem %s10, %s981
        %p984 = scmp.eq.s32.totalorder %s53, 0
        // Predicated region
        $region141: #{event_transformer_forward.1} parent=87 // pred_check
          %p985 = pneg %p984
        $region142: #{event_transformer_forward.1} parent=87 // pred_check_branch
          %987 = sbr.rel (%p985) target = $region144
        $region143: #{event_transformer_forward.1} parent=87 // pred_region
          %v988 = vld [vmem:[%s977] sm:$0xff]
          %v989 = vld [vmem:[%s977 + $0x8] sm:$0xff]
          %v990 = vpack.c.bf16 %v989, %v988
          %v991 = vld [vmem:[%s1] sm:$0xf]
          %v992 = vld [vmem:[#allocation3] sm:$0x1]
          %v994 = vlaneseq
          %v995 = vshrl.u32 %v994, 7
          %v996 = vsub.s32 0, %v995
          %v997 = vrot.slane %v992, %v996
          %vm999 = vcmask 64512
          %v1001 = vsel %vm999, %v990, 0
          %vm1003 = vcmask 1043456
          %v1005 = vsel %vm1003, %v991, 0
          %1007 = vmatprep.subr.bf16.mxu0 0
          %1008 = vmatpush1.bf16.msra.mxu0 %v1005
          %1009 = vmatprep.subr.bf16.mxu0 0
          %1010 = vmatpush1.bf16.msra.mxu0 0
          %1011 = vmatprep.subr.bf16.mxu0 0
          %1012 = vmatpush1.bf16.msra.mxu0 0
          %1013 = vmatprep.subr.bf16.mxu0 0
          %1014 = vmatpush1.bf16.msra.mxu0 0
          %1015 = vmatprep.subr.bf16.mxu0 0
          %1016 = vmatpush1.bf16.msra.mxu0 0
          %1017 = vmatprep.subr.bf16.mxu0 0
          %1018 = vmatpush1.bf16.msra.mxu0 0
          %1019 = vmatprep.subr.bf16.mxu0 0
          %1020 = vmatpush1.bf16.msra.mxu0 0
          %1021 = vmatprep.subr.bf16.mxu0 0
          %1022 = vmatpush1.bf16.msra.mxu0 0
          %1023 = vmatprep.subr.bf16.mxu0 0
          %1024 = vmatpush1.bf16.msra.mxu0 0
          %1025 = vmatprep.subr.bf16.mxu0 0
          %1026 = vmatpush1.bf16.msra.mxu0 0
          %1027 = vmatprep.subr.bf16.mxu0 0
          %1028 = vmatpush1.bf16.msra.mxu0 0
          %1029 = vmatprep.subr.bf16.mxu0 0
          %1030 = vmatpush1.bf16.msra.mxu0 0
          %1031 = vmatprep.subr.bf16.mxu0 0
          %1032 = vmatpush1.bf16.msra.mxu0 0
          %1033 = vmatprep.subr.bf16.mxu0 0
          %1034 = vmatpush1.bf16.msra.mxu0 0
          %1035 = vmatprep.subr.bf16.mxu0 0
          %1036 = vmatpush1.bf16.msra.mxu0 0
          %1037 = vmatprep.subr.bf16.mxu0 0
          %1038 = vmatpush1.bf16.msra.mxu0 0
          %1039 = vmatprep.mubr.bf16.mxu0 0
          %1040 = vmatmul.mubr.bf16.gmra.mrb[0].mxu0 %v1001
          %v1041 = vpop.f32.mrb[0].mxu0
          %v1042 = vadd.f32 %v997, %v1041
          %v1043 = vpop.f32.mrb[0].mxu0
          %v1044 = vpop.f32.mrb[0].mxu0
          %v1045 = vadd.f32 %v997, %v1044
          %v1046 = vpop.f32.mrb[0].mxu0
          %1047 = vdwg.mxu0
          %1048 = vst [vmem:[#allocation2] sm:$0xff] %v1042
          %1049 = vst [vmem:[#allocation2 + $0x8] sm:$0xff] %v1045
        $region144: #{event_transformer_forward.1} parent=87 // pred_fallthru
          _
        %v1050 = vld [vmem:[#allocation2] sm:$0xff]
        %v1051 = vld [vmem:[#allocation2 + $0x8] sm:$0xff]
        %v1052 = vpack.c.bf16 %v1051, %v1050
        %v1053 = vld [vmem:[%s786] sm:$0xff]
        %v1054 = vld [vmem:[%s786 + $0x8] sm:$0xf]
        %v1055 = vld [vmem:[%s786 + $0xc] sm:$0xff]
        %v1056 = vld [vmem:[%s786 + $0x14] sm:$0xf]
        %v1057 = vld [vmem:[%s786 + $0x18] sm:$0xff]
        %v1058 = vld [vmem:[%s786 + $0x20] sm:$0xf]
        %v1059 = vld [vmem:[%s786 + $0x24] sm:$0xff]
        %v1060 = vld [vmem:[%s786 + $0x2c] sm:$0xf]
        %v1061 = vld [vmem:[%s786 + $0x30] sm:$0xff]
        %v1062 = vld [vmem:[%s786 + $0x38] sm:$0xf]
        %v1063 = vld [vmem:[%s786 + $0x3c] sm:$0xff]
        %v1064 = vld [vmem:[%s786 + $0x44] sm:$0xf]
        %v1065 = vld [vmem:[%s786 + $0x48] sm:$0xff]
        %v1066 = vld [vmem:[%s786 + $0x50] sm:$0xf]
        %v1067 = vld [vmem:[%s786 + $0x54] sm:$0xff]
        %v1068 = vld [vmem:[%s786 + $0x5c] sm:$0xf]
        %v1069 = vld [vmem:[%s786 + $0x60] sm:$0xff]
        %v1070 = vld [vmem:[%s786 + $0x68] sm:$0xf]
        %v1071 = vld [vmem:[%s786 + $0x6c] sm:$0xff]
        %v1072 = vld [vmem:[%s786 + $0x74] sm:$0xf]
        %v1073 = vld [vmem:[%s786 + $0x78] sm:$0xff]
        %v1074 = vld [vmem:[%s786 + $0x80] sm:$0xf]
        %v1075 = vld [vmem:[%s786 + $0x84] sm:$0xff]
        %v1076 = vld [vmem:[%s786 + $0x8c] sm:$0xf]
        %v1077 = vld [vmem:[%s786 + $0x90] sm:$0xff]
        %v1078 = vld [vmem:[%s786 + $0x98] sm:$0xf]
        %v1079 = vld [vmem:[%s786 + $0x9c] sm:$0xff]
        %v1080 = vld [vmem:[%s786 + $0xa4] sm:$0xf]
        %v1081 = vld [vmem:[%s786 + $0xa8] sm:$0xff]
        %v1082 = vld [vmem:[%s786 + $0xb0] sm:$0xf]
        %v1083 = vld [vmem:[%s786 + $0xb4] sm:$0xff]
        %v1084 = vld [vmem:[%s786 + $0xbc] sm:$0xf]
        %v1085 = vld [vmem:[%s795] sm:$0x7]
        %v1087 = vlaneseq
        %v1088 = vshrl.u32 %v1087, 7
        %v1089 = vsub.s32 0, %v1088
        %v1090 = vrot.slane %v1085, %v1089
        %v1091 = vlaneseq
        %v1092 = vshrl.u32 %v1091, 7
        %v1093 = vsub.s32 1, %v1092
        %v1094 = vrot.slane %v1085, %v1093
        %v1095 = vlaneseq
        %v1096 = vshrl.u32 %v1095, 7
        %v1097 = vsub.s32 2, %v1096
        %v1098 = vrot.slane %v1085, %v1097
        %v1134 = vunpack.c.l.b16 %v1053
        %v1135 = vunpack.c.h.b16 %v1053
        %v1136 = vunpack.c.l.b16 %v1054
        %v1137 = vunpack.c.l.b16 %v1055
        %v1138 = vunpack.c.h.b16 %v1055
        %v1139 = vunpack.c.l.b16 %v1056
        %v1140 = vunpack.c.l.b16 %v1057
        %v1141 = vunpack.c.h.b16 %v1057
        %v1142 = vunpack.c.l.b16 %v1058
        %v1143 = vunpack.c.l.b16 %v1059
        %v1144 = vunpack.c.h.b16 %v1059
        %v1145 = vunpack.c.l.b16 %v1060
        %v1146 = vunpack.c.l.b16 %v1061
        %v1147 = vunpack.c.h.b16 %v1061
        %v1148 = vunpack.c.l.b16 %v1062
        %v1149 = vunpack.c.l.b16 %v1063
        %v1150 = vunpack.c.h.b16 %v1063
        %v1151 = vunpack.c.l.b16 %v1064
        %v1152 = vunpack.c.l.b16 %v1065
        %v1153 = vunpack.c.h.b16 %v1065
        %v1154 = vunpack.c.l.b16 %v1066
        %v1155 = vunpack.c.l.b16 %v1067
        %v1156 = vunpack.c.h.b16 %v1067
        %v1157 = vunpack.c.l.b16 %v1068
        %v1158 = vunpack.c.l.b16 %v1069
        %v1159 = vunpack.c.h.b16 %v1069
        %v1160 = vunpack.c.l.b16 %v1070
        %v1161 = vunpack.c.l.b16 %v1071
        %v1162 = vunpack.c.h.b16 %v1071
        %v1163 = vunpack.c.l.b16 %v1072
        %v1164 = vunpack.c.l.b16 %v1073
        %v1165 = vunpack.c.h.b16 %v1073
        %v1166 = vunpack.c.l.b16 %v1074
        %v1167 = vunpack.c.l.b16 %v1075
        %v1168 = vunpack.c.h.b16 %v1075
        %v1169 = vunpack.c.l.b16 %v1076
        %v1170 = vunpack.c.l.b16 %v1077
        %v1171 = vunpack.c.h.b16 %v1077
        %v1172 = vunpack.c.l.b16 %v1078
        %v1173 = vunpack.c.l.b16 %v1079
        %v1174 = vunpack.c.h.b16 %v1079
        %v1175 = vunpack.c.l.b16 %v1080
        %v1176 = vunpack.c.l.b16 %v1081
        %v1177 = vunpack.c.h.b16 %v1081
        %v1178 = vunpack.c.l.b16 %v1082
        %v1179 = vunpack.c.l.b16 %v1083
        %v1180 = vunpack.c.h.b16 %v1083
        %v1181 = vunpack.c.l.b16 %v1084
        %v1182 = vpack.c.b16 %v1137, %v1134
        %v1183 = vpack.c.b16 %v1138, %v1135
        %v1184 = vpack.c.b16 %v1139, %v1136
        %v1185 = vpack.c.b16 %v1143, %v1140
        %v1186 = vpack.c.b16 %v1144, %v1141
        %v1187 = vpack.c.b16 %v1145, %v1142
        %v1188 = vpack.c.b16 %v1149, %v1146
        %v1189 = vpack.c.b16 %v1150, %v1147
        %v1190 = vpack.c.b16 %v1151, %v1148
        %v1191 = vpack.c.b16 %v1155, %v1152
        %v1192 = vpack.c.b16 %v1156, %v1153
        %v1193 = vpack.c.b16 %v1157, %v1154
        %v1194 = vpack.c.b16 %v1161, %v1158
        %v1195 = vpack.c.b16 %v1162, %v1159
        %v1196 = vpack.c.b16 %v1163, %v1160
        %v1197 = vpack.c.b16 %v1167, %v1164
        %v1198 = vpack.c.b16 %v1168, %v1165
        %v1199 = vpack.c.b16 %v1169, %v1166
        %v1200 = vpack.c.b16 %v1173, %v1170
        %v1201 = vpack.c.b16 %v1174, %v1171
        %v1202 = vpack.c.b16 %v1175, %v1172
        %v1203 = vpack.c.b16 %v1179, %v1176
        %v1204 = vpack.c.b16 %v1180, %v1177
        %v1205 = vpack.c.b16 %v1181, %v1178
        %1230 = vmatprep.subr.bf16.mxu0 %v1183
        %1231 = vmatpush1.bf16.msra.mxu0 %v1182
        %1232 = vmatprep.subr.bf16.mxu0 %v1186
        %1233 = vmatpush1.bf16.msra.mxu0 %v1185
        %1234 = vmatprep.subr.bf16.mxu0 %v1189
        %1235 = vmatpush1.bf16.msra.mxu0 %v1188
        %1236 = vmatprep.subr.bf16.mxu0 %v1192
        %1237 = vmatpush1.bf16.msra.mxu0 %v1191
        %1238 = vmatprep.subr.bf16.mxu0 %v1195
        %1239 = vmatpush1.bf16.msra.mxu0 %v1194
        %1240 = vmatprep.subr.bf16.mxu0 %v1198
        %1241 = vmatpush1.bf16.msra.mxu0 %v1197
        %1242 = vmatprep.subr.bf16.mxu0 %v1201
        %1243 = vmatpush1.bf16.msra.mxu0 %v1200
        %1244 = vmatprep.subr.bf16.mxu0 %v1204
        %1245 = vmatpush1.bf16.msra.mxu0 %v1203
        %1246 = vmatprep.subr.bf16.mxu0 0
        %1247 = vmatpush1.bf16.msra.mxu0 0
        %1248 = vmatprep.subr.bf16.mxu0 0
        %1249 = vmatpush1.bf16.msra.mxu0 0
        %1250 = vmatprep.subr.bf16.mxu0 0
        %1251 = vmatpush1.bf16.msra.mxu0 0
        %1252 = vmatprep.subr.bf16.mxu0 0
        %1253 = vmatpush1.bf16.msra.mxu0 0
        %1254 = vmatprep.subr.bf16.mxu0 0
        %1255 = vmatpush1.bf16.msra.mxu0 0
        %1256 = vmatprep.subr.bf16.mxu0 0
        %1257 = vmatpush1.bf16.msra.mxu0 0
        %1258 = vmatprep.subr.bf16.mxu0 0
        %1259 = vmatpush1.bf16.msra.mxu0 0
        %1260 = vmatprep.subr.bf16.mxu0 0
        %1261 = vmatpush1.bf16.msra.mxu0 0
        %1262 = vmatprep.mubr.bf16.mxu0 0
        %1263 = vmatmul.mubr.bf16.gmra.mrb[0].mxu0 %v1052
        %v1264 = vpop.f32.mrb[0].mxu0
        %v1265 = vadd.f32 %v1090, %v1264
        %v1266 = vpop.f32.mrb[0].mxu0
        %v1267 = vadd.f32 %v1094, %v1266
        %v1268 = vpop.f32.mrb[0].mxu0
        %v1269 = vadd.f32 %v1090, %v1268
        %v1270 = vpop.f32.mrb[0].mxu0
        %v1271 = vadd.f32 %v1094, %v1270
        %1272 = vdwg.mxu0
        %1273 = vmatprep.subr.bf16.mxu0 0
        %1274 = vmatpush1.bf16.msra.mxu0 %v1184
        %1275 = vmatprep.subr.bf16.mxu0 0
        %1276 = vmatpush1.bf16.msra.mxu0 %v1187
        %1277 = vmatprep.subr.bf16.mxu0 0
        %1278 = vmatpush1.bf16.msra.mxu0 %v1190
        %1279 = vmatprep.subr.bf16.mxu0 0
        %1280 = vmatpush1.bf16.msra.mxu0 %v1193
        %1281 = vmatprep.subr.bf16.mxu0 0
        %1282 = vmatpush1.bf16.msra.mxu0 %v1196
        %1283 = vmatprep.subr.bf16.mxu0 0
        %1284 = vmatpush1.bf16.msra.mxu0 %v1199
        %1285 = vmatprep.subr.bf16.mxu0 0
        %1286 = vmatpush1.bf16.msra.mxu0 %v1202
        %1287 = vmatprep.subr.bf16.mxu0 0
        %1288 = vmatpush1.bf16.msra.mxu0 %v1205
        %1289 = vmatprep.subr.bf16.mxu0 0
        %1290 = vmatpush1.bf16.msra.mxu0 0
        %1291 = vmatprep.subr.bf16.mxu0 0
        %1292 = vmatpush1.bf16.msra.mxu0 0
        %1293 = vmatprep.subr.bf16.mxu0 0
        %1294 = vmatpush1.bf16.msra.mxu0 0
        %1295 = vmatprep.subr.bf16.mxu0 0
        %1296 = vmatpush1.bf16.msra.mxu0 0
        %1297 = vmatprep.subr.bf16.mxu0 0
        %1298 = vmatpush1.bf16.msra.mxu0 0
        %1299 = vmatprep.subr.bf16.mxu0 0
        %1300 = vmatpush1.bf16.msra.mxu0 0
        %1301 = vmatprep.subr.bf16.mxu0 0
        %1302 = vmatpush1.bf16.msra.mxu0 0
        %1303 = vmatprep.subr.bf16.mxu0 0
        %1304 = vmatpush1.bf16.msra.mxu0 0
        %1305 = vmatprep.mubr.bf16.mxu0 0
        %1306 = vmatmul.mubr.bf16.gmra.mrb[0].mxu0 %v1052
        %v1307 = vpop.f32.mrb[0].mxu0
        %v1308 = vadd.f32 %v1098, %v1307
        %v1309 = vpop.f32.mrb[0].mxu0
        %v1310 = vpop.f32.mrb[0].mxu0
        %v1311 = vadd.f32 %v1098, %v1310
        %v1312 = vpop.f32.mrb[0].mxu0
        %1313 = vdwg.mxu0
        %v1314 = vpack.c.bf16 %v1265, %v1265
        %v1315 = vpack.c.bf16 %v1269, %v1269
        %v1316 = vpack.c.bf16 %v1267, %v1267
        %v1317 = vpack.c.bf16 %v1271, %v1271
        %vm1318 = vcmask 261120
        %v1320 = vsel %vm1318, %v1314, 0
        %v1323 = vsel %vm1318, %v1316, 0
        %1325 = vmatprep.subr.bf16.mxu0 0
        %1326 = vmatpush1.bf16.xpose.msra.mxu0 %v1323
        %1327 = vmatprep.subr.bf16.mxu0 0
        %1328 = vmatpush1.bf16.xpose.msra.mxu0 0
        %1329 = vmatprep.subr.bf16.mxu0 0
        %1330 = vmatpush1.bf16.xpose.msra.mxu0 0
        %1331 = vmatprep.subr.bf16.mxu0 0
        %1332 = vmatpush1.bf16.xpose.msra.mxu0 0
        %1333 = vmatprep.subr.bf16.mxu0 0
        %1334 = vmatpush1.bf16.xpose.msra.mxu0 0
        %1335 = vmatprep.subr.bf16.mxu0 0
        %1336 = vmatpush1.bf16.xpose.msra.mxu0 0
        %1337 = vmatprep.subr.bf16.mxu0 0
        %1338 = vmatpush1.bf16.xpose.msra.mxu0 0
        %1339 = vmatprep.subr.bf16.mxu0 0
        %1340 = vmatpush1.bf16.xpose.msra.mxu0 0
        %1341 = vmatprep.subr.bf16.mxu0 0
        %1342 = vmatpush1.bf16.xpose.msra.mxu0 0
        %1343 = vmatprep.subr.bf16.mxu0 0
        %1344 = vmatpush1.bf16.xpose.msra.mxu0 0
        %1345 = vmatprep.subr.bf16.mxu0 0
        %1346 = vmatpush1.bf16.xpose.msra.mxu0 0
        %1347 = vmatprep.subr.bf16.mxu0 0
        %1348 = vmatpush1.bf16.xpose.msra.mxu0 0
        %1349 = vmatprep.subr.bf16.mxu0 0
        %1350 = vmatpush1.bf16.xpose.msra.mxu0 0
        %1351 = vmatprep.subr.bf16.mxu0 0
        %1352 = vmatpush1.bf16.xpose.msra.mxu0 0
        %1353 = vmatprep.subr.bf16.mxu0 0
        %1354 = vmatpush1.bf16.xpose.msra.mxu0 0
        %1355 = vmatprep.subr.bf16.mxu0 0
        %1356 = vmatpush1.bf16.xpose.msra.mxu0 0
        %1357 = vmatprep.mubr.bf16.mxu0 0
        %1358 = vmatmul.mubr.bf16.gmra.mrb[0].mxu0 %v1320
        %v1359 = vpop.f32.mrb[0].mxu0
        %v1360 = vadd.f32 0.0, %v1359
        %v1361 = vpop.f32.mrb[0].mxu0
        %v1362 = vpop.f32.mrb[0].mxu0
        %v1363 = vpop.f32.mrb[0].mxu0
        %1364 = vdwg.mxu0
        %v1366 = vsel %vm1318, %v1315, 0
        %v1369 = vsel %vm1318, %v1317, 0
        %1371 = vmatprep.subr.bf16.mxu0 0
        %1372 = vmatpush1.bf16.xpose.msra.mxu0 %v1369
        %1373 = vmatprep.subr.bf16.mxu0 0
        %1374 = vmatpush1.bf16.xpose.msra.mxu0 0
        %1375 = vmatprep.subr.bf16.mxu0 0
        %1376 = vmatpush1.bf16.xpose.msra.mxu0 0
        %1377 = vmatprep.subr.bf16.mxu0 0
        %1378 = vmatpush1.bf16.xpose.msra.mxu0 0
        %1379 = vmatprep.subr.bf16.mxu0 0
        %1380 = vmatpush1.bf16.xpose.msra.mxu0 0
        %1381 = vmatprep.subr.bf16.mxu0 0
        %1382 = vmatpush1.bf16.xpose.msra.mxu0 0
        %1383 = vmatprep.subr.bf16.mxu0 0
        %1384 = vmatpush1.bf16.xpose.msra.mxu0 0
        %1385 = vmatprep.subr.bf16.mxu0 0
        %1386 = vmatpush1.bf16.xpose.msra.mxu0 0
        %1387 = vmatprep.subr.bf16.mxu0 0
        %1388 = vmatpush1.bf16.xpose.msra.mxu0 0
        %1389 = vmatprep.subr.bf16.mxu0 0
        %1390 = vmatpush1.bf16.xpose.msra.mxu0 0
        %1391 = vmatprep.subr.bf16.mxu0 0
        %1392 = vmatpush1.bf16.xpose.msra.mxu0 0
        %1393 = vmatprep.subr.bf16.mxu0 0
        %1394 = vmatpush1.bf16.xpose.msra.mxu0 0
        %1395 = vmatprep.subr.bf16.mxu0 0
        %1396 = vmatpush1.bf16.xpose.msra.mxu0 0
        %1397 = vmatprep.subr.bf16.mxu0 0
        %1398 = vmatpush1.bf16.xpose.msra.mxu0 0
        %1399 = vmatprep.subr.bf16.mxu0 0
        %1400 = vmatpush1.bf16.xpose.msra.mxu0 0
        %1401 = vmatprep.subr.bf16.mxu0 0
        %1402 = vmatpush1.bf16.xpose.msra.mxu0 0
        %1403 = vmatprep.mubr.bf16.mxu0 0
        %1404 = vmatmul.mubr.bf16.gmra.mrb[0].mxu0 %v1366
        %v1405 = vpop.f32.mrb[0].mxu0
        %v1406 = vadd.f32 0.0, %v1405
        %v1407 = vpop.f32.mrb[0].mxu0
        %v1408 = vpop.f32.mrb[0].mxu0
        %v1409 = vpop.f32.mrb[0].mxu0
        %1410 = vdwg.mxu0
        %v1411 = vmul.f32 %v1360, 0.17677669
        %v1412 = vmul.f32 %v1406, 0.17677669
        %vm1413 = vcmask 64512
        %v1414 = vsel %vm1413, %v1411, -inf
        %1415 = vmax.xlane.f32.xlu0 %v1414
        %v1416 = vpop.xlane.xlu0 %1415
        %v1417 = vsel %vm1413, %v1412, -inf
        %1418 = vmax.xlane.f32.xlu0 %v1417
        %v1419 = vpop.xlane.xlu0 %1418
        %v1420 = vsub.f32 %v1411, %v1416
        %v1421 = vsub.f32 %v1412, %v1419
        %v1422 = vmul.f32 %v1420, 1.442695
        %v1423 = vpow.pop %v1422
        %v1424 = vmul.f32 %v1421, 1.442695
        %v1425 = vpow.pop %v1424
        %v1426 = vsel %vm1413, %v1423, 0.0
        %1427 = vadd.xlane.f32.xlu0 %v1426
        %v1428 = vpop.xlane.xlu0 %1427
        %v1429 = vsel %vm1413, %v1425, 0.0
        %1430 = vadd.xlane.f32.xlu0 %v1429
        %v1431 = vpop.xlane.xlu0 %1430
        %v1432 = vrcp.pop %v1428
        %v1433 = vrcp.pop %v1431
        %v1434 = vmul.f32 %v1423, %v1432
        %v1435 = vmul.f32 %v1425, %v1433
        %v1436 = vpack.c.bf16 %v1434, %v1434
        %v1437 = vpack.c.bf16 %v1435, %v1435
        %v1438 = vpack.c.bf16 %v1308, %v1308
        %v1439 = vpack.c.bf16 %v1311, %v1311
        %v1441 = vsel %vm1413, %v1436, 0
        %vm1443 = vcmask 1043456
        %v1445 = vsel %vm1443, %v1438, 0
        %1447 = vmatprep.subr.bf16.mxu0 0
        %1448 = vmatpush1.bf16.msra.mxu0 %v1445
        %1449 = vmatprep.subr.bf16.mxu0 0
        %1450 = vmatpush1.bf16.msra.mxu0 0
        %1451 = vmatprep.subr.bf16.mxu0 0
        %1452 = vmatpush1.bf16.msra.mxu0 0
        %1453 = vmatprep.subr.bf16.mxu0 0
        %1454 = vmatpush1.bf16.msra.mxu0 0
        %1455 = vmatprep.subr.bf16.mxu0 0
        %1456 = vmatpush1.bf16.msra.mxu0 0
        %1457 = vmatprep.subr.bf16.mxu0 0
        %1458 = vmatpush1.bf16.msra.mxu0 0
        %1459 = vmatprep.subr.bf16.mxu0 0
        %1460 = vmatpush1.bf16.msra.mxu0 0
        %1461 = vmatprep.subr.bf16.mxu0 0
        %1462 = vmatpush1.bf16.msra.mxu0 0
        %1463 = vmatprep.subr.bf16.mxu0 0
        %1464 = vmatpush1.bf16.msra.mxu0 0
        %1465 = vmatprep.subr.bf16.mxu0 0
        %1466 = vmatpush1.bf16.msra.mxu0 0
        %1467 = vmatprep.subr.bf16.mxu0 0
        %1468 = vmatpush1.bf16.msra.mxu0 0
        %1469 = vmatprep.subr.bf16.mxu0 0
        %1470 = vmatpush1.bf16.msra.mxu0 0
        %1471 = vmatprep.subr.bf16.mxu0 0
        %1472 = vmatpush1.bf16.msra.mxu0 0
        %1473 = vmatprep.subr.bf16.mxu0 0
        %1474 = vmatpush1.bf16.msra.mxu0 0
        %1475 = vmatprep.subr.bf16.mxu0 0
        %1476 = vmatpush1.bf16.msra.mxu0 0
        %1477 = vmatprep.subr.bf16.mxu0 0
        %1478 = vmatpush1.bf16.msra.mxu0 0
        %1479 = vmatprep.mubr.bf16.mxu0 0
        %1480 = vmatmul.mubr.bf16.gmra.mrb[0].mxu0 %v1441
        %v1481 = vpop.f32.mrb[0].mxu0
        %v1482 = vadd.f32 0.0, %v1481
        %v1483 = vpop.f32.mrb[0].mxu0
        %v1484 = vpop.f32.mrb[0].mxu0
        %v1485 = vpop.f32.mrb[0].mxu0
        %1486 = vdwg.mxu0
        %v1488 = vsel %vm1413, %v1437, 0
        %v1491 = vsel %vm1443, %v1439, 0
        %1493 = vmatprep.subr.bf16.mxu0 0
        %1494 = vmatpush1.bf16.msra.mxu0 %v1491
        %1495 = vmatprep.subr.bf16.mxu0 0
        %1496 = vmatpush1.bf16.msra.mxu0 0
        %1497 = vmatprep.subr.bf16.mxu0 0
        %1498 = vmatpush1.bf16.msra.mxu0 0
        %1499 = vmatprep.subr.bf16.mxu0 0
        %1500 = vmatpush1.bf16.msra.mxu0 0
        %1501 = vmatprep.subr.bf16.mxu0 0
        %1502 = vmatpush1.bf16.msra.mxu0 0
        %1503 = vmatprep.subr.bf16.mxu0 0
        %1504 = vmatpush1.bf16.msra.mxu0 0
        %1505 = vmatprep.subr.bf16.mxu0 0
        %1506 = vmatpush1.bf16.msra.mxu0 0
        %1507 = vmatprep.subr.bf16.mxu0 0
        %1508 = vmatpush1.bf16.msra.mxu0 0
        %1509 = vmatprep.subr.bf16.mxu0 0
        %1510 = vmatpush1.bf16.msra.mxu0 0
        %1511 = vmatprep.subr.bf16.mxu0 0
        %1512 = vmatpush1.bf16.msra.mxu0 0
        %1513 = vmatprep.subr.bf16.mxu0 0
        %1514 = vmatpush1.bf16.msra.mxu0 0
        %1515 = vmatprep.subr.bf16.mxu0 0
        %1516 = vmatpush1.bf16.msra.mxu0 0
        %1517 = vmatprep.subr.bf16.mxu0 0
        %1518 = vmatpush1.bf16.msra.mxu0 0
        %1519 = vmatprep.subr.bf16.mxu0 0
        %1520 = vmatpush1.bf16.msra.mxu0 0
        %1521 = vmatprep.subr.bf16.mxu0 0
        %1522 = vmatpush1.bf16.msra.mxu0 0
        %1523 = vmatprep.subr.bf16.mxu0 0
        %1524 = vmatpush1.bf16.msra.mxu0 0
        %1525 = vmatprep.mubr.bf16.mxu0 0
        %1526 = vmatmul.mubr.bf16.gmra.mrb[0].mxu0 %v1488
        %v1527 = vpop.f32.mrb[0].mxu0
        %v1528 = vadd.f32 0.0, %v1527
        %v1529 = vpop.f32.mrb[0].mxu0
        %v1530 = vpop.f32.mrb[0].mxu0
        %v1531 = vpop.f32.mrb[0].mxu0
        %1532 = vdwg.mxu0
        %v1533 = vpack.c.bf16 %v1528, %v1482
        %v1534 = vld [vmem:[%s804] sm:$0xf]
        %v1535 = vld [vmem:[%s804 + $0x4] sm:$0xf]
        %v1536 = vld [vmem:[%s804 + $0x8] sm:$0xf]
        %v1537 = vld [vmem:[%s804 + $0xc] sm:$0xf]
        %1539 = vrot.lane.b32.xlu0 %v1314, 96
        %v1540 = vpop.permute.xlu0 %1539
        %1542 = vrot.lane.b32.xlu0 %v1316, 96
        %v1543 = vpop.permute.xlu0 %1542
        %v1545 = vsel %vm1318, %v1540, 0
        %v1548 = vsel %vm1318, %v1543, 0
        %1550 = vmatprep.subr.bf16.mxu0 0
        %1551 = vmatpush1.bf16.xpose.msra.mxu0 %v1548
        %1552 = vmatprep.subr.bf16.mxu0 0
        %1553 = vmatpush1.bf16.xpose.msra.mxu0 0
        %1554 = vmatprep.subr.bf16.mxu0 0
        %1555 = vmatpush1.bf16.xpose.msra.mxu0 0
        %1556 = vmatprep.subr.bf16.mxu0 0
        %1557 = vmatpush1.bf16.xpose.msra.mxu0 0
        %1558 = vmatprep.subr.bf16.mxu0 0
        %1559 = vmatpush1.bf16.xpose.msra.mxu0 0
        %1560 = vmatprep.subr.bf16.mxu0 0
        %1561 = vmatpush1.bf16.xpose.msra.mxu0 0
        %1562 = vmatprep.subr.bf16.mxu0 0
        %1563 = vmatpush1.bf16.xpose.msra.mxu0 0
        %1564 = vmatprep.subr.bf16.mxu0 0
        %1565 = vmatpush1.bf16.xpose.msra.mxu0 0
        %1566 = vmatprep.subr.bf16.mxu0 0
        %1567 = vmatpush1.bf16.xpose.msra.mxu0 0
        %1568 = vmatprep.subr.bf16.mxu0 0
        %1569 = vmatpush1.bf16.xpose.msra.mxu0 0
        %1570 = vmatprep.subr.bf16.mxu0 0
        %1571 = vmatpush1.bf16.xpose.msra.mxu0 0
        %1572 = vmatprep.subr.bf16.mxu0 0
        %1573 = vmatpush1.bf16.xpose.msra.mxu0 0
        %1574 = vmatprep.subr.bf16.mxu0 0
        %1575 = vmatpush1.bf16.xpose.msra.mxu0 0
        %1576 = vmatprep.subr.bf16.mxu0 0
        %1577 = vmatpush1.bf16.xpose.msra.mxu0 0
        %1578 = vmatprep.subr.bf16.mxu0 0
        %1579 = vmatpush1.bf16.xpose.msra.mxu0 0
        %1580 = vmatprep.subr.bf16.mxu0 0
        %1581 = vmatpush1.bf16.xpose.msra.mxu0 0
        %1582 = vmatprep.mubr.bf16.mxu0 0
        %1583 = vmatmul.mubr.bf16.gmra.mrb[0].mxu0 %v1545
        %v1584 = vpop.f32.mrb[0].mxu0
        %v1585 = vadd.f32 0.0, %v1584
        %v1586 = vpop.f32.mrb[0].mxu0
        %v1587 = vpop.f32.mrb[0].mxu0
        %v1588 = vpop.f32.mrb[0].mxu0
        %1589 = vdwg.mxu0
        %1591 = vrot.lane.b32.xlu0 %v1315, 96
        %v1592 = vpop.permute.xlu0 %1591
        %1594 = vrot.lane.b32.xlu0 %v1317, 96
        %v1595 = vpop.permute.xlu0 %1594
        %v1597 = vsel %vm1318, %v1592, 0
        %v1600 = vsel %vm1318, %v1595, 0
        %1602 = vmatprep.subr.bf16.mxu0 0
        %1603 = vmatpush1.bf16.xpose.msra.mxu0 %v1600
        %1604 = vmatprep.subr.bf16.mxu0 0
        %1605 = vmatpush1.bf16.xpose.msra.mxu0 0
        %1606 = vmatprep.subr.bf16.mxu0 0
        %1607 = vmatpush1.bf16.xpose.msra.mxu0 0
        %1608 = vmatprep.subr.bf16.mxu0 0
        %1609 = vmatpush1.bf16.xpose.msra.mxu0 0
        %1610 = vmatprep.subr.bf16.mxu0 0
        %1611 = vmatpush1.bf16.xpose.msra.mxu0 0
        %1612 = vmatprep.subr.bf16.mxu0 0
        %1613 = vmatpush1.bf16.xpose.msra.mxu0 0
        %1614 = vmatprep.subr.bf16.mxu0 0
        %1615 = vmatpush1.bf16.xpose.msra.mxu0 0
        %1616 = vmatprep.subr.bf16.mxu0 0
        %1617 = vmatpush1.bf16.xpose.msra.mxu0 0
        %1618 = vmatprep.subr.bf16.mxu0 0
        %1619 = vmatpush1.bf16.xpose.msra.mxu0 0
        %1620 = vmatprep.subr.bf16.mxu0 0
        %1621 = vmatpush1.bf16.xpose.msra.mxu0 0
        %1622 = vmatprep.subr.bf16.mxu0 0
        %1623 = vmatpush1.bf16.xpose.msra.mxu0 0
        %1624 = vmatprep.subr.bf16.mxu0 0
        %1625 = vmatpush1.bf16.xpose.msra.mxu0 0
        %1626 = vmatprep.subr.bf16.mxu0 0
        %1627 = vmatpush1.bf16.xpose.msra.mxu0 0
        %1628 = vmatprep.subr.bf16.mxu0 0
        %1629 = vmatpush1.bf16.xpose.msra.mxu0 0
        %1630 = vmatprep.subr.bf16.mxu0 0
        %1631 = vmatpush1.bf16.xpose.msra.mxu0 0
        %1632 = vmatprep.subr.bf16.mxu0 0
        %1633 = vmatpush1.bf16.xpose.msra.mxu0 0
        %1634 = vmatprep.mubr.bf16.mxu0 0
        %1635 = vmatmul.mubr.bf16.gmra.mrb[0].mxu0 %v1597
        %v1636 = vpop.f32.mrb[0].mxu0
        %v1637 = vadd.f32 0.0, %v1636
        %v1638 = vpop.f32.mrb[0].mxu0
        %v1639 = vpop.f32.mrb[0].mxu0
        %v1640 = vpop.f32.mrb[0].mxu0
        %1641 = vdwg.mxu0
        %v1642 = vmul.f32 %v1585, 0.17677669
        %v1643 = vmul.f32 %v1637, 0.17677669
        %v1644 = vsel %vm1413, %v1642, -inf
        %1645 = vmax.xlane.f32.xlu0 %v1644
        %v1646 = vpop.xlane.xlu0 %1645
        %v1647 = vsel %vm1413, %v1643, -inf
        %1648 = vmax.xlane.f32.xlu0 %v1647
        %v1649 = vpop.xlane.xlu0 %1648
        %v1650 = vsub.f32 %v1642, %v1646
        %v1651 = vsub.f32 %v1643, %v1649
        %v1652 = vmul.f32 %v1650, 1.442695
        %v1653 = vpow.pop %v1652
        %v1654 = vmul.f32 %v1651, 1.442695
        %v1655 = vpow.pop %v1654
        %v1656 = vsel %vm1413, %v1653, 0.0
        %1657 = vadd.xlane.f32.xlu0 %v1656
        %v1658 = vpop.xlane.xlu0 %1657
        %v1659 = vsel %vm1413, %v1655, 0.0
        %1660 = vadd.xlane.f32.xlu0 %v1659
        %v1661 = vpop.xlane.xlu0 %1660
        %v1662 = vrcp.pop %v1658
        %v1663 = vrcp.pop %v1661
        %v1664 = vmul.f32 %v1653, %v1662
        %v1665 = vmul.f32 %v1655, %v1663
        %v1666 = vpack.c.bf16 %v1664, %v1664
        %v1667 = vpack.c.bf16 %v1665, %v1665
        %1669 = vrot.lane.b32.xlu0 %v1438, 96
        %v1670 = vpop.permute.xlu0 %1669
        %v1672 = vsel %vm1413, %v1666, 0
        %v1675 = vsel %vm1443, %v1670, 0
        %1677 = vmatprep.subr.bf16.mxu0 0
        %1678 = vmatpush1.bf16.msra.mxu0 %v1675
        %1679 = vmatprep.subr.bf16.mxu0 0
        %1680 = vmatpush1.bf16.msra.mxu0 0
        %1681 = vmatprep.subr.bf16.mxu0 0
        %1682 = vmatpush1.bf16.msra.mxu0 0
        %1683 = vmatprep.subr.bf16.mxu0 0
        %1684 = vmatpush1.bf16.msra.mxu0 0
        %1685 = vmatprep.subr.bf16.mxu0 0
        %1686 = vmatpush1.bf16.msra.mxu0 0
        %1687 = vmatprep.subr.bf16.mxu0 0
        %1688 = vmatpush1.bf16.msra.mxu0 0
        %1689 = vmatprep.subr.bf16.mxu0 0
        %1690 = vmatpush1.bf16.msra.mxu0 0
        %1691 = vmatprep.subr.bf16.mxu0 0
        %1692 = vmatpush1.bf16.msra.mxu0 0
        %1693 = vmatprep.subr.bf16.mxu0 0
        %1694 = vmatpush1.bf16.msra.mxu0 0
        %1695 = vmatprep.subr.bf16.mxu0 0
        %1696 = vmatpush1.bf16.msra.mxu0 0
        %1697 = vmatprep.subr.bf16.mxu0 0
        %1698 = vmatpush1.bf16.msra.mxu0 0
        %1699 = vmatprep.subr.bf16.mxu0 0
        %1700 = vmatpush1.bf16.msra.mxu0 0
        %1701 = vmatprep.subr.bf16.mxu0 0
        %1702 = vmatpush1.bf16.msra.mxu0 0
        %1703 = vmatprep.subr.bf16.mxu0 0
        %1704 = vmatpush1.bf16.msra.mxu0 0
        %1705 = vmatprep.subr.bf16.mxu0 0
        %1706 = vmatpush1.bf16.msra.mxu0 0
        %1707 = vmatprep.subr.bf16.mxu0 0
        %1708 = vmatpush1.bf16.msra.mxu0 0
        %1709 = vmatprep.mubr.bf16.mxu0 0
        %1710 = vmatmul.mubr.bf16.gmra.mrb[0].mxu0 %v1672
        %v1711 = vpop.f32.mrb[0].mxu0
        %v1712 = vadd.f32 0.0, %v1711
        %v1713 = vpop.f32.mrb[0].mxu0
        %v1714 = vpop.f32.mrb[0].mxu0
        %v1715 = vpop.f32.mrb[0].mxu0
        %1716 = vdwg.mxu0
        %1718 = vrot.lane.b32.xlu0 %v1439, 96
        %v1719 = vpop.permute.xlu0 %1718
        %v1721 = vsel %vm1413, %v1667, 0
        %v1724 = vsel %vm1443, %v1719, 0
        %1726 = vmatprep.subr.bf16.mxu0 0
        %1727 = vmatpush1.bf16.msra.mxu0 %v1724
        %1728 = vmatprep.subr.bf16.mxu0 0
        %1729 = vmatpush1.bf16.msra.mxu0 0
        %1730 = vmatprep.subr.bf16.mxu0 0
        %1731 = vmatpush1.bf16.msra.mxu0 0
        %1732 = vmatprep.subr.bf16.mxu0 0
        %1733 = vmatpush1.bf16.msra.mxu0 0
        %1734 = vmatprep.subr.bf16.mxu0 0
        %1735 = vmatpush1.bf16.msra.mxu0 0
        %1736 = vmatprep.subr.bf16.mxu0 0
        %1737 = vmatpush1.bf16.msra.mxu0 0
        %1738 = vmatprep.subr.bf16.mxu0 0
        %1739 = vmatpush1.bf16.msra.mxu0 0
        %1740 = vmatprep.subr.bf16.mxu0 0
        %1741 = vmatpush1.bf16.msra.mxu0 0
        %1742 = vmatprep.subr.bf16.mxu0 0
        %1743 = vmatpush1.bf16.msra.mxu0 0
        %1744 = vmatprep.subr.bf16.mxu0 0
        %1745 = vmatpush1.bf16.msra.mxu0 0
        %1746 = vmatprep.subr.bf16.mxu0 0
        %1747 = vmatpush1.bf16.msra.mxu0 0
        %1748 = vmatprep.subr.bf16.mxu0 0
        %1749 = vmatpush1.bf16.msra.mxu0 0
        %1750 = vmatprep.subr.bf16.mxu0 0
        %1751 = vmatpush1.bf16.msra.mxu0 0
        %1752 = vmatprep.subr.bf16.mxu0 0
        %1753 = vmatpush1.bf16.msra.mxu0 0
        %1754 = vmatprep.subr.bf16.mxu0 0
        %1755 = vmatpush1.bf16.msra.mxu0 0
        %1756 = vmatprep.subr.bf16.mxu0 0
        %1757 = vmatpush1.bf16.msra.mxu0 0
        %1758 = vmatprep.mubr.bf16.mxu0 0
        %1759 = vmatmul.mubr.bf16.gmra.mrb[0].mxu0 %v1721
        %v1760 = vpop.f32.mrb[0].mxu0
        %v1761 = vadd.f32 0.0, %v1760
        %v1762 = vpop.f32.mrb[0].mxu0
        %v1763 = vpop.f32.mrb[0].mxu0
        %v1764 = vpop.f32.mrb[0].mxu0
        %1765 = vdwg.mxu0
        %v1766 = vpack.c.bf16 %v1761, %v1712
        %v1767 = vld [vmem:[%s804 + $0x10] sm:$0xf]
        %v1768 = vld [vmem:[%s804 + $0x14] sm:$0xf]
        %v1769 = vld [vmem:[%s804 + $0x18] sm:$0xf]
        %v1770 = vld [vmem:[%s804 + $0x1c] sm:$0xf]
        %v1775 = vunpack.c.l.b16 %v1767
        %v1776 = vunpack.c.l.b16 %v1768
        %v1777 = vunpack.c.l.b16 %v1769
        %v1778 = vunpack.c.l.b16 %v1770
        %v1779 = vpack.c.b16 %v1776, %v1775
        %v1780 = vpack.c.b16 %v1778, %v1777
        %v1784 = vsel %vm1318, %v1766, 0
        %1786 = vmatprep.subr.bf16.mxu0 0
        %1787 = vmatpush1.bf16.msra.mxu0 %v1779
        %1788 = vmatprep.subr.bf16.mxu0 0
        %1789 = vmatpush1.bf16.msra.mxu0 %v1780
        %1790 = vmatprep.subr.bf16.mxu0 0
        %1791 = vmatpush1.bf16.msra.mxu0 0
        %1792 = vmatprep.subr.bf16.mxu0 0
        %1793 = vmatpush1.bf16.msra.mxu0 0
        %1794 = vmatprep.subr.bf16.mxu0 0
        %1795 = vmatpush1.bf16.msra.mxu0 0
        %1796 = vmatprep.subr.bf16.mxu0 0
        %1797 = vmatpush1.bf16.msra.mxu0 0
        %1798 = vmatprep.subr.bf16.mxu0 0
        %1799 = vmatpush1.bf16.msra.mxu0 0
        %1800 = vmatprep.subr.bf16.mxu0 0
        %1801 = vmatpush1.bf16.msra.mxu0 0
        %1802 = vmatprep.subr.bf16.mxu0 0
        %1803 = vmatpush1.bf16.msra.mxu0 0
        %1804 = vmatprep.subr.bf16.mxu0 0
        %1805 = vmatpush1.bf16.msra.mxu0 0
        %1806 = vmatprep.subr.bf16.mxu0 0
        %1807 = vmatpush1.bf16.msra.mxu0 0
        %1808 = vmatprep.subr.bf16.mxu0 0
        %1809 = vmatpush1.bf16.msra.mxu0 0
        %1810 = vmatprep.subr.bf16.mxu0 0
        %1811 = vmatpush1.bf16.msra.mxu0 0
        %1812 = vmatprep.subr.bf16.mxu0 0
        %1813 = vmatpush1.bf16.msra.mxu0 0
        %1814 = vmatprep.subr.bf16.mxu0 0
        %1815 = vmatpush1.bf16.msra.mxu0 0
        %1816 = vmatprep.subr.bf16.mxu0 0
        %1817 = vmatpush1.bf16.msra.mxu0 0
        %1818 = vmatprep.mubr.bf16.mxu0 0
        %1819 = vmatmul.mubr.bf16.gmra.mrb[0].mxu0 %v1784
        %v1820 = vpop.f32.mrb[0].mxu0
        %v1821 = vadd.f32 0.0, %v1820
        %v1822 = vpop.f32.mrb[0].mxu0
        %v1823 = vpop.f32.mrb[0].mxu0
        %v1824 = vadd.f32 0.0, %v1823
        %v1825 = vpop.f32.mrb[0].mxu0
        %1826 = vdwg.mxu0
        %v1831 = vunpack.c.l.b16 %v1534
        %v1832 = vunpack.c.l.b16 %v1535
        %v1833 = vunpack.c.l.b16 %v1536
        %v1834 = vunpack.c.l.b16 %v1537
        %v1835 = vpack.c.b16 %v1832, %v1831
        %v1836 = vpack.c.b16 %v1834, %v1833
        %v1840 = vsel %vm1318, %v1533, 0
        %1842 = vmatprep.subr.bf16.mxu0 0
        %1843 = vmatpush1.bf16.msra.mxu0 %v1835
        %1844 = vmatprep.subr.bf16.mxu0 0
        %1845 = vmatpush1.bf16.msra.mxu0 %v1836
        %1846 = vmatprep.subr.bf16.mxu0 0
        %1847 = vmatpush1.bf16.msra.mxu0 0
        %1848 = vmatprep.subr.bf16.mxu0 0
        %1849 = vmatpush1.bf16.msra.mxu0 0
        %1850 = vmatprep.subr.bf16.mxu0 0
        %1851 = vmatpush1.bf16.msra.mxu0 0
        %1852 = vmatprep.subr.bf16.mxu0 0
        %1853 = vmatpush1.bf16.msra.mxu0 0
        %1854 = vmatprep.subr.bf16.mxu0 0
        %1855 = vmatpush1.bf16.msra.mxu0 0
        %1856 = vmatprep.subr.bf16.mxu0 0
        %1857 = vmatpush1.bf16.msra.mxu0 0
        %1858 = vmatprep.subr.bf16.mxu0 0
        %1859 = vmatpush1.bf16.msra.mxu0 0
        %1860 = vmatprep.subr.bf16.mxu0 0
        %1861 = vmatpush1.bf16.msra.mxu0 0
        %1862 = vmatprep.subr.bf16.mxu0 0
        %1863 = vmatpush1.bf16.msra.mxu0 0
        %1864 = vmatprep.subr.bf16.mxu0 0
        %1865 = vmatpush1.bf16.msra.mxu0 0
        %1866 = vmatprep.subr.bf16.mxu0 0
        %1867 = vmatpush1.bf16.msra.mxu0 0
        %1868 = vmatprep.subr.bf16.mxu0 0
        %1869 = vmatpush1.bf16.msra.mxu0 0
        %1870 = vmatprep.subr.bf16.mxu0 0
        %1871 = vmatpush1.bf16.msra.mxu0 0
        %1872 = vmatprep.subr.bf16.mxu0 0
        %1873 = vmatpush1.bf16.msra.mxu0 0
        %1874 = vmatprep.mubr.bf16.mxu0 0
        %1875 = vmatmul.mubr.bf16.gmra.mrb[0].mxu0 %v1840
        %v1876 = vpop.f32.mrb[0].mxu0
        %v1877 = vadd.f32 %v1821, %v1876
        %v1878 = vpop.f32.mrb[0].mxu0
        %v1879 = vpop.f32.mrb[0].mxu0
        %v1880 = vadd.f32 %v1824, %v1879
        %v1881 = vpop.f32.mrb[0].mxu0
        %1882 = vdwg.mxu0
        %1883 = vrot.lane.b32.xlu0 %v1314, 64
        %v1884 = vpop.permute.xlu0 %1883
        %1885 = vrot.lane.b32.xlu0 %v1316, 64
        %v1886 = vpop.permute.xlu0 %1885
        %v1888 = vsel %vm1318, %v1884, 0
        %v1891 = vsel %vm1318, %v1886, 0
        %1893 = vmatprep.subr.bf16.mxu0 0
        %1894 = vmatpush1.bf16.xpose.msra.mxu0 %v1891
        %1895 = vmatprep.subr.bf16.mxu0 0
        %1896 = vmatpush1.bf16.xpose.msra.mxu0 0
        %1897 = vmatprep.subr.bf16.mxu0 0
        %1898 = vmatpush1.bf16.xpose.msra.mxu0 0
        %1899 = vmatprep.subr.bf16.mxu0 0
        %1900 = vmatpush1.bf16.xpose.msra.mxu0 0
        %1901 = vmatprep.subr.bf16.mxu0 0
        %1902 = vmatpush1.bf16.xpose.msra.mxu0 0
        %1903 = vmatprep.subr.bf16.mxu0 0
        %1904 = vmatpush1.bf16.xpose.msra.mxu0 0
        %1905 = vmatprep.subr.bf16.mxu0 0
        %1906 = vmatpush1.bf16.xpose.msra.mxu0 0
        %1907 = vmatprep.subr.bf16.mxu0 0
        %1908 = vmatpush1.bf16.xpose.msra.mxu0 0
        %1909 = vmatprep.subr.bf16.mxu0 0
        %1910 = vmatpush1.bf16.xpose.msra.mxu0 0
        %1911 = vmatprep.subr.bf16.mxu0 0
        %1912 = vmatpush1.bf16.xpose.msra.mxu0 0
        %1913 = vmatprep.subr.bf16.mxu0 0
        %1914 = vmatpush1.bf16.xpose.msra.mxu0 0
        %1915 = vmatprep.subr.bf16.mxu0 0
        %1916 = vmatpush1.bf16.xpose.msra.mxu0 0
        %1917 = vmatprep.subr.bf16.mxu0 0
        %1918 = vmatpush1.bf16.xpose.msra.mxu0 0
        %1919 = vmatprep.subr.bf16.mxu0 0
        %1920 = vmatpush1.bf16.xpose.msra.mxu0 0
        %1921 = vmatprep.subr.bf16.mxu0 0
        %1922 = vmatpush1.bf16.xpose.msra.mxu0 0
        %1923 = vmatprep.subr.bf16.mxu0 0
        %1924 = vmatpush1.bf16.xpose.msra.mxu0 0
        %1925 = vmatprep.mubr.bf16.mxu0 0
        %1926 = vmatmul.mubr.bf16.gmra.mrb[0].mxu0 %v1888
        %v1927 = vpop.f32.mrb[0].mxu0
        %v1928 = vadd.f32 0.0, %v1927
        %v1929 = vpop.f32.mrb[0].mxu0
        %v1930 = vpop.f32.mrb[0].mxu0
        %v1931 = vpop.f32.mrb[0].mxu0
        %1932 = vdwg.mxu0
        %1933 = vrot.lane.b32.xlu0 %v1315, 64
        %v1934 = vpop.permute.xlu0 %1933
        %1935 = vrot.lane.b32.xlu0 %v1317, 64
        %v1936 = vpop.permute.xlu0 %1935
        %v1938 = vsel %vm1318, %v1934, 0
        %v1941 = vsel %vm1318, %v1936, 0
        %1943 = vmatprep.subr.bf16.mxu0 0
        %1944 = vmatpush1.bf16.xpose.msra.mxu0 %v1941
        %1945 = vmatprep.subr.bf16.mxu0 0
        %1946 = vmatpush1.bf16.xpose.msra.mxu0 0
        %1947 = vmatprep.subr.bf16.mxu0 0
        %1948 = vmatpush1.bf16.xpose.msra.mxu0 0
        %1949 = vmatprep.subr.bf16.mxu0 0
        %1950 = vmatpush1.bf16.xpose.msra.mxu0 0
        %1951 = vmatprep.subr.bf16.mxu0 0
        %1952 = vmatpush1.bf16.xpose.msra.mxu0 0
        %1953 = vmatprep.subr.bf16.mxu0 0
        %1954 = vmatpush1.bf16.xpose.msra.mxu0 0
        %1955 = vmatprep.subr.bf16.mxu0 0
        %1956 = vmatpush1.bf16.xpose.msra.mxu0 0
        %1957 = vmatprep.subr.bf16.mxu0 0
        %1958 = vmatpush1.bf16.xpose.msra.mxu0 0
        %1959 = vmatprep.subr.bf16.mxu0 0
        %1960 = vmatpush1.bf16.xpose.msra.mxu0 0
        %1961 = vmatprep.subr.bf16.mxu0 0
        %1962 = vmatpush1.bf16.xpose.msra.mxu0 0
        %1963 = vmatprep.subr.bf16.mxu0 0
        %1964 = vmatpush1.bf16.xpose.msra.mxu0 0
        %1965 = vmatprep.subr.bf16.mxu0 0
        %1966 = vmatpush1.bf16.xpose.msra.mxu0 0
        %1967 = vmatprep.subr.bf16.mxu0 0
        %1968 = vmatpush1.bf16.xpose.msra.mxu0 0
        %1969 = vmatprep.subr.bf16.mxu0 0
        %1970 = vmatpush1.bf16.xpose.msra.mxu0 0
        %1971 = vmatprep.subr.bf16.mxu0 0
        %1972 = vmatpush1.bf16.xpose.msra.mxu0 0
        %1973 = vmatprep.subr.bf16.mxu0 0
        %1974 = vmatpush1.bf16.xpose.msra.mxu0 0
        %1975 = vmatprep.mubr.bf16.mxu0 0
        %1976 = vmatmul.mubr.bf16.gmra.mrb[0].mxu0 %v1938
        %v1977 = vpop.f32.mrb[0].mxu0
        %v1978 = vadd.f32 0.0, %v1977
        %v1979 = vpop.f32.mrb[0].mxu0
        %v1980 = vpop.f32.mrb[0].mxu0
        %v1981 = vpop.f32.mrb[0].mxu0
        %1982 = vdwg.mxu0
        %v1983 = vmul.f32 %v1928, 0.17677669
        %v1984 = vmul.f32 %v1978, 0.17677669
        %v1985 = vsel %vm1413, %v1983, -inf
        %1986 = vmax.xlane.f32.xlu0 %v1985
        %v1987 = vpop.xlane.xlu0 %1986
        %v1988 = vsel %vm1413, %v1984, -inf
        %1989 = vmax.xlane.f32.xlu0 %v1988
        %v1990 = vpop.xlane.xlu0 %1989
        %v1991 = vsub.f32 %v1983, %v1987
        %v1992 = vsub.f32 %v1984, %v1990
        %v1993 = vmul.f32 %v1991, 1.442695
        %v1994 = vpow.pop %v1993
        %v1995 = vmul.f32 %v1992, 1.442695
        %v1996 = vpow.pop %v1995
        %v1997 = vsel %vm1413, %v1994, 0.0
        %1998 = vadd.xlane.f32.xlu0 %v1997
        %v1999 = vpop.xlane.xlu0 %1998
        %v2000 = vsel %vm1413, %v1996, 0.0
        %2001 = vadd.xlane.f32.xlu0 %v2000
        %v2002 = vpop.xlane.xlu0 %2001
        %v2003 = vrcp.pop %v1999
        %v2004 = vrcp.pop %v2002
        %v2005 = vmul.f32 %v1994, %v2003
        %v2006 = vmul.f32 %v1996, %v2004
        %v2007 = vpack.c.bf16 %v2005, %v2005
        %v2008 = vpack.c.bf16 %v2006, %v2006
        %2009 = vrot.lane.b32.xlu0 %v1438, 64
        %v2010 = vpop.permute.xlu0 %2009
        %v2012 = vsel %vm1413, %v2007, 0
        %v2015 = vsel %vm1443, %v2010, 0
        %2017 = vmatprep.subr.bf16.mxu0 0
        %2018 = vmatpush1.bf16.msra.mxu0 %v2015
        %2019 = vmatprep.subr.bf16.mxu0 0
        %2020 = vmatpush1.bf16.msra.mxu0 0
        %2021 = vmatprep.subr.bf16.mxu0 0
        %2022 = vmatpush1.bf16.msra.mxu0 0
        %2023 = vmatprep.subr.bf16.mxu0 0
        %2024 = vmatpush1.bf16.msra.mxu0 0
        %2025 = vmatprep.subr.bf16.mxu0 0
        %2026 = vmatpush1.bf16.msra.mxu0 0
        %2027 = vmatprep.subr.bf16.mxu0 0
        %2028 = vmatpush1.bf16.msra.mxu0 0
        %2029 = vmatprep.subr.bf16.mxu0 0
        %2030 = vmatpush1.bf16.msra.mxu0 0
        %2031 = vmatprep.subr.bf16.mxu0 0
        %2032 = vmatpush1.bf16.msra.mxu0 0
        %2033 = vmatprep.subr.bf16.mxu0 0
        %2034 = vmatpush1.bf16.msra.mxu0 0
        %2035 = vmatprep.subr.bf16.mxu0 0
        %2036 = vmatpush1.bf16.msra.mxu0 0
        %2037 = vmatprep.subr.bf16.mxu0 0
        %2038 = vmatpush1.bf16.msra.mxu0 0
        %2039 = vmatprep.subr.bf16.mxu0 0
        %2040 = vmatpush1.bf16.msra.mxu0 0
        %2041 = vmatprep.subr.bf16.mxu0 0
        %2042 = vmatpush1.bf16.msra.mxu0 0
        %2043 = vmatprep.subr.bf16.mxu0 0
        %2044 = vmatpush1.bf16.msra.mxu0 0
        %2045 = vmatprep.subr.bf16.mxu0 0
        %2046 = vmatpush1.bf16.msra.mxu0 0
        %2047 = vmatprep.subr.bf16.mxu0 0
        %2048 = vmatpush1.bf16.msra.mxu0 0
        %2049 = vmatprep.mubr.bf16.mxu0 0
        %2050 = vmatmul.mubr.bf16.gmra.mrb[0].mxu0 %v2012
        %v2051 = vpop.f32.mrb[0].mxu0
        %v2052 = vadd.f32 0.0, %v2051
        %v2053 = vpop.f32.mrb[0].mxu0
        %v2054 = vpop.f32.mrb[0].mxu0
        %v2055 = vpop.f32.mrb[0].mxu0
        %2056 = vdwg.mxu0
        %2057 = vrot.lane.b32.xlu0 %v1439, 64
        %v2058 = vpop.permute.xlu0 %2057
        %v2060 = vsel %vm1413, %v2008, 0
        %v2063 = vsel %vm1443, %v2058, 0
        %2065 = vmatprep.subr.bf16.mxu0 0
        %2066 = vmatpush1.bf16.msra.mxu0 %v2063
        %2067 = vmatprep.subr.bf16.mxu0 0
        %2068 = vmatpush1.bf16.msra.mxu0 0
        %2069 = vmatprep.subr.bf16.mxu0 0
        %2070 = vmatpush1.bf16.msra.mxu0 0
        %2071 = vmatprep.subr.bf16.mxu0 0
        %2072 = vmatpush1.bf16.msra.mxu0 0
        %2073 = vmatprep.subr.bf16.mxu0 0
        %2074 = vmatpush1.bf16.msra.mxu0 0
        %2075 = vmatprep.subr.bf16.mxu0 0
        %2076 = vmatpush1.bf16.msra.mxu0 0
        %2077 = vmatprep.subr.bf16.mxu0 0
        %2078 = vmatpush1.bf16.msra.mxu0 0
        %2079 = vmatprep.subr.bf16.mxu0 0
        %2080 = vmatpush1.bf16.msra.mxu0 0
        %2081 = vmatprep.subr.bf16.mxu0 0
        %2082 = vmatpush1.bf16.msra.mxu0 0
        %2083 = vmatprep.subr.bf16.mxu0 0
        %2084 = vmatpush1.bf16.msra.mxu0 0
        %2085 = vmatprep.subr.bf16.mxu0 0
        %2086 = vmatpush1.bf16.msra.mxu0 0
        %2087 = vmatprep.subr.bf16.mxu0 0
        %2088 = vmatpush1.bf16.msra.mxu0 0
        %2089 = vmatprep.subr.bf16.mxu0 0
        %2090 = vmatpush1.bf16.msra.mxu0 0
        %2091 = vmatprep.subr.bf16.mxu0 0
        %2092 = vmatpush1.bf16.msra.mxu0 0
        %2093 = vmatprep.subr.bf16.mxu0 0
        %2094 = vmatpush1.bf16.msra.mxu0 0
        %2095 = vmatprep.subr.bf16.mxu0 0
        %2096 = vmatpush1.bf16.msra.mxu0 0
        %2097 = vmatprep.mubr.bf16.mxu0 0
        %2098 = vmatmul.mubr.bf16.gmra.mrb[0].mxu0 %v2060
        %v2099 = vpop.f32.mrb[0].mxu0
        %v2100 = vadd.f32 0.0, %v2099
        %v2101 = vpop.f32.mrb[0].mxu0
        %v2102 = vpop.f32.mrb[0].mxu0
        %v2103 = vpop.f32.mrb[0].mxu0
        %2104 = vdwg.mxu0
        %v2105 = vpack.c.bf16 %v2100, %v2052
        %v2106 = vld [vmem:[%s804 + $0x20] sm:$0xf]
        %v2107 = vld [vmem:[%s804 + $0x24] sm:$0xf]
        %v2108 = vld [vmem:[%s804 + $0x28] sm:$0xf]
        %v2109 = vld [vmem:[%s804 + $0x2c] sm:$0xf]
        %v2114 = vunpack.c.l.b16 %v2106
        %v2115 = vunpack.c.l.b16 %v2107
        %v2116 = vunpack.c.l.b16 %v2108
        %v2117 = vunpack.c.l.b16 %v2109
        %v2118 = vpack.c.b16 %v2115, %v2114
        %v2119 = vpack.c.b16 %v2117, %v2116
        %v2123 = vsel %vm1318, %v2105, 0
        %2125 = vmatprep.subr.bf16.mxu0 0
        %2126 = vmatpush1.bf16.msra.mxu0 %v2118
        %2127 = vmatprep.subr.bf16.mxu0 0
        %2128 = vmatpush1.bf16.msra.mxu0 %v2119
        %2129 = vmatprep.subr.bf16.mxu0 0
        %2130 = vmatpush1.bf16.msra.mxu0 0
        %2131 = vmatprep.subr.bf16.mxu0 0
        %2132 = vmatpush1.bf16.msra.mxu0 0
        %2133 = vmatprep.subr.bf16.mxu0 0
        %2134 = vmatpush1.bf16.msra.mxu0 0
        %2135 = vmatprep.subr.bf16.mxu0 0
        %2136 = vmatpush1.bf16.msra.mxu0 0
        %2137 = vmatprep.subr.bf16.mxu0 0
        %2138 = vmatpush1.bf16.msra.mxu0 0
        %2139 = vmatprep.subr.bf16.mxu0 0
        %2140 = vmatpush1.bf16.msra.mxu0 0
        %2141 = vmatprep.subr.bf16.mxu0 0
        %2142 = vmatpush1.bf16.msra.mxu0 0
        %2143 = vmatprep.subr.bf16.mxu0 0
        %2144 = vmatpush1.bf16.msra.mxu0 0
        %2145 = vmatprep.subr.bf16.mxu0 0
        %2146 = vmatpush1.bf16.msra.mxu0 0
        %2147 = vmatprep.subr.bf16.mxu0 0
        %2148 = vmatpush1.bf16.msra.mxu0 0
        %2149 = vmatprep.subr.bf16.mxu0 0
        %2150 = vmatpush1.bf16.msra.mxu0 0
        %2151 = vmatprep.subr.bf16.mxu0 0
        %2152 = vmatpush1.bf16.msra.mxu0 0
        %2153 = vmatprep.subr.bf16.mxu0 0
        %2154 = vmatpush1.bf16.msra.mxu0 0
        %2155 = vmatprep.subr.bf16.mxu0 0
        %2156 = vmatpush1.bf16.msra.mxu0 0
        %2157 = vmatprep.mubr.bf16.mxu0 0
        %2158 = vmatmul.mubr.bf16.gmra.mrb[0].mxu0 %v2123
        %v2159 = vpop.f32.mrb[0].mxu0
        %v2160 = vadd.f32 0.0, %v2159
        %v2161 = vpop.f32.mrb[0].mxu0
        %v2162 = vpop.f32.mrb[0].mxu0
        %v2163 = vadd.f32 0.0, %v2162
        %v2164 = vpop.f32.mrb[0].mxu0
        %2165 = vdwg.mxu0
        %v2166 = vadd.f32 %v1877, %v2160
        %v2167 = vadd.f32 %v1880, %v2163
        %2168 = vrot.lane.b32.xlu0 %v1314, 32
        %v2169 = vpop.permute.xlu0 %2168
        %2170 = vrot.lane.b32.xlu0 %v1316, 32
        %v2171 = vpop.permute.xlu0 %2170
        %v2173 = vsel %vm1318, %v2169, 0
        %v2176 = vsel %vm1318, %v2171, 0
        %2178 = vmatprep.subr.bf16.mxu0 0
        %2179 = vmatpush1.bf16.xpose.msra.mxu0 %v2176
        %2180 = vmatprep.subr.bf16.mxu0 0
        %2181 = vmatpush1.bf16.xpose.msra.mxu0 0
        %2182 = vmatprep.subr.bf16.mxu0 0
        %2183 = vmatpush1.bf16.xpose.msra.mxu0 0
        %2184 = vmatprep.subr.bf16.mxu0 0
        %2185 = vmatpush1.bf16.xpose.msra.mxu0 0
        %2186 = vmatprep.subr.bf16.mxu0 0
        %2187 = vmatpush1.bf16.xpose.msra.mxu0 0
        %2188 = vmatprep.subr.bf16.mxu0 0
        %2189 = vmatpush1.bf16.xpose.msra.mxu0 0
        %2190 = vmatprep.subr.bf16.mxu0 0
        %2191 = vmatpush1.bf16.xpose.msra.mxu0 0
        %2192 = vmatprep.subr.bf16.mxu0 0
        %2193 = vmatpush1.bf16.xpose.msra.mxu0 0
        %2194 = vmatprep.subr.bf16.mxu0 0
        %2195 = vmatpush1.bf16.xpose.msra.mxu0 0
        %2196 = vmatprep.subr.bf16.mxu0 0
        %2197 = vmatpush1.bf16.xpose.msra.mxu0 0
        %2198 = vmatprep.subr.bf16.mxu0 0
        %2199 = vmatpush1.bf16.xpose.msra.mxu0 0
        %2200 = vmatprep.subr.bf16.mxu0 0
        %2201 = vmatpush1.bf16.xpose.msra.mxu0 0
        %2202 = vmatprep.subr.bf16.mxu0 0
        %2203 = vmatpush1.bf16.xpose.msra.mxu0 0
        %2204 = vmatprep.subr.bf16.mxu0 0
        %2205 = vmatpush1.bf16.xpose.msra.mxu0 0
        %2206 = vmatprep.subr.bf16.mxu0 0
        %2207 = vmatpush1.bf16.xpose.msra.mxu0 0
        %2208 = vmatprep.subr.bf16.mxu0 0
        %2209 = vmatpush1.bf16.xpose.msra.mxu0 0
        %2210 = vmatprep.mubr.bf16.mxu0 0
        %2211 = vmatmul.mubr.bf16.gmra.mrb[0].mxu0 %v2173
        %v2212 = vpop.f32.mrb[0].mxu0
        %v2213 = vadd.f32 0.0, %v2212
        %v2214 = vpop.f32.mrb[0].mxu0
        %v2215 = vpop.f32.mrb[0].mxu0
        %v2216 = vpop.f32.mrb[0].mxu0
        %2217 = vdwg.mxu0
        %2218 = vrot.lane.b32.xlu0 %v1315, 32
        %v2219 = vpop.permute.xlu0 %2218
        %2220 = vrot.lane.b32.xlu0 %v1317, 32
        %v2221 = vpop.permute.xlu0 %2220
        %v2223 = vsel %vm1318, %v2219, 0
        %v2226 = vsel %vm1318, %v2221, 0
        %2228 = vmatprep.subr.bf16.mxu0 0
        %2229 = vmatpush1.bf16.xpose.msra.mxu0 %v2226
        %2230 = vmatprep.subr.bf16.mxu0 0
        %2231 = vmatpush1.bf16.xpose.msra.mxu0 0
        %2232 = vmatprep.subr.bf16.mxu0 0
        %2233 = vmatpush1.bf16.xpose.msra.mxu0 0
        %2234 = vmatprep.subr.bf16.mxu0 0
        %2235 = vmatpush1.bf16.xpose.msra.mxu0 0
        %2236 = vmatprep.subr.bf16.mxu0 0
        %2237 = vmatpush1.bf16.xpose.msra.mxu0 0
        %2238 = vmatprep.subr.bf16.mxu0 0
        %2239 = vmatpush1.bf16.xpose.msra.mxu0 0
        %2240 = vmatprep.subr.bf16.mxu0 0
        %2241 = vmatpush1.bf16.xpose.msra.mxu0 0
        %2242 = vmatprep.subr.bf16.mxu0 0
        %2243 = vmatpush1.bf16.xpose.msra.mxu0 0
        %2244 = vmatprep.subr.bf16.mxu0 0
        %2245 = vmatpush1.bf16.xpose.msra.mxu0 0
        %2246 = vmatprep.subr.bf16.mxu0 0
        %2247 = vmatpush1.bf16.xpose.msra.mxu0 0
        %2248 = vmatprep.subr.bf16.mxu0 0
        %2249 = vmatpush1.bf16.xpose.msra.mxu0 0
        %2250 = vmatprep.subr.bf16.mxu0 0
        %2251 = vmatpush1.bf16.xpose.msra.mxu0 0
        %2252 = vmatprep.subr.bf16.mxu0 0
        %2253 = vmatpush1.bf16.xpose.msra.mxu0 0
        %2254 = vmatprep.subr.bf16.mxu0 0
        %2255 = vmatpush1.bf16.xpose.msra.mxu0 0
        %2256 = vmatprep.subr.bf16.mxu0 0
        %2257 = vmatpush1.bf16.xpose.msra.mxu0 0
        %2258 = vmatprep.subr.bf16.mxu0 0
        %2259 = vmatpush1.bf16.xpose.msra.mxu0 0
        %2260 = vmatprep.mubr.bf16.mxu0 0
        %2261 = vmatmul.mubr.bf16.gmra.mrb[0].mxu0 %v2223
        %v2262 = vpop.f32.mrb[0].mxu0
        %v2263 = vadd.f32 0.0, %v2262
        %v2264 = vpop.f32.mrb[0].mxu0
        %v2265 = vpop.f32.mrb[0].mxu0
        %v2266 = vpop.f32.mrb[0].mxu0
        %2267 = vdwg.mxu0
        %v2268 = vmul.f32 %v2213, 0.17677669
        %v2269 = vmul.f32 %v2263, 0.17677669
        %v2270 = vsel %vm1413, %v2268, -inf
        %2271 = vmax.xlane.f32.xlu0 %v2270
        %v2272 = vpop.xlane.xlu0 %2271
        %v2273 = vsel %vm1413, %v2269, -inf
        %2274 = vmax.xlane.f32.xlu0 %v2273
        %v2275 = vpop.xlane.xlu0 %2274
        %v2276 = vsub.f32 %v2268, %v2272
        %v2277 = vsub.f32 %v2269, %v2275
        %v2278 = vmul.f32 %v2276, 1.442695
        %v2279 = vpow.pop %v2278
        %v2280 = vmul.f32 %v2277, 1.442695
        %v2281 = vpow.pop %v2280
        %v2282 = vsel %vm1413, %v2279, 0.0
        %2283 = vadd.xlane.f32.xlu0 %v2282
        %v2284 = vpop.xlane.xlu0 %2283
        %v2285 = vsel %vm1413, %v2281, 0.0
        %2286 = vadd.xlane.f32.xlu0 %v2285
        %v2287 = vpop.xlane.xlu0 %2286
        %v2288 = vrcp.pop %v2284
        %v2289 = vrcp.pop %v2287
        %v2290 = vmul.f32 %v2279, %v2288
        %v2291 = vmul.f32 %v2281, %v2289
        %v2292 = vpack.c.bf16 %v2290, %v2290
        %v2293 = vpack.c.bf16 %v2291, %v2291
        %2294 = vrot.lane.b32.xlu0 %v1438, 32
        %v2295 = vpop.permute.xlu0 %2294
        %v2297 = vsel %vm1413, %v2292, 0
        %v2300 = vsel %vm1443, %v2295, 0
        %2302 = vmatprep.subr.bf16.mxu0 0
        %2303 = vmatpush1.bf16.msra.mxu0 %v2300
        %2304 = vmatprep.subr.bf16.mxu0 0
        %2305 = vmatpush1.bf16.msra.mxu0 0
        %2306 = vmatprep.subr.bf16.mxu0 0
        %2307 = vmatpush1.bf16.msra.mxu0 0
        %2308 = vmatprep.subr.bf16.mxu0 0
        %2309 = vmatpush1.bf16.msra.mxu0 0
        %2310 = vmatprep.subr.bf16.mxu0 0
        %2311 = vmatpush1.bf16.msra.mxu0 0
        %2312 = vmatprep.subr.bf16.mxu0 0
        %2313 = vmatpush1.bf16.msra.mxu0 0
        %2314 = vmatprep.subr.bf16.mxu0 0
        %2315 = vmatpush1.bf16.msra.mxu0 0
        %2316 = vmatprep.subr.bf16.mxu0 0
        %2317 = vmatpush1.bf16.msra.mxu0 0
        %2318 = vmatprep.subr.bf16.mxu0 0
        %2319 = vmatpush1.bf16.msra.mxu0 0
        %2320 = vmatprep.subr.bf16.mxu0 0
        %2321 = vmatpush1.bf16.msra.mxu0 0
        %2322 = vmatprep.subr.bf16.mxu0 0
        %2323 = vmatpush1.bf16.msra.mxu0 0
        %2324 = vmatprep.subr.bf16.mxu0 0
        %2325 = vmatpush1.bf16.msra.mxu0 0
        %2326 = vmatprep.subr.bf16.mxu0 0
        %2327 = vmatpush1.bf16.msra.mxu0 0
        %2328 = vmatprep.subr.bf16.mxu0 0
        %2329 = vmatpush1.bf16.msra.mxu0 0
        %2330 = vmatprep.subr.bf16.mxu0 0
        %2331 = vmatpush1.bf16.msra.mxu0 0
        %2332 = vmatprep.subr.bf16.mxu0 0
        %2333 = vmatpush1.bf16.msra.mxu0 0
        %2334 = vmatprep.mubr.bf16.mxu0 0
        %2335 = vmatmul.mubr.bf16.gmra.mrb[0].mxu0 %v2297
        %v2336 = vpop.f32.mrb[0].mxu0
        %v2337 = vadd.f32 0.0, %v2336
        %v2338 = vpop.f32.mrb[0].mxu0
        %v2339 = vpop.f32.mrb[0].mxu0
        %v2340 = vpop.f32.mrb[0].mxu0
        %2341 = vdwg.mxu0
        %2342 = vrot.lane.b32.xlu0 %v1439, 32
        %v2343 = vpop.permute.xlu0 %2342
        %v2345 = vsel %vm1413, %v2293, 0
        %v2348 = vsel %vm1443, %v2343, 0
        %2350 = vmatprep.subr.bf16.mxu0 0
        %2351 = vmatpush1.bf16.msra.mxu0 %v2348
        %2352 = vmatprep.subr.bf16.mxu0 0
        %2353 = vmatpush1.bf16.msra.mxu0 0
        %2354 = vmatprep.subr.bf16.mxu0 0
        %2355 = vmatpush1.bf16.msra.mxu0 0
        %2356 = vmatprep.subr.bf16.mxu0 0
        %2357 = vmatpush1.bf16.msra.mxu0 0
        %2358 = vmatprep.subr.bf16.mxu0 0
        %2359 = vmatpush1.bf16.msra.mxu0 0
        %2360 = vmatprep.subr.bf16.mxu0 0
        %2361 = vmatpush1.bf16.msra.mxu0 0
        %2362 = vmatprep.subr.bf16.mxu0 0
        %2363 = vmatpush1.bf16.msra.mxu0 0
        %2364 = vmatprep.subr.bf16.mxu0 0
        %2365 = vmatpush1.bf16.msra.mxu0 0
        %2366 = vmatprep.subr.bf16.mxu0 0
        %2367 = vmatpush1.bf16.msra.mxu0 0
        %2368 = vmatprep.subr.bf16.mxu0 0
        %2369 = vmatpush1.bf16.msra.mxu0 0
        %2370 = vmatprep.subr.bf16.mxu0 0
        %2371 = vmatpush1.bf16.msra.mxu0 0
        %2372 = vmatprep.subr.bf16.mxu0 0
        %2373 = vmatpush1.bf16.msra.mxu0 0
        %2374 = vmatprep.subr.bf16.mxu0 0
        %2375 = vmatpush1.bf16.msra.mxu0 0
        %2376 = vmatprep.subr.bf16.mxu0 0
        %2377 = vmatpush1.bf16.msra.mxu0 0
        %2378 = vmatprep.subr.bf16.mxu0 0
        %2379 = vmatpush1.bf16.msra.mxu0 0
        %2380 = vmatprep.subr.bf16.mxu0 0
        %2381 = vmatpush1.bf16.msra.mxu0 0
        %2382 = vmatprep.mubr.bf16.mxu0 0
        %2383 = vmatmul.mubr.bf16.gmra.mrb[0].mxu0 %v2345
        %v2384 = vpop.f32.mrb[0].mxu0
        %v2385 = vadd.f32 0.0, %v2384
        %v2386 = vpop.f32.mrb[0].mxu0
        %v2387 = vpop.f32.mrb[0].mxu0
        %v2388 = vpop.f32.mrb[0].mxu0
        %2389 = vdwg.mxu0
        %v2390 = vpack.c.bf16 %v2385, %v2337
        %v2391 = vld [vmem:[%s804 + $0x30] sm:$0xf]
        %v2392 = vld [vmem:[%s804 + $0x34] sm:$0xf]
        %v2393 = vld [vmem:[%s804 + $0x38] sm:$0xf]
        %v2394 = vld [vmem:[%s804 + $0x3c] sm:$0xf]
        %v2399 = vunpack.c.l.b16 %v2391
        %v2400 = vunpack.c.l.b16 %v2392
        %v2401 = vunpack.c.l.b16 %v2393
        %v2402 = vunpack.c.l.b16 %v2394
        %v2403 = vpack.c.b16 %v2400, %v2399
        %v2404 = vpack.c.b16 %v2402, %v2401
        %v2408 = vsel %vm1318, %v2390, 0
        %2410 = vmatprep.subr.bf16.mxu0 0
        %2411 = vmatpush1.bf16.msra.mxu0 %v2403
        %2412 = vmatprep.subr.bf16.mxu0 0
        %2413 = vmatpush1.bf16.msra.mxu0 %v2404
        %2414 = vmatprep.subr.bf16.mxu0 0
        %2415 = vmatpush1.bf16.msra.mxu0 0
        %2416 = vmatprep.subr.bf16.mxu0 0
        %2417 = vmatpush1.bf16.msra.mxu0 0
        %2418 = vmatprep.subr.bf16.mxu0 0
        %2419 = vmatpush1.bf16.msra.mxu0 0
        %2420 = vmatprep.subr.bf16.mxu0 0
        %2421 = vmatpush1.bf16.msra.mxu0 0
        %2422 = vmatprep.subr.bf16.mxu0 0
        %2423 = vmatpush1.bf16.msra.mxu0 0
        %2424 = vmatprep.subr.bf16.mxu0 0
        %2425 = vmatpush1.bf16.msra.mxu0 0
        %2426 = vmatprep.subr.bf16.mxu0 0
        %2427 = vmatpush1.bf16.msra.mxu0 0
        %2428 = vmatprep.subr.bf16.mxu0 0
        %2429 = vmatpush1.bf16.msra.mxu0 0
        %2430 = vmatprep.subr.bf16.mxu0 0
        %2431 = vmatpush1.bf16.msra.mxu0 0
        %2432 = vmatprep.subr.bf16.mxu0 0
        %2433 = vmatpush1.bf16.msra.mxu0 0
        %2434 = vmatprep.subr.bf16.mxu0 0
        %2435 = vmatpush1.bf16.msra.mxu0 0
        %2436 = vmatprep.subr.bf16.mxu0 0
        %2437 = vmatpush1.bf16.msra.mxu0 0
        %2438 = vmatprep.subr.bf16.mxu0 0
        %2439 = vmatpush1.bf16.msra.mxu0 0
        %2440 = vmatprep.subr.bf16.mxu0 0
        %2441 = vmatpush1.bf16.msra.mxu0 0
        %2442 = vmatprep.mubr.bf16.mxu0 0
        %2443 = vmatmul.mubr.bf16.gmra.mrb[0].mxu0 %v2408
        %v2444 = vpop.f32.mrb[0].mxu0
        %v2445 = vadd.f32 0.0, %v2444
        %v2446 = vpop.f32.mrb[0].mxu0
        %v2447 = vpop.f32.mrb[0].mxu0
        %v2448 = vadd.f32 0.0, %v2447
        %v2449 = vpop.f32.mrb[0].mxu0
        %2450 = vdwg.mxu0
        %v2451 = vadd.f32 %v2166, %v2445
        %v2452 = vadd.f32 %v2167, %v2448
        %v2453 = vld [vmem:[%s812] sm:$0x1]
        %v2455 = vlaneseq
        %v2456 = vshrl.u32 %v2455, 7
        %v2457 = vsub.s32 0, %v2456
        %v2458 = vrot.slane %v2453, %v2457
        %v2460 = vadd.f32 %v2451, %v2458
        %v2461 = vadd.f32 %v2452, %v2458
        %v2462 = vadd.f32 %v1050, %v2460
        %v2463 = vadd.f32 %v1051, %v2461
        %v2464 = vld [vmem:[%s820] sm:$0x1]
        %v2465 = vld [vmem:[%s828] sm:$0x1]
        %2466 = vadd.xlane.f32.xlu0 %v2462
        %v2467 = vpop.xlane.xlu0 %2466
        %2468 = vadd.xlane.f32.xlu0 %v2463
        %v2469 = vpop.xlane.xlu0 %2468
        %v2470 = vrcp.pop 128.0
        %v2471 = vmul.f32 %v2467, %v2470
        %v2472 = vmul.f32 %v2469, %v2470
        %v2473 = vmul.f32 %v2462, %v2462
        %v2474 = vmul.f32 %v2463, %v2463
        %2475 = vadd.xlane.f32.xlu0 %v2473
        %v2476 = vpop.xlane.xlu0 %2475
        %2477 = vadd.xlane.f32.xlu0 %v2474
        %v2478 = vpop.xlane.xlu0 %2477
        %v2479 = vmul.f32 %v2476, %v2470
        %v2480 = vmul.f32 %v2478, %v2470
        %v2481 = vmul.f32 %v2471, %v2471
        %v2482 = vmul.f32 %v2472, %v2472
        %v2483 = vsub.f32 %v2479, %v2481
        %v2484 = vsub.f32 %v2480, %v2482
        %v2485 = vsub.f32 %v2462, %v2471
        %v2486 = vsub.f32 %v2463, %v2472
        %v2487 = vadd.f32 %v2483, 1e-05
        %v2488 = vadd.f32 %v2484, 1e-05
        %v2489 = vrsqrt.pop %v2487
        %v2490 = vrsqrt.pop %v2488
        %v2491 = vmul.f32 %v2485, %v2489
        %v2492 = vmul.f32 %v2486, %v2490
        %v2494 = vlaneseq
        %v2495 = vshrl.u32 %v2494, 7
        %v2496 = vsub.s32 0, %v2495
        %v2497 = vrot.slane %v2464, %v2496
        %v2499 = vmul.f32 %v2491, %v2497
        %v2500 = vmul.f32 %v2492, %v2497
        %v2502 = vlaneseq
        %v2503 = vshrl.u32 %v2502, 7
        %v2504 = vsub.s32 0, %v2503
        %v2505 = vrot.slane %v2465, %v2504
        %v2507 = vadd.f32 %v2499, %v2505
        %v2508 = vadd.f32 %v2500, %v2505
        %v2509 = vpack.c.bf16 %v2508, %v2507
        %v2510 = vld [vmem:[%s837] sm:$0xff]
        %v2511 = vld [vmem:[%s837 + $0x8] sm:$0xff]
        %v2512 = vld [vmem:[%s837 + $0x10] sm:$0xff]
        %v2513 = vld [vmem:[%s837 + $0x18] sm:$0xff]
        %v2514 = vld [vmem:[%s837 + $0x20] sm:$0xff]
        %v2515 = vld [vmem:[%s837 + $0x28] sm:$0xff]
        %v2516 = vld [vmem:[%s837 + $0x30] sm:$0xff]
        %v2517 = vld [vmem:[%s837 + $0x38] sm:$0xff]
        %v2518 = vld [vmem:[%s837 + $0x40] sm:$0xff]
        %v2519 = vld [vmem:[%s837 + $0x48] sm:$0xff]
        %v2520 = vld [vmem:[%s837 + $0x50] sm:$0xff]
        %v2521 = vld [vmem:[%s837 + $0x58] sm:$0xff]
        %v2522 = vld [vmem:[%s837 + $0x60] sm:$0xff]
        %v2523 = vld [vmem:[%s837 + $0x68] sm:$0xff]
        %v2524 = vld [vmem:[%s837 + $0x70] sm:$0xff]
        %v2525 = vld [vmem:[%s837 + $0x78] sm:$0xff]
        %v2526 = vld [vmem:[%s837 + $0x80] sm:$0xff]
        %v2527 = vld [vmem:[%s837 + $0x88] sm:$0xff]
        %v2528 = vld [vmem:[%s837 + $0x90] sm:$0xff]
        %v2529 = vld [vmem:[%s837 + $0x98] sm:$0xff]
        %v2530 = vld [vmem:[%s837 + $0xa0] sm:$0xff]
        %v2531 = vld [vmem:[%s837 + $0xa8] sm:$0xff]
        %v2532 = vld [vmem:[%s837 + $0xb0] sm:$0xff]
        %v2533 = vld [vmem:[%s837 + $0xb8] sm:$0xff]
        %v2534 = vld [vmem:[%s837 + $0xc0] sm:$0xff]
        %v2535 = vld [vmem:[%s837 + $0xc8] sm:$0xff]
        %v2536 = vld [vmem:[%s837 + $0xd0] sm:$0xff]
        %v2537 = vld [vmem:[%s837 + $0xd8] sm:$0xff]
        %v2538 = vld [vmem:[%s837 + $0xe0] sm:$0xff]
        %v2539 = vld [vmem:[%s837 + $0xe8] sm:$0xff]
        %v2540 = vld [vmem:[%s837 + $0xf0] sm:$0xff]
        %v2541 = vld [vmem:[%s837 + $0xf8] sm:$0xff]
        %v2542 = vld [vmem:[%s837 + $0x100] sm:$0xff]
        %v2543 = vld [vmem:[%s837 + $0x108] sm:$0xff]
        %v2544 = vld [vmem:[%s837 + $0x110] sm:$0xff]
        %v2545 = vld [vmem:[%s837 + $0x118] sm:$0xff]
        %v2546 = vld [vmem:[%s837 + $0x120] sm:$0xff]
        %v2547 = vld [vmem:[%s837 + $0x128] sm:$0xff]
        %v2548 = vld [vmem:[%s837 + $0x130] sm:$0xff]
        %v2549 = vld [vmem:[%s837 + $0x138] sm:$0xff]
        %v2550 = vld [vmem:[%s837 + $0x140] sm:$0xff]
        %v2551 = vld [vmem:[%s837 + $0x148] sm:$0xff]
        %v2552 = vld [vmem:[%s837 + $0x150] sm:$0xff]
        %v2553 = vld [vmem:[%s837 + $0x158] sm:$0xff]
        %v2554 = vld [vmem:[%s837 + $0x160] sm:$0xff]
        %v2555 = vld [vmem:[%s837 + $0x168] sm:$0xff]
        %v2556 = vld [vmem:[%s837 + $0x170] sm:$0xff]
        %v2557 = vld [vmem:[%s837 + $0x178] sm:$0xff]
        %v2558 = vld [vmem:[%s837 + $0x180] sm:$0xff]
        %v2559 = vld [vmem:[%s837 + $0x188] sm:$0xff]
        %v2560 = vld [vmem:[%s837 + $0x190] sm:$0xff]
        %v2561 = vld [vmem:[%s837 + $0x198] sm:$0xff]
        %v2562 = vld [vmem:[%s837 + $0x1a0] sm:$0xff]
        %v2563 = vld [vmem:[%s837 + $0x1a8] sm:$0xff]
        %v2564 = vld [vmem:[%s837 + $0x1b0] sm:$0xff]
        %v2565 = vld [vmem:[%s837 + $0x1b8] sm:$0xff]
        %v2566 = vld [vmem:[%s837 + $0x1c0] sm:$0xff]
        %v2567 = vld [vmem:[%s837 + $0x1c8] sm:$0xff]
        %v2568 = vld [vmem:[%s837 + $0x1d0] sm:$0xff]
        %v2569 = vld [vmem:[%s837 + $0x1d8] sm:$0xff]
        %v2570 = vld [vmem:[%s837 + $0x1e0] sm:$0xff]
        %v2571 = vld [vmem:[%s837 + $0x1e8] sm:$0xff]
        %v2572 = vld [vmem:[%s837 + $0x1f0] sm:$0xff]
        %v2573 = vld [vmem:[%s837 + $0x1f8] sm:$0xff]
        %v2574 = vld [vmem:[%s837 + $0x200] sm:$0xff]
        %v2575 = vld [vmem:[%s837 + $0x208] sm:$0xff]
        %v2576 = vld [vmem:[%s837 + $0x210] sm:$0xff]
        %v2577 = vld [vmem:[%s837 + $0x218] sm:$0xff]
        %v2578 = vld [vmem:[%s837 + $0x220] sm:$0xff]
        %v2579 = vld [vmem:[%s837 + $0x228] sm:$0xff]
        %v2580 = vld [vmem:[%s837 + $0x230] sm:$0xff]
        %v2581 = vld [vmem:[%s837 + $0x238] sm:$0xff]
        %v2582 = vld [vmem:[%s837 + $0x240] sm:$0xff]
        %v2583 = vld [vmem:[%s837 + $0x248] sm:$0xff]
        %v2584 = vld [vmem:[%s837 + $0x250] sm:$0xff]
        %v2585 = vld [vmem:[%s837 + $0x258] sm:$0xff]
        %v2586 = vld [vmem:[%s837 + $0x260] sm:$0xff]
        %v2587 = vld [vmem:[%s837 + $0x268] sm:$0xff]
        %v2588 = vld [vmem:[%s837 + $0x270] sm:$0xff]
        %v2589 = vld [vmem:[%s837 + $0x278] sm:$0xff]
        %v2590 = vld [vmem:[%s837 + $0x280] sm:$0xff]
        %v2591 = vld [vmem:[%s837 + $0x288] sm:$0xff]
        %v2592 = vld [vmem:[%s837 + $0x290] sm:$0xff]
        %v2593 = vld [vmem:[%s837 + $0x298] sm:$0xff]
        %v2594 = vld [vmem:[%s837 + $0x2a0] sm:$0xff]
        %v2595 = vld [vmem:[%s837 + $0x2a8] sm:$0xff]
        %v2596 = vld [vmem:[%s837 + $0x2b0] sm:$0xff]
        %v2597 = vld [vmem:[%s837 + $0x2b8] sm:$0xff]
        %v2598 = vld [vmem:[%s837 + $0x2c0] sm:$0xff]
        %v2599 = vld [vmem:[%s837 + $0x2c8] sm:$0xff]
        %v2600 = vld [vmem:[%s837 + $0x2d0] sm:$0xff]
        %v2601 = vld [vmem:[%s837 + $0x2d8] sm:$0xff]
        %v2602 = vld [vmem:[%s837 + $0x2e0] sm:$0xff]
        %v2603 = vld [vmem:[%s837 + $0x2e8] sm:$0xff]
        %v2604 = vld [vmem:[%s837 + $0x2f0] sm:$0xff]
        %v2605 = vld [vmem:[%s837 + $0x2f8] sm:$0xff]
        %v2606 = vld [vmem:[%s837 + $0x300] sm:$0xff]
        %v2607 = vld [vmem:[%s837 + $0x308] sm:$0xff]
        %v2608 = vld [vmem:[%s837 + $0x310] sm:$0xff]
        %v2609 = vld [vmem:[%s837 + $0x318] sm:$0xff]
        %v2610 = vld [vmem:[%s837 + $0x320] sm:$0xff]
        %v2611 = vld [vmem:[%s837 + $0x328] sm:$0xff]
        %v2612 = vld [vmem:[%s837 + $0x330] sm:$0xff]
        %v2613 = vld [vmem:[%s837 + $0x338] sm:$0xff]
        %v2614 = vld [vmem:[%s837 + $0x340] sm:$0xff]
        %v2615 = vld [vmem:[%s837 + $0x348] sm:$0xff]
        %v2616 = vld [vmem:[%s837 + $0x350] sm:$0xff]
        %v2617 = vld [vmem:[%s837 + $0x358] sm:$0xff]
        %v2618 = vld [vmem:[%s837 + $0x360] sm:$0xff]
        %v2619 = vld [vmem:[%s837 + $0x368] sm:$0xff]
        %v2620 = vld [vmem:[%s837 + $0x370] sm:$0xff]
        %v2621 = vld [vmem:[%s837 + $0x378] sm:$0xff]
        %v2622 = vld [vmem:[%s837 + $0x380] sm:$0xff]
        %v2623 = vld [vmem:[%s837 + $0x388] sm:$0xff]
        %v2624 = vld [vmem:[%s837 + $0x390] sm:$0xff]
        %v2625 = vld [vmem:[%s837 + $0x398] sm:$0xff]
        %v2626 = vld [vmem:[%s837 + $0x3a0] sm:$0xff]
        %v2627 = vld [vmem:[%s837 + $0x3a8] sm:$0xff]
        %v2628 = vld [vmem:[%s837 + $0x3b0] sm:$0xff]
        %v2629 = vld [vmem:[%s837 + $0x3b8] sm:$0xff]
        %v2630 = vld [vmem:[%s837 + $0x3c0] sm:$0xff]
        %v2631 = vld [vmem:[%s837 + $0x3c8] sm:$0xff]
        %v2632 = vld [vmem:[%s837 + $0x3d0] sm:$0xff]
        %v2633 = vld [vmem:[%s837 + $0x3d8] sm:$0xff]
        %v2634 = vld [vmem:[%s837 + $0x3e0] sm:$0xff]
        %v2635 = vld [vmem:[%s837 + $0x3e8] sm:$0xff]
        %v2636 = vld [vmem:[%s837 + $0x3f0] sm:$0xff]
        %v2637 = vld [vmem:[%s837 + $0x3f8] sm:$0xff]
        %v2638 = vld [vmem:[%s982] sm:$0xff]
        %v2639 = vld [vmem:[%s982 + $0x8] sm:$0xff]
        %v2642 = vlaneseq
        %v2643 = vshrl.u32 %v2642, 7
        %v2644 = vsub.s32 0, %v2643
        %v2645 = vrot.slane %v2638, %v2644
        %v2646 = vlaneseq
        %v2647 = vshrl.u32 %v2646, 7
        %v2648 = vsub.s32 1, %v2647
        %v2649 = vrot.slane %v2638, %v2648
        %v2650 = vlaneseq
        %v2651 = vshrl.u32 %v2650, 7
        %v2652 = vsub.s32 2, %v2651
        %v2653 = vrot.slane %v2638, %v2652
        %v2654 = vlaneseq
        %v2655 = vshrl.u32 %v2654, 7
        %v2656 = vsub.s32 3, %v2655
        %v2657 = vrot.slane %v2638, %v2656
        %v2658 = vlaneseq
        %v2659 = vshrl.u32 %v2658, 7
        %v2660 = vsub.s32 4, %v2659
        %v2661 = vrot.slane %v2638, %v2660
        %v2662 = vlaneseq
        %v2663 = vshrl.u32 %v2662, 7
        %v2664 = vsub.s32 5, %v2663
        %v2665 = vrot.slane %v2638, %v2664
        %v2666 = vlaneseq
        %v2667 = vshrl.u32 %v2666, 7
        %v2668 = vsub.s32 6, %v2667
        %v2669 = vrot.slane %v2638, %v2668
        %v2670 = vlaneseq
        %v2671 = vshrl.u32 %v2670, 7
        %v2672 = vsub.s32 7, %v2671
        %v2673 = vrot.slane %v2638, %v2672
        %v2674 = vlaneseq
        %v2675 = vshrl.u32 %v2674, 7
        %v2676 = vsub.s32 0, %v2675
        %v2677 = vrot.slane %v2639, %v2676
        %v2678 = vlaneseq
        %v2679 = vshrl.u32 %v2678, 7
        %v2680 = vsub.s32 1, %v2679
        %v2681 = vrot.slane %v2639, %v2680
        %v2682 = vlaneseq
        %v2683 = vshrl.u32 %v2682, 7
        %v2684 = vsub.s32 2, %v2683
        %v2685 = vrot.slane %v2639, %v2684
        %v2686 = vlaneseq
        %v2687 = vshrl.u32 %v2686, 7
        %v2688 = vsub.s32 3, %v2687
        %v2689 = vrot.slane %v2639, %v2688
        %v2690 = vlaneseq
        %v2691 = vshrl.u32 %v2690, 7
        %v2692 = vsub.s32 4, %v2691
        %v2693 = vrot.slane %v2639, %v2692
        %v2694 = vlaneseq
        %v2695 = vshrl.u32 %v2694, 7
        %v2696 = vsub.s32 5, %v2695
        %v2697 = vrot.slane %v2639, %v2696
        %v2698 = vlaneseq
        %v2699 = vshrl.u32 %v2698, 7
        %v2700 = vsub.s32 6, %v2699
        %v2701 = vrot.slane %v2639, %v2700
        %v2702 = vlaneseq
        %v2703 = vshrl.u32 %v2702, 7
        %v2704 = vsub.s32 7, %v2703
        %v2705 = vrot.slane %v2639, %v2704
        %v2850 = vunpack.c.l.b16 %v2510
        %v2851 = vunpack.c.h.b16 %v2510
        %v2852 = vunpack.c.l.b16 %v2511
        %v2853 = vunpack.c.h.b16 %v2511
        %v2854 = vunpack.c.l.b16 %v2512
        %v2855 = vunpack.c.h.b16 %v2512
        %v2856 = vunpack.c.l.b16 %v2513
        %v2857 = vunpack.c.h.b16 %v2513
        %v2858 = vunpack.c.l.b16 %v2514
        %v2859 = vunpack.c.h.b16 %v2514
        %v2860 = vunpack.c.l.b16 %v2515
        %v2861 = vunpack.c.h.b16 %v2515
        %v2862 = vunpack.c.l.b16 %v2516
        %v2863 = vunpack.c.h.b16 %v2516
        %v2864 = vunpack.c.l.b16 %v2517
        %v2865 = vunpack.c.h.b16 %v2517
        %v2866 = vunpack.c.l.b16 %v2518
        %v2867 = vunpack.c.h.b16 %v2518
        %v2868 = vunpack.c.l.b16 %v2519
        %v2869 = vunpack.c.h.b16 %v2519
        %v2870 = vunpack.c.l.b16 %v2520
        %v2871 = vunpack.c.h.b16 %v2520
        %v2872 = vunpack.c.l.b16 %v2521
        %v2873 = vunpack.c.h.b16 %v2521
        %v2874 = vunpack.c.l.b16 %v2522
        %v2875 = vunpack.c.h.b16 %v2522
        %v2876 = vunpack.c.l.b16 %v2523
        %v2877 = vunpack.c.h.b16 %v2523
        %v2878 = vunpack.c.l.b16 %v2524
        %v2879 = vunpack.c.h.b16 %v2524
        %v2880 = vunpack.c.l.b16 %v2525
        %v2881 = vunpack.c.h.b16 %v2525
        %v2882 = vunpack.c.l.b16 %v2526
        %v2883 = vunpack.c.h.b16 %v2526
        %v2884 = vunpack.c.l.b16 %v2527
        %v2885 = vunpack.c.h.b16 %v2527
        %v2886 = vunpack.c.l.b16 %v2528
        %v2887 = vunpack.c.h.b16 %v2528
        %v2888 = vunpack.c.l.b16 %v2529
        %v2889 = vunpack.c.h.b16 %v2529
        %v2890 = vunpack.c.l.b16 %v2530
        %v2891 = vunpack.c.h.b16 %v2530
        %v2892 = vunpack.c.l.b16 %v2531
        %v2893 = vunpack.c.h.b16 %v2531
        %v2894 = vunpack.c.l.b16 %v2532
        %v2895 = vunpack.c.h.b16 %v2532
        %v2896 = vunpack.c.l.b16 %v2533
        %v2897 = vunpack.c.h.b16 %v2533
        %v2898 = vunpack.c.l.b16 %v2534
        %v2899 = vunpack.c.h.b16 %v2534
        %v2900 = vunpack.c.l.b16 %v2535
        %v2901 = vunpack.c.h.b16 %v2535
        %v2902 = vunpack.c.l.b16 %v2536
        %v2903 = vunpack.c.h.b16 %v2536
        %v2904 = vunpack.c.l.b16 %v2537
        %v2905 = vunpack.c.h.b16 %v2537
        %v2906 = vunpack.c.l.b16 %v2538
        %v2907 = vunpack.c.h.b16 %v2538
        %v2908 = vunpack.c.l.b16 %v2539
        %v2909 = vunpack.c.h.b16 %v2539
        %v2910 = vunpack.c.l.b16 %v2540
        %v2911 = vunpack.c.h.b16 %v2540
        %v2912 = vunpack.c.l.b16 %v2541
        %v2913 = vunpack.c.h.b16 %v2541
        %v2914 = vunpack.c.l.b16 %v2542
        %v2915 = vunpack.c.h.b16 %v2542
        %v2916 = vunpack.c.l.b16 %v2543
        %v2917 = vunpack.c.h.b16 %v2543
        %v2918 = vunpack.c.l.b16 %v2544
        %v2919 = vunpack.c.h.b16 %v2544
        %v2920 = vunpack.c.l.b16 %v2545
        %v2921 = vunpack.c.h.b16 %v2545
        %v2922 = vunpack.c.l.b16 %v2546
        %v2923 = vunpack.c.h.b16 %v2546
        %v2924 = vunpack.c.l.b16 %v2547
        %v2925 = vunpack.c.h.b16 %v2547
        %v2926 = vunpack.c.l.b16 %v2548
        %v2927 = vunpack.c.h.b16 %v2548
        %v2928 = vunpack.c.l.b16 %v2549
        %v2929 = vunpack.c.h.b16 %v2549
        %v2930 = vunpack.c.l.b16 %v2550
        %v2931 = vunpack.c.h.b16 %v2550
        %v2932 = vunpack.c.l.b16 %v2551
        %v2933 = vunpack.c.h.b16 %v2551
        %v2934 = vunpack.c.l.b16 %v2552
        %v2935 = vunpack.c.h.b16 %v2552
        %v2936 = vunpack.c.l.b16 %v2553
        %v2937 = vunpack.c.h.b16 %v2553
        %v2938 = vunpack.c.l.b16 %v2554
        %v2939 = vunpack.c.h.b16 %v2554
        %v2940 = vunpack.c.l.b16 %v2555
        %v2941 = vunpack.c.h.b16 %v2555
        %v2942 = vunpack.c.l.b16 %v2556
        %v2943 = vunpack.c.h.b16 %v2556
        %v2944 = vunpack.c.l.b16 %v2557
        %v2945 = vunpack.c.h.b16 %v2557
        %v2946 = vunpack.c.l.b16 %v2558
        %v2947 = vunpack.c.h.b16 %v2558
        %v2948 = vunpack.c.l.b16 %v2559
        %v2949 = vunpack.c.h.b16 %v2559
        %v2950 = vunpack.c.l.b16 %v2560
        %v2951 = vunpack.c.h.b16 %v2560
        %v2952 = vunpack.c.l.b16 %v2561
        %v2953 = vunpack.c.h.b16 %v2561
        %v2954 = vunpack.c.l.b16 %v2562
        %v2955 = vunpack.c.h.b16 %v2562
        %v2956 = vunpack.c.l.b16 %v2563
        %v2957 = vunpack.c.h.b16 %v2563
        %v2958 = vunpack.c.l.b16 %v2564
        %v2959 = vunpack.c.h.b16 %v2564
        %v2960 = vunpack.c.l.b16 %v2565
        %v2961 = vunpack.c.h.b16 %v2565
        %v2962 = vunpack.c.l.b16 %v2566
        %v2963 = vunpack.c.h.b16 %v2566
        %v2964 = vunpack.c.l.b16 %v2567
        %v2965 = vunpack.c.h.b16 %v2567
        %v2966 = vunpack.c.l.b16 %v2568
        %v2967 = vunpack.c.h.b16 %v2568
        %v2968 = vunpack.c.l.b16 %v2569
        %v2969 = vunpack.c.h.b16 %v2569
        %v2970 = vunpack.c.l.b16 %v2570
        %v2971 = vunpack.c.h.b16 %v2570
        %v2972 = vunpack.c.l.b16 %v2571
        %v2973 = vunpack.c.h.b16 %v2571
        %v2974 = vunpack.c.l.b16 %v2572
        %v2975 = vunpack.c.h.b16 %v2572
        %v2976 = vunpack.c.l.b16 %v2573
        %v2977 = vunpack.c.h.b16 %v2573
        %v2978 = vunpack.c.l.b16 %v2574
        %v2979 = vunpack.c.h.b16 %v2574
        %v2980 = vunpack.c.l.b16 %v2575
        %v2981 = vunpack.c.h.b16 %v2575
        %v2982 = vunpack.c.l.b16 %v2576
        %v2983 = vunpack.c.h.b16 %v2576
        %v2984 = vunpack.c.l.b16 %v2577
        %v2985 = vunpack.c.h.b16 %v2577
        %v2986 = vunpack.c.l.b16 %v2578
        %v2987 = vunpack.c.h.b16 %v2578
        %v2988 = vunpack.c.l.b16 %v2579
        %v2989 = vunpack.c.h.b16 %v2579
        %v2990 = vunpack.c.l.b16 %v2580
        %v2991 = vunpack.c.h.b16 %v2580
        %v2992 = vunpack.c.l.b16 %v2581
        %v2993 = vunpack.c.h.b16 %v2581
        %v2994 = vunpack.c.l.b16 %v2582
        %v2995 = vunpack.c.h.b16 %v2582
        %v2996 = vunpack.c.l.b16 %v2583
        %v2997 = vunpack.c.h.b16 %v2583
        %v2998 = vunpack.c.l.b16 %v2584
        %v2999 = vunpack.c.h.b16 %v2584
        %v3000 = vunpack.c.l.b16 %v2585
        %v3001 = vunpack.c.h.b16 %v2585
        %v3002 = vunpack.c.l.b16 %v2586
        %v3003 = vunpack.c.h.b16 %v2586
        %v3004 = vunpack.c.l.b16 %v2587
        %v3005 = vunpack.c.h.b16 %v2587
        %v3006 = vunpack.c.l.b16 %v2588
        %v3007 = vunpack.c.h.b16 %v2588
        %v3008 = vunpack.c.l.b16 %v2589
        %v3009 = vunpack.c.h.b16 %v2589
        %v3010 = vunpack.c.l.b16 %v2590
        %v3011 = vunpack.c.h.b16 %v2590
        %v3012 = vunpack.c.l.b16 %v2591
        %v3013 = vunpack.c.h.b16 %v2591
        %v3014 = vunpack.c.l.b16 %v2592
        %v3015 = vunpack.c.h.b16 %v2592
        %v3016 = vunpack.c.l.b16 %v2593
        %v3017 = vunpack.c.h.b16 %v2593
        %v3018 = vunpack.c.l.b16 %v2594
        %v3019 = vunpack.c.h.b16 %v2594
        %v3020 = vunpack.c.l.b16 %v2595
        %v3021 = vunpack.c.h.b16 %v2595
        %v3022 = vunpack.c.l.b16 %v2596
        %v3023 = vunpack.c.h.b16 %v2596
        %v3024 = vunpack.c.l.b16 %v2597
        %v3025 = vunpack.c.h.b16 %v2597
        %v3026 = vunpack.c.l.b16 %v2598
        %v3027 = vunpack.c.h.b16 %v2598
        %v3028 = vunpack.c.l.b16 %v2599
        %v3029 = vunpack.c.h.b16 %v2599
        %v3030 = vunpack.c.l.b16 %v2600
        %v3031 = vunpack.c.h.b16 %v2600
        %v3032 = vunpack.c.l.b16 %v2601
        %v3033 = vunpack.c.h.b16 %v2601
        %v3034 = vunpack.c.l.b16 %v2602
        %v3035 = vunpack.c.h.b16 %v2602
        %v3036 = vunpack.c.l.b16 %v2603
        %v3037 = vunpack.c.h.b16 %v2603
        %v3038 = vunpack.c.l.b16 %v2604
        %v3039 = vunpack.c.h.b16 %v2604
        %v3040 = vunpack.c.l.b16 %v2605
        %v3041 = vunpack.c.h.b16 %v2605
        %v3042 = vunpack.c.l.b16 %v2606
        %v3043 = vunpack.c.h.b16 %v2606
        %v3044 = vunpack.c.l.b16 %v2607
        %v3045 = vunpack.c.h.b16 %v2607
        %v3046 = vunpack.c.l.b16 %v2608
        %v3047 = vunpack.c.h.b16 %v2608
        %v3048 = vunpack.c.l.b16 %v2609
        %v3049 = vunpack.c.h.b16 %v2609
        %v3050 = vunpack.c.l.b16 %v2610
        %v3051 = vunpack.c.h.b16 %v2610
        %v3052 = vunpack.c.l.b16 %v2611
        %v3053 = vunpack.c.h.b16 %v2611
        %v3054 = vunpack.c.l.b16 %v2612
        %v3055 = vunpack.c.h.b16 %v2612
        %v3056 = vunpack.c.l.b16 %v2613
        %v3057 = vunpack.c.h.b16 %v2613
        %v3058 = vunpack.c.l.b16 %v2614
        %v3059 = vunpack.c.h.b16 %v2614
        %v3060 = vunpack.c.l.b16 %v2615
        %v3061 = vunpack.c.h.b16 %v2615
        %v3062 = vunpack.c.l.b16 %v2616
        %v3063 = vunpack.c.h.b16 %v2616
        %v3064 = vunpack.c.l.b16 %v2617
        %v3065 = vunpack.c.h.b16 %v2617
        %v3066 = vunpack.c.l.b16 %v2618
        %v3067 = vunpack.c.h.b16 %v2618
        %v3068 = vunpack.c.l.b16 %v2619
        %v3069 = vunpack.c.h.b16 %v2619
        %v3070 = vunpack.c.l.b16 %v2620
        %v3071 = vunpack.c.h.b16 %v2620
        %v3072 = vunpack.c.l.b16 %v2621
        %v3073 = vunpack.c.h.b16 %v2621
        %v3074 = vunpack.c.l.b16 %v2622
        %v3075 = vunpack.c.h.b16 %v2622
        %v3076 = vunpack.c.l.b16 %v2623
        %v3077 = vunpack.c.h.b16 %v2623
        %v3078 = vunpack.c.l.b16 %v2624
        %v3079 = vunpack.c.h.b16 %v2624
        %v3080 = vunpack.c.l.b16 %v2625
        %v3081 = vunpack.c.h.b16 %v2625
        %v3082 = vunpack.c.l.b16 %v2626
        %v3083 = vunpack.c.h.b16 %v2626
        %v3084 = vunpack.c.l.b16 %v2627
        %v3085 = vunpack.c.h.b16 %v2627
        %v3086 = vunpack.c.l.b16 %v2628
        %v3087 = vunpack.c.h.b16 %v2628
        %v3088 = vunpack.c.l.b16 %v2629
        %v3089 = vunpack.c.h.b16 %v2629
        %v3090 = vunpack.c.l.b16 %v2630
        %v3091 = vunpack.c.h.b16 %v2630
        %v3092 = vunpack.c.l.b16 %v2631
        %v3093 = vunpack.c.h.b16 %v2631
        %v3094 = vunpack.c.l.b16 %v2632
        %v3095 = vunpack.c.h.b16 %v2632
        %v3096 = vunpack.c.l.b16 %v2633
        %v3097 = vunpack.c.h.b16 %v2633
        %v3098 = vunpack.c.l.b16 %v2634
        %v3099 = vunpack.c.h.b16 %v2634
        %v3100 = vunpack.c.l.b16 %v2635
        %v3101 = vunpack.c.h.b16 %v2635
        %v3102 = vunpack.c.l.b16 %v2636
        %v3103 = vunpack.c.h.b16 %v2636
        %v3104 = vunpack.c.l.b16 %v2637
        %v3105 = vunpack.c.h.b16 %v2637
        %v3106 = vpack.c.b16 %v2866, %v2850
        %v3107 = vpack.c.b16 %v2867, %v2851
        %v3108 = vpack.c.b16 %v2868, %v2852
        %v3109 = vpack.c.b16 %v2869, %v2853
        %v3110 = vpack.c.b16 %v2870, %v2854
        %v3111 = vpack.c.b16 %v2871, %v2855
        %v3112 = vpack.c.b16 %v2872, %v2856
        %v3113 = vpack.c.b16 %v2873, %v2857
        %v3114 = vpack.c.b16 %v2874, %v2858
        %v3115 = vpack.c.b16 %v2875, %v2859
        %v3116 = vpack.c.b16 %v2876, %v2860
        %v3117 = vpack.c.b16 %v2877, %v2861
        %v3118 = vpack.c.b16 %v2878, %v2862
        %v3119 = vpack.c.b16 %v2879, %v2863
        %v3120 = vpack.c.b16 %v2880, %v2864
        %v3121 = vpack.c.b16 %v2881, %v2865
        %v3122 = vpack.c.b16 %v2898, %v2882
        %v3123 = vpack.c.b16 %v2899, %v2883
        %v3124 = vpack.c.b16 %v2900, %v2884
        %v3125 = vpack.c.b16 %v2901, %v2885
        %v3126 = vpack.c.b16 %v2902, %v2886
        %v3127 = vpack.c.b16 %v2903, %v2887
        %v3128 = vpack.c.b16 %v2904, %v2888
        %v3129 = vpack.c.b16 %v2905, %v2889
        %v3130 = vpack.c.b16 %v2906, %v2890
        %v3131 = vpack.c.b16 %v2907, %v2891
        %v3132 = vpack.c.b16 %v2908, %v2892
        %v3133 = vpack.c.b16 %v2909, %v2893
        %v3134 = vpack.c.b16 %v2910, %v2894
        %v3135 = vpack.c.b16 %v2911, %v2895
        %v3136 = vpack.c.b16 %v2912, %v2896
        %v3137 = vpack.c.b16 %v2913, %v2897
        %v3138 = vpack.c.b16 %v2930, %v2914
        %v3139 = vpack.c.b16 %v2931, %v2915
        %v3140 = vpack.c.b16 %v2932, %v2916
        %v3141 = vpack.c.b16 %v2933, %v2917
        %v3142 = vpack.c.b16 %v2934, %v2918
        %v3143 = vpack.c.b16 %v2935, %v2919
        %v3144 = vpack.c.b16 %v2936, %v2920
        %v3145 = vpack.c.b16 %v2937, %v2921
        %v3146 = vpack.c.b16 %v2938, %v2922
        %v3147 = vpack.c.b16 %v2939, %v2923
        %v3148 = vpack.c.b16 %v2940, %v2924
        %v3149 = vpack.c.b16 %v2941, %v2925
        %v3150 = vpack.c.b16 %v2942, %v2926
        %v3151 = vpack.c.b16 %v2943, %v2927
        %v3152 = vpack.c.b16 %v2944, %v2928
        %v3153 = vpack.c.b16 %v2945, %v2929
        %v3154 = vpack.c.b16 %v2962, %v2946
        %v3155 = vpack.c.b16 %v2963, %v2947
        %v3156 = vpack.c.b16 %v2964, %v2948
        %v3157 = vpack.c.b16 %v2965, %v2949
        %v3158 = vpack.c.b16 %v2966, %v2950
        %v3159 = vpack.c.b16 %v2967, %v2951
        %v3160 = vpack.c.b16 %v2968, %v2952
        %v3161 = vpack.c.b16 %v2969, %v2953
        %v3162 = vpack.c.b16 %v2970, %v2954
        %v3163 = vpack.c.b16 %v2971, %v2955
        %v3164 = vpack.c.b16 %v2972, %v2956
        %v3165 = vpack.c.b16 %v2973, %v2957
        %v3166 = vpack.c.b16 %v2974, %v2958
        %v3167 = vpack.c.b16 %v2975, %v2959
        %v3168 = vpack.c.b16 %v2976, %v2960
        %v3169 = vpack.c.b16 %v2977, %v2961
        %v3170 = vpack.c.b16 %v2994, %v2978
        %v3171 = vpack.c.b16 %v2995, %v2979
        %v3172 = vpack.c.b16 %v2996, %v2980
        %v3173 = vpack.c.b16 %v2997, %v2981
        %v3174 = vpack.c.b16 %v2998, %v2982
        %v3175 = vpack.c.b16 %v2999, %v2983
        %v3176 = vpack.c.b16 %v3000, %v2984
        %v3177 = vpack.c.b16 %v3001, %v2985
        %v3178 = vpack.c.b16 %v3002, %v2986
        %v3179 = vpack.c.b16 %v3003, %v2987
        %v3180 = vpack.c.b16 %v3004, %v2988
        %v3181 = vpack.c.b16 %v3005, %v2989
        %v3182 = vpack.c.b16 %v3006, %v2990
        %v3183 = vpack.c.b16 %v3007, %v2991
        %v3184 = vpack.c.b16 %v3008, %v2992
        %v3185 = vpack.c.b16 %v3009, %v2993
        %v3186 = vpack.c.b16 %v3026, %v3010
        %v3187 = vpack.c.b16 %v3027, %v3011
        %v3188 = vpack.c.b16 %v3028, %v3012
        %v3189 = vpack.c.b16 %v3029, %v3013
        %v3190 = vpack.c.b16 %v3030, %v3014
        %v3191 = vpack.c.b16 %v3031, %v3015
        %v3192 = vpack.c.b16 %v3032, %v3016
        %v3193 = vpack.c.b16 %v3033, %v3017
        %v3194 = vpack.c.b16 %v3034, %v3018
        %v3195 = vpack.c.b16 %v3035, %v3019
        %v3196 = vpack.c.b16 %v3036, %v3020
        %v3197 = vpack.c.b16 %v3037, %v3021
        %v3198 = vpack.c.b16 %v3038, %v3022
        %v3199 = vpack.c.b16 %v3039, %v3023
        %v3200 = vpack.c.b16 %v3040, %v3024
        %v3201 = vpack.c.b16 %v3041, %v3025
        %v3202 = vpack.c.b16 %v3058, %v3042
        %v3203 = vpack.c.b16 %v3059, %v3043
        %v3204 = vpack.c.b16 %v3060, %v3044
        %v3205 = vpack.c.b16 %v3061, %v3045
        %v3206 = vpack.c.b16 %v3062, %v3046
        %v3207 = vpack.c.b16 %v3063, %v3047
        %v3208 = vpack.c.b16 %v3064, %v3048
        %v3209 = vpack.c.b16 %v3065, %v3049
        %v3210 = vpack.c.b16 %v3066, %v3050
        %v3211 = vpack.c.b16 %v3067, %v3051
        %v3212 = vpack.c.b16 %v3068, %v3052
        %v3213 = vpack.c.b16 %v3069, %v3053
        %v3214 = vpack.c.b16 %v3070, %v3054
        %v3215 = vpack.c.b16 %v3071, %v3055
        %v3216 = vpack.c.b16 %v3072, %v3056
        %v3217 = vpack.c.b16 %v3073, %v3057
        %v3218 = vpack.c.b16 %v3090, %v3074
        %v3219 = vpack.c.b16 %v3091, %v3075
        %v3220 = vpack.c.b16 %v3092, %v3076
        %v3221 = vpack.c.b16 %v3093, %v3077
        %v3222 = vpack.c.b16 %v3094, %v3078
        %v3223 = vpack.c.b16 %v3095, %v3079
        %v3224 = vpack.c.b16 %v3096, %v3080
        %v3225 = vpack.c.b16 %v3097, %v3081
        %v3226 = vpack.c.b16 %v3098, %v3082
        %v3227 = vpack.c.b16 %v3099, %v3083
        %v3228 = vpack.c.b16 %v3100, %v3084
        %v3229 = vpack.c.b16 %v3101, %v3085
        %v3230 = vpack.c.b16 %v3102, %v3086
        %v3231 = vpack.c.b16 %v3103, %v3087
        %v3232 = vpack.c.b16 %v3104, %v3088
        %v3233 = vpack.c.b16 %v3105, %v3089
        %3362 = vmatprep.subr.bf16.mxu0 %v3107
        %3363 = vmatpush1.bf16.msra.mxu0 %v3106
        %3364 = vmatprep.subr.bf16.mxu0 %v3123
        %3365 = vmatpush1.bf16.msra.mxu0 %v3122
        %3366 = vmatprep.subr.bf16.mxu0 %v3139
        %3367 = vmatpush1.bf16.msra.mxu0 %v3138
        %3368 = vmatprep.subr.bf16.mxu0 %v3155
        %3369 = vmatpush1.bf16.msra.mxu0 %v3154
        %3370 = vmatprep.subr.bf16.mxu0 %v3171
        %3371 = vmatpush1.bf16.msra.mxu0 %v3170
        %3372 = vmatprep.subr.bf16.mxu0 %v3187
        %3373 = vmatpush1.bf16.msra.mxu0 %v3186
        %3374 = vmatprep.subr.bf16.mxu0 %v3203
        %3375 = vmatpush1.bf16.msra.mxu0 %v3202
        %3376 = vmatprep.subr.bf16.mxu0 %v3219
        %3377 = vmatpush1.bf16.msra.mxu0 %v3218
        %3378 = vmatprep.subr.bf16.mxu0 0
        %3379 = vmatpush1.bf16.msra.mxu0 0
        %3380 = vmatprep.subr.bf16.mxu0 0
        %3381 = vmatpush1.bf16.msra.mxu0 0
        %3382 = vmatprep.subr.bf16.mxu0 0
        %3383 = vmatpush1.bf16.msra.mxu0 0
        %3384 = vmatprep.subr.bf16.mxu0 0
        %3385 = vmatpush1.bf16.msra.mxu0 0
        %3386 = vmatprep.subr.bf16.mxu0 0
        %3387 = vmatpush1.bf16.msra.mxu0 0
        %3388 = vmatprep.subr.bf16.mxu0 0
        %3389 = vmatpush1.bf16.msra.mxu0 0
        %3390 = vmatprep.subr.bf16.mxu0 0
        %3391 = vmatpush1.bf16.msra.mxu0 0
        %3392 = vmatprep.subr.bf16.mxu0 0
        %3393 = vmatpush1.bf16.msra.mxu0 0
        %3394 = vmatprep.mubr.bf16.mxu0 0
        %3395 = vmatmul.mubr.bf16.gmra.mrb[0].mxu0 %v2509
        %v3396 = vpop.f32.mrb[0].mxu0
        %v3397 = vadd.f32 %v2645, %v3396
        %v3398 = vpop.f32.mrb[0].mxu0
        %v3399 = vadd.f32 %v2649, %v3398
        %v3400 = vpop.f32.mrb[0].mxu0
        %v3401 = vadd.f32 %v2645, %v3400
        %v3402 = vpop.f32.mrb[0].mxu0
        %v3403 = vadd.f32 %v2649, %v3402
        %3404 = vdwg.mxu0
        %3405 = vmatprep.subr.bf16.mxu0 %v3109
        %3406 = vmatpush1.bf16.msra.mxu0 %v3108
        %3407 = vmatprep.subr.bf16.mxu0 %v3125
        %3408 = vmatpush1.bf16.msra.mxu0 %v3124
        %3409 = vmatprep.subr.bf16.mxu0 %v3141
        %3410 = vmatpush1.bf16.msra.mxu0 %v3140
        %3411 = vmatprep.subr.bf16.mxu0 %v3157
        %3412 = vmatpush1.bf16.msra.mxu0 %v3156
        %3413 = vmatprep.subr.bf16.mxu0 %v3173
        %3414 = vmatpush1.bf16.msra.mxu0 %v3172
        %3415 = vmatprep.subr.bf16.mxu0 %v3189
        %3416 = vmatpush1.bf16.msra.mxu0 %v3188
        %3417 = vmatprep.subr.bf16.mxu0 %v3205
        %3418 = vmatpush1.bf16.msra.mxu0 %v3204
        %3419 = vmatprep.subr.bf16.mxu0 %v3221
        %3420 = vmatpush1.bf16.msra.mxu0 %v3220
        %3421 = vmatprep.subr.bf16.mxu0 0
        %3422 = vmatpush1.bf16.msra.mxu0 0
        %3423 = vmatprep.subr.bf16.mxu0 0
        %3424 = vmatpush1.bf16.msra.mxu0 0
        %3425 = vmatprep.subr.bf16.mxu0 0
        %3426 = vmatpush1.bf16.msra.mxu0 0
        %3427 = vmatprep.subr.bf16.mxu0 0
        %3428 = vmatpush1.bf16.msra.mxu0 0
        %3429 = vmatprep.subr.bf16.mxu0 0
        %3430 = vmatpush1.bf16.msra.mxu0 0
        %3431 = vmatprep.subr.bf16.mxu0 0
        %3432 = vmatpush1.bf16.msra.mxu0 0
        %3433 = vmatprep.subr.bf16.mxu0 0
        %3434 = vmatpush1.bf16.msra.mxu0 0
        %3435 = vmatprep.subr.bf16.mxu0 0
        %3436 = vmatpush1.bf16.msra.mxu0 0
        %3437 = vmatprep.mubr.bf16.mxu0 0
        %3438 = vmatmul.mubr.bf16.gmra.mrb[0].mxu0 %v2509
        %v3439 = vpop.f32.mrb[0].mxu0
        %v3440 = vadd.f32 %v2653, %v3439
        %v3441 = vpop.f32.mrb[0].mxu0
        %v3442 = vadd.f32 %v2657, %v3441
        %v3443 = vpop.f32.mrb[0].mxu0
        %v3444 = vadd.f32 %v2653, %v3443
        %v3445 = vpop.f32.mrb[0].mxu0
        %v3446 = vadd.f32 %v2657, %v3445
        %3447 = vdwg.mxu0
        %3448 = vmatprep.subr.bf16.mxu0 %v3111
        %3449 = vmatpush1.bf16.msra.mxu0 %v3110
        %3450 = vmatprep.subr.bf16.mxu0 %v3127
        %3451 = vmatpush1.bf16.msra.mxu0 %v3126
        %3452 = vmatprep.subr.bf16.mxu0 %v3143
        %3453 = vmatpush1.bf16.msra.mxu0 %v3142
        %3454 = vmatprep.subr.bf16.mxu0 %v3159
        %3455 = vmatpush1.bf16.msra.mxu0 %v3158
        %3456 = vmatprep.subr.bf16.mxu0 %v3175
        %3457 = vmatpush1.bf16.msra.mxu0 %v3174
        %3458 = vmatprep.subr.bf16.mxu0 %v3191
        %3459 = vmatpush1.bf16.msra.mxu0 %v3190
        %3460 = vmatprep.subr.bf16.mxu0 %v3207
        %3461 = vmatpush1.bf16.msra.mxu0 %v3206
        %3462 = vmatprep.subr.bf16.mxu0 %v3223
        %3463 = vmatpush1.bf16.msra.mxu0 %v3222
        %3464 = vmatprep.subr.bf16.mxu0 0
        %3465 = vmatpush1.bf16.msra.mxu0 0
        %3466 = vmatprep.subr.bf16.mxu0 0
        %3467 = vmatpush1.bf16.msra.mxu0 0
        %3468 = vmatprep.subr.bf16.mxu0 0
        %3469 = vmatpush1.bf16.msra.mxu0 0
        %3470 = vmatprep.subr.bf16.mxu0 0
        %3471 = vmatpush1.bf16.msra.mxu0 0
        %3472 = vmatprep.subr.bf16.mxu0 0
        %3473 = vmatpush1.bf16.msra.mxu0 0
        %3474 = vmatprep.subr.bf16.mxu0 0
        %3475 = vmatpush1.bf16.msra.mxu0 0
        %3476 = vmatprep.subr.bf16.mxu0 0
        %3477 = vmatpush1.bf16.msra.mxu0 0
        %3478 = vmatprep.subr.bf16.mxu0 0
        %3479 = vmatpush1.bf16.msra.mxu0 0
        %3480 = vmatprep.mubr.bf16.mxu0 0
        %3481 = vmatmul.mubr.bf16.gmra.mrb[0].mxu0 %v2509
        %v3482 = vpop.f32.mrb[0].mxu0
        %v3483 = vadd.f32 %v2661, %v3482
        %v3484 = vpop.f32.mrb[0].mxu0
        %v3485 = vadd.f32 %v2665, %v3484
        %v3486 = vpop.f32.mrb[0].mxu0
        %v3487 = vadd.f32 %v2661, %v3486
        %v3488 = vpop.f32.mrb[0].mxu0
        %v3489 = vadd.f32 %v2665, %v3488
        %3490 = vdwg.mxu0
        %3491 = vmatprep.subr.bf16.mxu0 %v3113
        %3492 = vmatpush1.bf16.msra.mxu0 %v3112
        %3493 = vmatprep.subr.bf16.mxu0 %v3129
        %3494 = vmatpush1.bf16.msra.mxu0 %v3128
        %3495 = vmatprep.subr.bf16.mxu0 %v3145
        %3496 = vmatpush1.bf16.msra.mxu0 %v3144
        %3497 = vmatprep.subr.bf16.mxu0 %v3161
        %3498 = vmatpush1.bf16.msra.mxu0 %v3160
        %3499 = vmatprep.subr.bf16.mxu0 %v3177
        %3500 = vmatpush1.bf16.msra.mxu0 %v3176
        %3501 = vmatprep.subr.bf16.mxu0 %v3193
        %3502 = vmatpush1.bf16.msra.mxu0 %v3192
        %3503 = vmatprep.subr.bf16.mxu0 %v3209
        %3504 = vmatpush1.bf16.msra.mxu0 %v3208
        %3505 = vmatprep.subr.bf16.mxu0 %v3225
        %3506 = vmatpush1.bf16.msra.mxu0 %v3224
        %3507 = vmatprep.subr.bf16.mxu0 0
        %3508 = vmatpush1.bf16.msra.mxu0 0
        %3509 = vmatprep.subr.bf16.mxu0 0
        %3510 = vmatpush1.bf16.msra.mxu0 0
        %3511 = vmatprep.subr.bf16.mxu0 0
        %3512 = vmatpush1.bf16.msra.mxu0 0
        %3513 = vmatprep.subr.bf16.mxu0 0
        %3514 = vmatpush1.bf16.msra.mxu0 0
        %3515 = vmatprep.subr.bf16.mxu0 0
        %3516 = vmatpush1.bf16.msra.mxu0 0
        %3517 = vmatprep.subr.bf16.mxu0 0
        %3518 = vmatpush1.bf16.msra.mxu0 0
        %3519 = vmatprep.subr.bf16.mxu0 0
        %3520 = vmatpush1.bf16.msra.mxu0 0
        %3521 = vmatprep.subr.bf16.mxu0 0
        %3522 = vmatpush1.bf16.msra.mxu0 0
        %3523 = vmatprep.mubr.bf16.mxu0 0
        %3524 = vmatmul.mubr.bf16.gmra.mrb[0].mxu0 %v2509
        %v3525 = vpop.f32.mrb[0].mxu0
        %v3526 = vadd.f32 %v2669, %v3525
        %v3527 = vpop.f32.mrb[0].mxu0
        %v3528 = vadd.f32 %v2673, %v3527
        %v3529 = vpop.f32.mrb[0].mxu0
        %v3530 = vadd.f32 %v2669, %v3529
        %v3531 = vpop.f32.mrb[0].mxu0
        %v3532 = vadd.f32 %v2673, %v3531
        %3533 = vdwg.mxu0
        %3534 = vmatprep.subr.bf16.mxu0 %v3115
        %3535 = vmatpush1.bf16.msra.mxu0 %v3114
        %3536 = vmatprep.subr.bf16.mxu0 %v3131
        %3537 = vmatpush1.bf16.msra.mxu0 %v3130
        %3538 = vmatprep.subr.bf16.mxu0 %v3147
        %3539 = vmatpush1.bf16.msra.mxu0 %v3146
        %3540 = vmatprep.subr.bf16.mxu0 %v3163
        %3541 = vmatpush1.bf16.msra.mxu0 %v3162
        %3542 = vmatprep.subr.bf16.mxu0 %v3179
        %3543 = vmatpush1.bf16.msra.mxu0 %v3178
        %3544 = vmatprep.subr.bf16.mxu0 %v3195
        %3545 = vmatpush1.bf16.msra.mxu0 %v3194
        %3546 = vmatprep.subr.bf16.mxu0 %v3211
        %3547 = vmatpush1.bf16.msra.mxu0 %v3210
        %3548 = vmatprep.subr.bf16.mxu0 %v3227
        %3549 = vmatpush1.bf16.msra.mxu0 %v3226
        %3550 = vmatprep.subr.bf16.mxu0 0
        %3551 = vmatpush1.bf16.msra.mxu0 0
        %3552 = vmatprep.subr.bf16.mxu0 0
        %3553 = vmatpush1.bf16.msra.mxu0 0
        %3554 = vmatprep.subr.bf16.mxu0 0
        %3555 = vmatpush1.bf16.msra.mxu0 0
        %3556 = vmatprep.subr.bf16.mxu0 0
        %3557 = vmatpush1.bf16.msra.mxu0 0
        %3558 = vmatprep.subr.bf16.mxu0 0
        %3559 = vmatpush1.bf16.msra.mxu0 0
        %3560 = vmatprep.subr.bf16.mxu0 0
        %3561 = vmatpush1.bf16.msra.mxu0 0
        %3562 = vmatprep.subr.bf16.mxu0 0
        %3563 = vmatpush1.bf16.msra.mxu0 0
        %3564 = vmatprep.subr.bf16.mxu0 0
        %3565 = vmatpush1.bf16.msra.mxu0 0
        %3566 = vmatprep.mubr.bf16.mxu0 0
        %3567 = vmatmul.mubr.bf16.gmra.mrb[0].mxu0 %v2509
        %v3568 = vpop.f32.mrb[0].mxu0
        %v3569 = vadd.f32 %v2677, %v3568
        %v3570 = vpop.f32.mrb[0].mxu0
        %v3571 = vadd.f32 %v2681, %v3570
        %v3572 = vpop.f32.mrb[0].mxu0
        %v3573 = vadd.f32 %v2677, %v3572
        %v3574 = vpop.f32.mrb[0].mxu0
        %v3575 = vadd.f32 %v2681, %v3574
        %3576 = vdwg.mxu0
        %3577 = vmatprep.subr.bf16.mxu0 %v3117
        %3578 = vmatpush1.bf16.msra.mxu0 %v3116
        %3579 = vmatprep.subr.bf16.mxu0 %v3133
        %3580 = vmatpush1.bf16.msra.mxu0 %v3132
        %3581 = vmatprep.subr.bf16.mxu0 %v3149
        %3582 = vmatpush1.bf16.msra.mxu0 %v3148
        %3583 = vmatprep.subr.bf16.mxu0 %v3165
        %3584 = vmatpush1.bf16.msra.mxu0 %v3164
        %3585 = vmatprep.subr.bf16.mxu0 %v3181
        %3586 = vmatpush1.bf16.msra.mxu0 %v3180
        %3587 = vmatprep.subr.bf16.mxu0 %v3197
        %3588 = vmatpush1.bf16.msra.mxu0 %v3196
        %3589 = vmatprep.subr.bf16.mxu0 %v3213
        %3590 = vmatpush1.bf16.msra.mxu0 %v3212
        %3591 = vmatprep.subr.bf16.mxu0 %v3229
        %3592 = vmatpush1.bf16.msra.mxu0 %v3228
        %3593 = vmatprep.subr.bf16.mxu0 0
        %3594 = vmatpush1.bf16.msra.mxu0 0
        %3595 = vmatprep.subr.bf16.mxu0 0
        %3596 = vmatpush1.bf16.msra.mxu0 0
        %3597 = vmatprep.subr.bf16.mxu0 0
        %3598 = vmatpush1.bf16.msra.mxu0 0
        %3599 = vmatprep.subr.bf16.mxu0 0
        %3600 = vmatpush1.bf16.msra.mxu0 0
        %3601 = vmatprep.subr.bf16.mxu0 0
        %3602 = vmatpush1.bf16.msra.mxu0 0
        %3603 = vmatprep.subr.bf16.mxu0 0
        %3604 = vmatpush1.bf16.msra.mxu0 0
        %3605 = vmatprep.subr.bf16.mxu0 0
        %3606 = vmatpush1.bf16.msra.mxu0 0
        %3607 = vmatprep.subr.bf16.mxu0 0
        %3608 = vmatpush1.bf16.msra.mxu0 0
        %3609 = vmatprep.mubr.bf16.mxu0 0
        %3610 = vmatmul.mubr.bf16.gmra.mrb[0].mxu0 %v2509
        %v3611 = vpop.f32.mrb[0].mxu0
        %v3612 = vadd.f32 %v2685, %v3611
        %v3613 = vpop.f32.mrb[0].mxu0
        %v3614 = vadd.f32 %v2689, %v3613
        %v3615 = vpop.f32.mrb[0].mxu0
        %v3616 = vadd.f32 %v2685, %v3615
        %v3617 = vpop.f32.mrb[0].mxu0
        %v3618 = vadd.f32 %v2689, %v3617
        %3619 = vdwg.mxu0
        %3620 = vmatprep.subr.bf16.mxu0 %v3119
        %3621 = vmatpush1.bf16.msra.mxu0 %v3118
        %3622 = vmatprep.subr.bf16.mxu0 %v3135
        %3623 = vmatpush1.bf16.msra.mxu0 %v3134
        %3624 = vmatprep.subr.bf16.mxu0 %v3151
        %3625 = vmatpush1.bf16.msra.mxu0 %v3150
        %3626 = vmatprep.subr.bf16.mxu0 %v3167
        %3627 = vmatpush1.bf16.msra.mxu0 %v3166
        %3628 = vmatprep.subr.bf16.mxu0 %v3183
        %3629 = vmatpush1.bf16.msra.mxu0 %v3182
        %3630 = vmatprep.subr.bf16.mxu0 %v3199
        %3631 = vmatpush1.bf16.msra.mxu0 %v3198
        %3632 = vmatprep.subr.bf16.mxu0 %v3215
        %3633 = vmatpush1.bf16.msra.mxu0 %v3214
        %3634 = vmatprep.subr.bf16.mxu0 %v3231
        %3635 = vmatpush1.bf16.msra.mxu0 %v3230
        %3636 = vmatprep.subr.bf16.mxu0 0
        %3637 = vmatpush1.bf16.msra.mxu0 0
        %3638 = vmatprep.subr.bf16.mxu0 0
        %3639 = vmatpush1.bf16.msra.mxu0 0
        %3640 = vmatprep.subr.bf16.mxu0 0
        %3641 = vmatpush1.bf16.msra.mxu0 0
        %3642 = vmatprep.subr.bf16.mxu0 0
        %3643 = vmatpush1.bf16.msra.mxu0 0
        %3644 = vmatprep.subr.bf16.mxu0 0
        %3645 = vmatpush1.bf16.msra.mxu0 0
        %3646 = vmatprep.subr.bf16.mxu0 0
        %3647 = vmatpush1.bf16.msra.mxu0 0
        %3648 = vmatprep.subr.bf16.mxu0 0
        %3649 = vmatpush1.bf16.msra.mxu0 0
        %3650 = vmatprep.subr.bf16.mxu0 0
        %3651 = vmatpush1.bf16.msra.mxu0 0
        %3652 = vmatprep.mubr.bf16.mxu0 0
        %3653 = vmatmul.mubr.bf16.gmra.mrb[0].mxu0 %v2509
        %v3654 = vpop.f32.mrb[0].mxu0
        %v3655 = vadd.f32 %v2693, %v3654
        %v3656 = vpop.f32.mrb[0].mxu0
        %v3657 = vadd.f32 %v2697, %v3656
        %v3658 = vpop.f32.mrb[0].mxu0
        %v3659 = vadd.f32 %v2693, %v3658
        %v3660 = vpop.f32.mrb[0].mxu0
        %v3661 = vadd.f32 %v2697, %v3660
        %3662 = vdwg.mxu0
        %3663 = vmatprep.subr.bf16.mxu0 %v3121
        %3664 = vmatpush1.bf16.msra.mxu0 %v3120
        %3665 = vmatprep.subr.bf16.mxu0 %v3137
        %3666 = vmatpush1.bf16.msra.mxu0 %v3136
        %3667 = vmatprep.subr.bf16.mxu0 %v3153
        %3668 = vmatpush1.bf16.msra.mxu0 %v3152
        %3669 = vmatprep.subr.bf16.mxu0 %v3169
        %3670 = vmatpush1.bf16.msra.mxu0 %v3168
        %3671 = vmatprep.subr.bf16.mxu0 %v3185
        %3672 = vmatpush1.bf16.msra.mxu0 %v3184
        %3673 = vmatprep.subr.bf16.mxu0 %v3201
        %3674 = vmatpush1.bf16.msra.mxu0 %v3200
        %3675 = vmatprep.subr.bf16.mxu0 %v3217
        %3676 = vmatpush1.bf16.msra.mxu0 %v3216
        %3677 = vmatprep.subr.bf16.mxu0 %v3233
        %3678 = vmatpush1.bf16.msra.mxu0 %v3232
        %3679 = vmatprep.subr.bf16.mxu0 0
        %3680 = vmatpush1.bf16.msra.mxu0 0
        %3681 = vmatprep.subr.bf16.mxu0 0
        %3682 = vmatpush1.bf16.msra.mxu0 0
        %3683 = vmatprep.subr.bf16.mxu0 0
        %3684 = vmatpush1.bf16.msra.mxu0 0
        %3685 = vmatprep.subr.bf16.mxu0 0
        %3686 = vmatpush1.bf16.msra.mxu0 0
        %3687 = vmatprep.subr.bf16.mxu0 0
        %3688 = vmatpush1.bf16.msra.mxu0 0
        %3689 = vmatprep.subr.bf16.mxu0 0
        %3690 = vmatpush1.bf16.msra.mxu0 0
        %3691 = vmatprep.subr.bf16.mxu0 0
        %3692 = vmatpush1.bf16.msra.mxu0 0
        %3693 = vmatprep.subr.bf16.mxu0 0
        %3694 = vmatpush1.bf16.msra.mxu0 0
        %3695 = vmatprep.mubr.bf16.mxu0 0
        %3696 = vmatmul.mubr.bf16.gmra.mrb[0].mxu0 %v2509
        %v3697 = vpop.f32.mrb[0].mxu0
        %v3698 = vadd.f32 %v2701, %v3697
        %v3699 = vpop.f32.mrb[0].mxu0
        %v3700 = vadd.f32 %v2705, %v3699
        %v3701 = vpop.f32.mrb[0].mxu0
        %v3702 = vadd.f32 %v2701, %v3701
        %v3703 = vpop.f32.mrb[0].mxu0
        %v3704 = vadd.f32 %v2705, %v3703
        %3705 = vdwg.mxu0
        %v3706 = vmax.f32 %v3397, 0.0
        %v3707 = vmax.f32 %v3399, 0.0
        %v3708 = vmax.f32 %v3440, 0.0
        %v3709 = vmax.f32 %v3442, 0.0
        %v3710 = vmax.f32 %v3483, 0.0
        %v3711 = vmax.f32 %v3485, 0.0
        %v3712 = vmax.f32 %v3526, 0.0
        %v3713 = vmax.f32 %v3528, 0.0
        %v3714 = vmax.f32 %v3569, 0.0
        %v3715 = vmax.f32 %v3571, 0.0
        %v3716 = vmax.f32 %v3612, 0.0
        %v3717 = vmax.f32 %v3614, 0.0
        %v3718 = vmax.f32 %v3655, 0.0
        %v3719 = vmax.f32 %v3657, 0.0
        %v3720 = vmax.f32 %v3698, 0.0
        %v3721 = vmax.f32 %v3700, 0.0
        %v3722 = vmax.f32 %v3401, 0.0
        %v3723 = vmax.f32 %v3403, 0.0
        %v3724 = vmax.f32 %v3444, 0.0
        %v3725 = vmax.f32 %v3446, 0.0
        %v3726 = vmax.f32 %v3487, 0.0
        %v3727 = vmax.f32 %v3489, 0.0
        %v3728 = vmax.f32 %v3530, 0.0
        %v3729 = vmax.f32 %v3532, 0.0
        %v3730 = vmax.f32 %v3573, 0.0
        %v3731 = vmax.f32 %v3575, 0.0
        %v3732 = vmax.f32 %v3616, 0.0
        %v3733 = vmax.f32 %v3618, 0.0
        %v3734 = vmax.f32 %v3659, 0.0
        %v3735 = vmax.f32 %v3661, 0.0
        %v3736 = vmax.f32 %v3702, 0.0
        %v3737 = vmax.f32 %v3704, 0.0
        %v3738 = vpack.c.bf16 %v3722, %v3706
        %v3739 = vpack.c.bf16 %v3723, %v3707
        %v3740 = vpack.c.bf16 %v3724, %v3708
        %v3741 = vpack.c.bf16 %v3725, %v3709
        %v3742 = vpack.c.bf16 %v3726, %v3710
        %v3743 = vpack.c.bf16 %v3727, %v3711
        %v3744 = vpack.c.bf16 %v3728, %v3712
        %v3745 = vpack.c.bf16 %v3729, %v3713
        %v3746 = vpack.c.bf16 %v3730, %v3714
        %v3747 = vpack.c.bf16 %v3731, %v3715
        %v3748 = vpack.c.bf16 %v3732, %v3716
        %v3749 = vpack.c.bf16 %v3733, %v3717
        %v3750 = vpack.c.bf16 %v3734, %v3718
        %v3751 = vpack.c.bf16 %v3735, %v3719
        %v3752 = vpack.c.bf16 %v3736, %v3720
        %v3753 = vpack.c.bf16 %v3737, %v3721
        %v3754 = vld [vmem:[%s846] sm:$0xf]
        %v3755 = vld [vmem:[%s846 + $0x4] sm:$0xf]
        %v3756 = vld [vmem:[%s846 + $0x8] sm:$0xf]
        %v3757 = vld [vmem:[%s846 + $0xc] sm:$0xf]
        %v3758 = vld [vmem:[%s846 + $0x10] sm:$0xf]
        %v3759 = vld [vmem:[%s846 + $0x14] sm:$0xf]
        %v3760 = vld [vmem:[%s846 + $0x18] sm:$0xf]
        %v3761 = vld [vmem:[%s846 + $0x1c] sm:$0xf]
        %v3762 = vld [vmem:[%s846 + $0x20] sm:$0xf]
        %v3763 = vld [vmem:[%s846 + $0x24] sm:$0xf]
        %v3764 = vld [vmem:[%s846 + $0x28] sm:$0xf]
        %v3765 = vld [vmem:[%s846 + $0x2c] sm:$0xf]
        %v3766 = vld [vmem:[%s846 + $0x30] sm:$0xf]
        %v3767 = vld [vmem:[%s846 + $0x34] sm:$0xf]
        %v3768 = vld [vmem:[%s846 + $0x38] sm:$0xf]
        %v3769 = vld [vmem:[%s846 + $0x3c] sm:$0xf]
        %v3770 = vld [vmem:[%s846 + $0x40] sm:$0xf]
        %v3771 = vld [vmem:[%s846 + $0x44] sm:$0xf]
        %v3772 = vld [vmem:[%s846 + $0x48] sm:$0xf]
        %v3773 = vld [vmem:[%s846 + $0x4c] sm:$0xf]
        %v3774 = vld [vmem:[%s846 + $0x50] sm:$0xf]
        %v3775 = vld [vmem:[%s846 + $0x54] sm:$0xf]
        %v3776 = vld [vmem:[%s846 + $0x58] sm:$0xf]
        %v3777 = vld [vmem:[%s846 + $0x5c] sm:$0xf]
        %v3778 = vld [vmem:[%s846 + $0x60] sm:$0xf]
        %v3779 = vld [vmem:[%s846 + $0x64] sm:$0xf]
        %v3780 = vld [vmem:[%s846 + $0x68] sm:$0xf]
        %v3781 = vld [vmem:[%s846 + $0x6c] sm:$0xf]
        %v3782 = vld [vmem:[%s846 + $0x70] sm:$0xf]
        %v3783 = vld [vmem:[%s846 + $0x74] sm:$0xf]
        %v3784 = vld [vmem:[%s846 + $0x78] sm:$0xf]
        %v3785 = vld [vmem:[%s846 + $0x7c] sm:$0xf]
        %v3786 = vld [vmem:[%s846 + $0x80] sm:$0xf]
        %v3787 = vld [vmem:[%s846 + $0x84] sm:$0xf]
        %v3788 = vld [vmem:[%s846 + $0x88] sm:$0xf]
        %v3789 = vld [vmem:[%s846 + $0x8c] sm:$0xf]
        %v3790 = vld [vmem:[%s846 + $0x90] sm:$0xf]
        %v3791 = vld [vmem:[%s846 + $0x94] sm:$0xf]
        %v3792 = vld [vmem:[%s846 + $0x98] sm:$0xf]
        %v3793 = vld [vmem:[%s846 + $0x9c] sm:$0xf]
        %v3794 = vld [vmem:[%s846 + $0xa0] sm:$0xf]
        %v3795 = vld [vmem:[%s846 + $0xa4] sm:$0xf]
        %v3796 = vld [vmem:[%s846 + $0xa8] sm:$0xf]
        %v3797 = vld [vmem:[%s846 + $0xac] sm:$0xf]
        %v3798 = vld [vmem:[%s846 + $0xb0] sm:$0xf]
        %v3799 = vld [vmem:[%s846 + $0xb4] sm:$0xf]
        %v3800 = vld [vmem:[%s846 + $0xb8] sm:$0xf]
        %v3801 = vld [vmem:[%s846 + $0xbc] sm:$0xf]
        %v3802 = vld [vmem:[%s846 + $0xc0] sm:$0xf]
        %v3803 = vld [vmem:[%s846 + $0xc4] sm:$0xf]
        %v3804 = vld [vmem:[%s846 + $0xc8] sm:$0xf]
        %v3805 = vld [vmem:[%s846 + $0xcc] sm:$0xf]
        %v3806 = vld [vmem:[%s846 + $0xd0] sm:$0xf]
        %v3807 = vld [vmem:[%s846 + $0xd4] sm:$0xf]
        %v3808 = vld [vmem:[%s846 + $0xd8] sm:$0xf]
        %v3809 = vld [vmem:[%s846 + $0xdc] sm:$0xf]
        %v3810 = vld [vmem:[%s846 + $0xe0] sm:$0xf]
        %v3811 = vld [vmem:[%s846 + $0xe4] sm:$0xf]
        %v3812 = vld [vmem:[%s846 + $0xe8] sm:$0xf]
        %v3813 = vld [vmem:[%s846 + $0xec] sm:$0xf]
        %v3814 = vld [vmem:[%s846 + $0xf0] sm:$0xf]
        %v3815 = vld [vmem:[%s846 + $0xf4] sm:$0xf]
        %v3816 = vld [vmem:[%s846 + $0xf8] sm:$0xf]
        %v3817 = vld [vmem:[%s846 + $0xfc] sm:$0xf]
        %v3818 = vld [vmem:[%s846 + $0x100] sm:$0xf]
        %v3819 = vld [vmem:[%s846 + $0x104] sm:$0xf]
        %v3820 = vld [vmem:[%s846 + $0x108] sm:$0xf]
        %v3821 = vld [vmem:[%s846 + $0x10c] sm:$0xf]
        %v3822 = vld [vmem:[%s846 + $0x110] sm:$0xf]
        %v3823 = vld [vmem:[%s846 + $0x114] sm:$0xf]
        %v3824 = vld [vmem:[%s846 + $0x118] sm:$0xf]
        %v3825 = vld [vmem:[%s846 + $0x11c] sm:$0xf]
        %v3826 = vld [vmem:[%s846 + $0x120] sm:$0xf]
        %v3827 = vld [vmem:[%s846 + $0x124] sm:$0xf]
        %v3828 = vld [vmem:[%s846 + $0x128] sm:$0xf]
        %v3829 = vld [vmem:[%s846 + $0x12c] sm:$0xf]
        %v3830 = vld [vmem:[%s846 + $0x130] sm:$0xf]
        %v3831 = vld [vmem:[%s846 + $0x134] sm:$0xf]
        %v3832 = vld [vmem:[%s846 + $0x138] sm:$0xf]
        %v3833 = vld [vmem:[%s846 + $0x13c] sm:$0xf]
        %v3834 = vld [vmem:[%s846 + $0x140] sm:$0xf]
        %v3835 = vld [vmem:[%s846 + $0x144] sm:$0xf]
        %v3836 = vld [vmem:[%s846 + $0x148] sm:$0xf]
        %v3837 = vld [vmem:[%s846 + $0x14c] sm:$0xf]
        %v3838 = vld [vmem:[%s846 + $0x150] sm:$0xf]
        %v3839 = vld [vmem:[%s846 + $0x154] sm:$0xf]
        %v3840 = vld [vmem:[%s846 + $0x158] sm:$0xf]
        %v3841 = vld [vmem:[%s846 + $0x15c] sm:$0xf]
        %v3842 = vld [vmem:[%s846 + $0x160] sm:$0xf]
        %v3843 = vld [vmem:[%s846 + $0x164] sm:$0xf]
        %v3844 = vld [vmem:[%s846 + $0x168] sm:$0xf]
        %v3845 = vld [vmem:[%s846 + $0x16c] sm:$0xf]
        %v3846 = vld [vmem:[%s846 + $0x170] sm:$0xf]
        %v3847 = vld [vmem:[%s846 + $0x174] sm:$0xf]
        %v3848 = vld [vmem:[%s846 + $0x178] sm:$0xf]
        %v3849 = vld [vmem:[%s846 + $0x17c] sm:$0xf]
        %v3850 = vld [vmem:[%s846 + $0x180] sm:$0xf]
        %v3851 = vld [vmem:[%s846 + $0x184] sm:$0xf]
        %v3852 = vld [vmem:[%s846 + $0x188] sm:$0xf]
        %v3853 = vld [vmem:[%s846 + $0x18c] sm:$0xf]
        %v3854 = vld [vmem:[%s846 + $0x190] sm:$0xf]
        %v3855 = vld [vmem:[%s846 + $0x194] sm:$0xf]
        %v3856 = vld [vmem:[%s846 + $0x198] sm:$0xf]
        %v3857 = vld [vmem:[%s846 + $0x19c] sm:$0xf]
        %v3858 = vld [vmem:[%s846 + $0x1a0] sm:$0xf]
        %v3859 = vld [vmem:[%s846 + $0x1a4] sm:$0xf]
        %v3860 = vld [vmem:[%s846 + $0x1a8] sm:$0xf]
        %v3861 = vld [vmem:[%s846 + $0x1ac] sm:$0xf]
        %v3862 = vld [vmem:[%s846 + $0x1b0] sm:$0xf]
        %v3863 = vld [vmem:[%s846 + $0x1b4] sm:$0xf]
        %v3864 = vld [vmem:[%s846 + $0x1b8] sm:$0xf]
        %v3865 = vld [vmem:[%s846 + $0x1bc] sm:$0xf]
        %v3866 = vld [vmem:[%s846 + $0x1c0] sm:$0xf]
        %v3867 = vld [vmem:[%s846 + $0x1c4] sm:$0xf]
        %v3868 = vld [vmem:[%s846 + $0x1c8] sm:$0xf]
        %v3869 = vld [vmem:[%s846 + $0x1cc] sm:$0xf]
        %v3870 = vld [vmem:[%s846 + $0x1d0] sm:$0xf]
        %v3871 = vld [vmem:[%s846 + $0x1d4] sm:$0xf]
        %v3872 = vld [vmem:[%s846 + $0x1d8] sm:$0xf]
        %v3873 = vld [vmem:[%s846 + $0x1dc] sm:$0xf]
        %v3874 = vld [vmem:[%s846 + $0x1e0] sm:$0xf]
        %v3875 = vld [vmem:[%s846 + $0x1e4] sm:$0xf]
        %v3876 = vld [vmem:[%s846 + $0x1e8] sm:$0xf]
        %v3877 = vld [vmem:[%s846 + $0x1ec] sm:$0xf]
        %v3878 = vld [vmem:[%s846 + $0x1f0] sm:$0xf]
        %v3879 = vld [vmem:[%s846 + $0x1f4] sm:$0xf]
        %v3880 = vld [vmem:[%s846 + $0x1f8] sm:$0xf]
        %v3881 = vld [vmem:[%s846 + $0x1fc] sm:$0xf]
        %v3882 = vld [vmem:[%s846 + $0x200] sm:$0xf]
        %v3883 = vld [vmem:[%s846 + $0x204] sm:$0xf]
        %v3884 = vld [vmem:[%s846 + $0x208] sm:$0xf]
        %v3885 = vld [vmem:[%s846 + $0x20c] sm:$0xf]
        %v3886 = vld [vmem:[%s846 + $0x210] sm:$0xf]
        %v3887 = vld [vmem:[%s846 + $0x214] sm:$0xf]
        %v3888 = vld [vmem:[%s846 + $0x218] sm:$0xf]
        %v3889 = vld [vmem:[%s846 + $0x21c] sm:$0xf]
        %v3890 = vld [vmem:[%s846 + $0x220] sm:$0xf]
        %v3891 = vld [vmem:[%s846 + $0x224] sm:$0xf]
        %v3892 = vld [vmem:[%s846 + $0x228] sm:$0xf]
        %v3893 = vld [vmem:[%s846 + $0x22c] sm:$0xf]
        %v3894 = vld [vmem:[%s846 + $0x230] sm:$0xf]
        %v3895 = vld [vmem:[%s846 + $0x234] sm:$0xf]
        %v3896 = vld [vmem:[%s846 + $0x238] sm:$0xf]
        %v3897 = vld [vmem:[%s846 + $0x23c] sm:$0xf]
        %v3898 = vld [vmem:[%s846 + $0x240] sm:$0xf]
        %v3899 = vld [vmem:[%s846 + $0x244] sm:$0xf]
        %v3900 = vld [vmem:[%s846 + $0x248] sm:$0xf]
        %v3901 = vld [vmem:[%s846 + $0x24c] sm:$0xf]
        %v3902 = vld [vmem:[%s846 + $0x250] sm:$0xf]
        %v3903 = vld [vmem:[%s846 + $0x254] sm:$0xf]
        %v3904 = vld [vmem:[%s846 + $0x258] sm:$0xf]
        %v3905 = vld [vmem:[%s846 + $0x25c] sm:$0xf]
        %v3906 = vld [vmem:[%s846 + $0x260] sm:$0xf]
        %v3907 = vld [vmem:[%s846 + $0x264] sm:$0xf]
        %v3908 = vld [vmem:[%s846 + $0x268] sm:$0xf]
        %v3909 = vld [vmem:[%s846 + $0x26c] sm:$0xf]
        %v3910 = vld [vmem:[%s846 + $0x270] sm:$0xf]
        %v3911 = vld [vmem:[%s846 + $0x274] sm:$0xf]
        %v3912 = vld [vmem:[%s846 + $0x278] sm:$0xf]
        %v3913 = vld [vmem:[%s846 + $0x27c] sm:$0xf]
        %v3914 = vld [vmem:[%s846 + $0x280] sm:$0xf]
        %v3915 = vld [vmem:[%s846 + $0x284] sm:$0xf]
        %v3916 = vld [vmem:[%s846 + $0x288] sm:$0xf]
        %v3917 = vld [vmem:[%s846 + $0x28c] sm:$0xf]
        %v3918 = vld [vmem:[%s846 + $0x290] sm:$0xf]
        %v3919 = vld [vmem:[%s846 + $0x294] sm:$0xf]
        %v3920 = vld [vmem:[%s846 + $0x298] sm:$0xf]
        %v3921 = vld [vmem:[%s846 + $0x29c] sm:$0xf]
        %v3922 = vld [vmem:[%s846 + $0x2a0] sm:$0xf]
        %v3923 = vld [vmem:[%s846 + $0x2a4] sm:$0xf]
        %v3924 = vld [vmem:[%s846 + $0x2a8] sm:$0xf]
        %v3925 = vld [vmem:[%s846 + $0x2ac] sm:$0xf]
        %v3926 = vld [vmem:[%s846 + $0x2b0] sm:$0xf]
        %v3927 = vld [vmem:[%s846 + $0x2b4] sm:$0xf]
        %v3928 = vld [vmem:[%s846 + $0x2b8] sm:$0xf]
        %v3929 = vld [vmem:[%s846 + $0x2bc] sm:$0xf]
        %v3930 = vld [vmem:[%s846 + $0x2c0] sm:$0xf]
        %v3931 = vld [vmem:[%s846 + $0x2c4] sm:$0xf]
        %v3932 = vld [vmem:[%s846 + $0x2c8] sm:$0xf]
        %v3933 = vld [vmem:[%s846 + $0x2cc] sm:$0xf]
        %v3934 = vld [vmem:[%s846 + $0x2d0] sm:$0xf]
        %v3935 = vld [vmem:[%s846 + $0x2d4] sm:$0xf]
        %v3936 = vld [vmem:[%s846 + $0x2d8] sm:$0xf]
        %v3937 = vld [vmem:[%s846 + $0x2dc] sm:$0xf]
        %v3938 = vld [vmem:[%s846 + $0x2e0] sm:$0xf]
        %v3939 = vld [vmem:[%s846 + $0x2e4] sm:$0xf]
        %v3940 = vld [vmem:[%s846 + $0x2e8] sm:$0xf]
        %v3941 = vld [vmem:[%s846 + $0x2ec] sm:$0xf]
        %v3942 = vld [vmem:[%s846 + $0x2f0] sm:$0xf]
        %v3943 = vld [vmem:[%s846 + $0x2f4] sm:$0xf]
        %v3944 = vld [vmem:[%s846 + $0x2f8] sm:$0xf]
        %v3945 = vld [vmem:[%s846 + $0x2fc] sm:$0xf]
        %v3946 = vld [vmem:[%s846 + $0x300] sm:$0xf]
        %v3947 = vld [vmem:[%s846 + $0x304] sm:$0xf]
        %v3948 = vld [vmem:[%s846 + $0x308] sm:$0xf]
        %v3949 = vld [vmem:[%s846 + $0x30c] sm:$0xf]
        %v3950 = vld [vmem:[%s846 + $0x310] sm:$0xf]
        %v3951 = vld [vmem:[%s846 + $0x314] sm:$0xf]
        %v3952 = vld [vmem:[%s846 + $0x318] sm:$0xf]
        %v3953 = vld [vmem:[%s846 + $0x31c] sm:$0xf]
        %v3954 = vld [vmem:[%s846 + $0x320] sm:$0xf]
        %v3955 = vld [vmem:[%s846 + $0x324] sm:$0xf]
        %v3956 = vld [vmem:[%s846 + $0x328] sm:$0xf]
        %v3957 = vld [vmem:[%s846 + $0x32c] sm:$0xf]
        %v3958 = vld [vmem:[%s846 + $0x330] sm:$0xf]
        %v3959 = vld [vmem:[%s846 + $0x334] sm:$0xf]
        %v3960 = vld [vmem:[%s846 + $0x338] sm:$0xf]
        %v3961 = vld [vmem:[%s846 + $0x33c] sm:$0xf]
        %v3962 = vld [vmem:[%s846 + $0x340] sm:$0xf]
        %v3963 = vld [vmem:[%s846 + $0x344] sm:$0xf]
        %v3964 = vld [vmem:[%s846 + $0x348] sm:$0xf]
        %v3965 = vld [vmem:[%s846 + $0x34c] sm:$0xf]
        %v3966 = vld [vmem:[%s846 + $0x350] sm:$0xf]
        %v3967 = vld [vmem:[%s846 + $0x354] sm:$0xf]
        %v3968 = vld [vmem:[%s846 + $0x358] sm:$0xf]
        %v3969 = vld [vmem:[%s846 + $0x35c] sm:$0xf]
        %v3970 = vld [vmem:[%s846 + $0x360] sm:$0xf]
        %v3971 = vld [vmem:[%s846 + $0x364] sm:$0xf]
        %v3972 = vld [vmem:[%s846 + $0x368] sm:$0xf]
        %v3973 = vld [vmem:[%s846 + $0x36c] sm:$0xf]
        %v3974 = vld [vmem:[%s846 + $0x370] sm:$0xf]
        %v3975 = vld [vmem:[%s846 + $0x374] sm:$0xf]
        %v3976 = vld [vmem:[%s846 + $0x378] sm:$0xf]
        %v3977 = vld [vmem:[%s846 + $0x37c] sm:$0xf]
        %v3978 = vld [vmem:[%s846 + $0x380] sm:$0xf]
        %v3979 = vld [vmem:[%s846 + $0x384] sm:$0xf]
        %v3980 = vld [vmem:[%s846 + $0x388] sm:$0xf]
        %v3981 = vld [vmem:[%s846 + $0x38c] sm:$0xf]
        %v3982 = vld [vmem:[%s846 + $0x390] sm:$0xf]
        %v3983 = vld [vmem:[%s846 + $0x394] sm:$0xf]
        %v3984 = vld [vmem:[%s846 + $0x398] sm:$0xf]
        %v3985 = vld [vmem:[%s846 + $0x39c] sm:$0xf]
        %v3986 = vld [vmem:[%s846 + $0x3a0] sm:$0xf]
        %v3987 = vld [vmem:[%s846 + $0x3a4] sm:$0xf]
        %v3988 = vld [vmem:[%s846 + $0x3a8] sm:$0xf]
        %v3989 = vld [vmem:[%s846 + $0x3ac] sm:$0xf]
        %v3990 = vld [vmem:[%s846 + $0x3b0] sm:$0xf]
        %v3991 = vld [vmem:[%s846 + $0x3b4] sm:$0xf]
        %v3992 = vld [vmem:[%s846 + $0x3b8] sm:$0xf]
        %v3993 = vld [vmem:[%s846 + $0x3bc] sm:$0xf]
        %v3994 = vld [vmem:[%s846 + $0x3c0] sm:$0xf]
        %v3995 = vld [vmem:[%s846 + $0x3c4] sm:$0xf]
        %v3996 = vld [vmem:[%s846 + $0x3c8] sm:$0xf]
        %v3997 = vld [vmem:[%s846 + $0x3cc] sm:$0xf]
        %v3998 = vld [vmem:[%s846 + $0x3d0] sm:$0xf]
        %v3999 = vld [vmem:[%s846 + $0x3d4] sm:$0xf]
        %v4000 = vld [vmem:[%s846 + $0x3d8] sm:$0xf]
        %v4001 = vld [vmem:[%s846 + $0x3dc] sm:$0xf]
        %v4002 = vld [vmem:[%s846 + $0x3e0] sm:$0xf]
        %v4003 = vld [vmem:[%s846 + $0x3e4] sm:$0xf]
        %v4004 = vld [vmem:[%s846 + $0x3e8] sm:$0xf]
        %v4005 = vld [vmem:[%s846 + $0x3ec] sm:$0xf]
        %v4006 = vld [vmem:[%s846 + $0x3f0] sm:$0xf]
        %v4007 = vld [vmem:[%s846 + $0x3f4] sm:$0xf]
        %v4008 = vld [vmem:[%s846 + $0x3f8] sm:$0xf]
        %v4009 = vld [vmem:[%s846 + $0x3fc] sm:$0xf]
        %v4010 = vld [vmem:[%s854] sm:$0x1]
        %v4012 = vlaneseq
        %v4013 = vshrl.u32 %v4012, 7
        %v4014 = vsub.s32 0, %v4013
        %v4015 = vrot.slane %v4010, %v4014
        %v4273 = vunpack.c.l.b16 %v3754
        %v4274 = vunpack.c.l.b16 %v3755
        %v4275 = vunpack.c.l.b16 %v3756
        %v4276 = vunpack.c.l.b16 %v3757
        %v4277 = vunpack.c.l.b16 %v3758
        %v4278 = vunpack.c.l.b16 %v3759
        %v4279 = vunpack.c.l.b16 %v3760
        %v4280 = vunpack.c.l.b16 %v3761
        %v4281 = vunpack.c.l.b16 %v3762
        %v4282 = vunpack.c.l.b16 %v3763
        %v4283 = vunpack.c.l.b16 %v3764
        %v4284 = vunpack.c.l.b16 %v3765
        %v4285 = vunpack.c.l.b16 %v3766
        %v4286 = vunpack.c.l.b16 %v3767
        %v4287 = vunpack.c.l.b16 %v3768
        %v4288 = vunpack.c.l.b16 %v3769
        %v4289 = vunpack.c.l.b16 %v3770
        %v4290 = vunpack.c.l.b16 %v3771
        %v4291 = vunpack.c.l.b16 %v3772
        %v4292 = vunpack.c.l.b16 %v3773
        %v4293 = vunpack.c.l.b16 %v3774
        %v4294 = vunpack.c.l.b16 %v3775
        %v4295 = vunpack.c.l.b16 %v3776
        %v4296 = vunpack.c.l.b16 %v3777
        %v4297 = vunpack.c.l.b16 %v3778
        %v4298 = vunpack.c.l.b16 %v3779
        %v4299 = vunpack.c.l.b16 %v3780
        %v4300 = vunpack.c.l.b16 %v3781
        %v4301 = vunpack.c.l.b16 %v3782
        %v4302 = vunpack.c.l.b16 %v3783
        %v4303 = vunpack.c.l.b16 %v3784
        %v4304 = vunpack.c.l.b16 %v3785
        %v4305 = vunpack.c.l.b16 %v3786
        %v4306 = vunpack.c.l.b16 %v3787
        %v4307 = vunpack.c.l.b16 %v3788
        %v4308 = vunpack.c.l.b16 %v3789
        %v4309 = vunpack.c.l.b16 %v3790
        %v4310 = vunpack.c.l.b16 %v3791
        %v4311 = vunpack.c.l.b16 %v3792
        %v4312 = vunpack.c.l.b16 %v3793
        %v4313 = vunpack.c.l.b16 %v3794
        %v4314 = vunpack.c.l.b16 %v3795
        %v4315 = vunpack.c.l.b16 %v3796
        %v4316 = vunpack.c.l.b16 %v3797
        %v4317 = vunpack.c.l.b16 %v3798
        %v4318 = vunpack.c.l.b16 %v3799
        %v4319 = vunpack.c.l.b16 %v3800
        %v4320 = vunpack.c.l.b16 %v3801
        %v4321 = vunpack.c.l.b16 %v3802
        %v4322 = vunpack.c.l.b16 %v3803
        %v4323 = vunpack.c.l.b16 %v3804
        %v4324 = vunpack.c.l.b16 %v3805
        %v4325 = vunpack.c.l.b16 %v3806
        %v4326 = vunpack.c.l.b16 %v3807
        %v4327 = vunpack.c.l.b16 %v3808
        %v4328 = vunpack.c.l.b16 %v3809
        %v4329 = vunpack.c.l.b16 %v3810
        %v4330 = vunpack.c.l.b16 %v3811
        %v4331 = vunpack.c.l.b16 %v3812
        %v4332 = vunpack.c.l.b16 %v3813
        %v4333 = vunpack.c.l.b16 %v3814
        %v4334 = vunpack.c.l.b16 %v3815
        %v4335 = vunpack.c.l.b16 %v3816
        %v4336 = vunpack.c.l.b16 %v3817
        %v4337 = vunpack.c.l.b16 %v3818
        %v4338 = vunpack.c.l.b16 %v3819
        %v4339 = vunpack.c.l.b16 %v3820
        %v4340 = vunpack.c.l.b16 %v3821
        %v4341 = vunpack.c.l.b16 %v3822
        %v4342 = vunpack.c.l.b16 %v3823
        %v4343 = vunpack.c.l.b16 %v3824
        %v4344 = vunpack.c.l.b16 %v3825
        %v4345 = vunpack.c.l.b16 %v3826
        %v4346 = vunpack.c.l.b16 %v3827
        %v4347 = vunpack.c.l.b16 %v3828
        %v4348 = vunpack.c.l.b16 %v3829
        %v4349 = vunpack.c.l.b16 %v3830
        %v4350 = vunpack.c.l.b16 %v3831
        %v4351 = vunpack.c.l.b16 %v3832
        %v4352 = vunpack.c.l.b16 %v3833
        %v4353 = vunpack.c.l.b16 %v3834
        %v4354 = vunpack.c.l.b16 %v3835
        %v4355 = vunpack.c.l.b16 %v3836
        %v4356 = vunpack.c.l.b16 %v3837
        %v4357 = vunpack.c.l.b16 %v3838
        %v4358 = vunpack.c.l.b16 %v3839
        %v4359 = vunpack.c.l.b16 %v3840
        %v4360 = vunpack.c.l.b16 %v3841
        %v4361 = vunpack.c.l.b16 %v3842
        %v4362 = vunpack.c.l.b16 %v3843
        %v4363 = vunpack.c.l.b16 %v3844
        %v4364 = vunpack.c.l.b16 %v3845
        %v4365 = vunpack.c.l.b16 %v3846
        %v4366 = vunpack.c.l.b16 %v3847
        %v4367 = vunpack.c.l.b16 %v3848
        %v4368 = vunpack.c.l.b16 %v3849
        %v4369 = vunpack.c.l.b16 %v3850
        %v4370 = vunpack.c.l.b16 %v3851
        %v4371 = vunpack.c.l.b16 %v3852
        %v4372 = vunpack.c.l.b16 %v3853
        %v4373 = vunpack.c.l.b16 %v3854
        %v4374 = vunpack.c.l.b16 %v3855
        %v4375 = vunpack.c.l.b16 %v3856
        %v4376 = vunpack.c.l.b16 %v3857
        %v4377 = vunpack.c.l.b16 %v3858
        %v4378 = vunpack.c.l.b16 %v3859
        %v4379 = vunpack.c.l.b16 %v3860
        %v4380 = vunpack.c.l.b16 %v3861
        %v4381 = vunpack.c.l.b16 %v3862
        %v4382 = vunpack.c.l.b16 %v3863
        %v4383 = vunpack.c.l.b16 %v3864
        %v4384 = vunpack.c.l.b16 %v3865
        %v4385 = vunpack.c.l.b16 %v3866
        %v4386 = vunpack.c.l.b16 %v3867
        %v4387 = vunpack.c.l.b16 %v3868
        %v4388 = vunpack.c.l.b16 %v3869
        %v4389 = vunpack.c.l.b16 %v3870
        %v4390 = vunpack.c.l.b16 %v3871
        %v4391 = vunpack.c.l.b16 %v3872
        %v4392 = vunpack.c.l.b16 %v3873
        %v4393 = vunpack.c.l.b16 %v3874
        %v4394 = vunpack.c.l.b16 %v3875
        %v4395 = vunpack.c.l.b16 %v3876
        %v4396 = vunpack.c.l.b16 %v3877
        %v4397 = vunpack.c.l.b16 %v3878
        %v4398 = vunpack.c.l.b16 %v3879
        %v4399 = vunpack.c.l.b16 %v3880
        %v4400 = vunpack.c.l.b16 %v3881
        %v4401 = vunpack.c.l.b16 %v3882
        %v4402 = vunpack.c.l.b16 %v3883
        %v4403 = vunpack.c.l.b16 %v3884
        %v4404 = vunpack.c.l.b16 %v3885
        %v4405 = vunpack.c.l.b16 %v3886
        %v4406 = vunpack.c.l.b16 %v3887
        %v4407 = vunpack.c.l.b16 %v3888
        %v4408 = vunpack.c.l.b16 %v3889
        %v4409 = vunpack.c.l.b16 %v3890
        %v4410 = vunpack.c.l.b16 %v3891
        %v4411 = vunpack.c.l.b16 %v3892
        %v4412 = vunpack.c.l.b16 %v3893
        %v4413 = vunpack.c.l.b16 %v3894
        %v4414 = vunpack.c.l.b16 %v3895
        %v4415 = vunpack.c.l.b16 %v3896
        %v4416 = vunpack.c.l.b16 %v3897
        %v4417 = vunpack.c.l.b16 %v3898
        %v4418 = vunpack.c.l.b16 %v3899
        %v4419 = vunpack.c.l.b16 %v3900
        %v4420 = vunpack.c.l.b16 %v3901
        %v4421 = vunpack.c.l.b16 %v3902
        %v4422 = vunpack.c.l.b16 %v3903
        %v4423 = vunpack.c.l.b16 %v3904
        %v4424 = vunpack.c.l.b16 %v3905
        %v4425 = vunpack.c.l.b16 %v3906
        %v4426 = vunpack.c.l.b16 %v3907
        %v4427 = vunpack.c.l.b16 %v3908
        %v4428 = vunpack.c.l.b16 %v3909
        %v4429 = vunpack.c.l.b16 %v3910
        %v4430 = vunpack.c.l.b16 %v3911
        %v4431 = vunpack.c.l.b16 %v3912
        %v4432 = vunpack.c.l.b16 %v3913
        %v4433 = vunpack.c.l.b16 %v3914
        %v4434 = vunpack.c.l.b16 %v3915
        %v4435 = vunpack.c.l.b16 %v3916
        %v4436 = vunpack.c.l.b16 %v3917
        %v4437 = vunpack.c.l.b16 %v3918
        %v4438 = vunpack.c.l.b16 %v3919
        %v4439 = vunpack.c.l.b16 %v3920
        %v4440 = vunpack.c.l.b16 %v3921
        %v4441 = vunpack.c.l.b16 %v3922
        %v4442 = vunpack.c.l.b16 %v3923
        %v4443 = vunpack.c.l.b16 %v3924
        %v4444 = vunpack.c.l.b16 %v3925
        %v4445 = vunpack.c.l.b16 %v3926
        %v4446 = vunpack.c.l.b16 %v3927
        %v4447 = vunpack.c.l.b16 %v3928
        %v4448 = vunpack.c.l.b16 %v3929
        %v4449 = vunpack.c.l.b16 %v3930
        %v4450 = vunpack.c.l.b16 %v3931
        %v4451 = vunpack.c.l.b16 %v3932
        %v4452 = vunpack.c.l.b16 %v3933
        %v4453 = vunpack.c.l.b16 %v3934
        %v4454 = vunpack.c.l.b16 %v3935
        %v4455 = vunpack.c.l.b16 %v3936
        %v4456 = vunpack.c.l.b16 %v3937
        %v4457 = vunpack.c.l.b16 %v3938
        %v4458 = vunpack.c.l.b16 %v3939
        %v4459 = vunpack.c.l.b16 %v3940
        %v4460 = vunpack.c.l.b16 %v3941
        %v4461 = vunpack.c.l.b16 %v3942
        %v4462 = vunpack.c.l.b16 %v3943
        %v4463 = vunpack.c.l.b16 %v3944
        %v4464 = vunpack.c.l.b16 %v3945
        %v4465 = vunpack.c.l.b16 %v3946
        %v4466 = vunpack.c.l.b16 %v3947
        %v4467 = vunpack.c.l.b16 %v3948
        %v4468 = vunpack.c.l.b16 %v3949
        %v4469 = vunpack.c.l.b16 %v3950
        %v4470 = vunpack.c.l.b16 %v3951
        %v4471 = vunpack.c.l.b16 %v3952
        %v4472 = vunpack.c.l.b16 %v3953
        %v4473 = vunpack.c.l.b16 %v3954
        %v4474 = vunpack.c.l.b16 %v3955
        %v4475 = vunpack.c.l.b16 %v3956
        %v4476 = vunpack.c.l.b16 %v3957
        %v4477 = vunpack.c.l.b16 %v3958
        %v4478 = vunpack.c.l.b16 %v3959
        %v4479 = vunpack.c.l.b16 %v3960
        %v4480 = vunpack.c.l.b16 %v3961
        %v4481 = vunpack.c.l.b16 %v3962
        %v4482 = vunpack.c.l.b16 %v3963
        %v4483 = vunpack.c.l.b16 %v3964
        %v4484 = vunpack.c.l.b16 %v3965
        %v4485 = vunpack.c.l.b16 %v3966
        %v4486 = vunpack.c.l.b16 %v3967
        %v4487 = vunpack.c.l.b16 %v3968
        %v4488 = vunpack.c.l.b16 %v3969
        %v4489 = vunpack.c.l.b16 %v3970
        %v4490 = vunpack.c.l.b16 %v3971
        %v4491 = vunpack.c.l.b16 %v3972
        %v4492 = vunpack.c.l.b16 %v3973
        %v4493 = vunpack.c.l.b16 %v3974
        %v4494 = vunpack.c.l.b16 %v3975
        %v4495 = vunpack.c.l.b16 %v3976
        %v4496 = vunpack.c.l.b16 %v3977
        %v4497 = vunpack.c.l.b16 %v3978
        %v4498 = vunpack.c.l.b16 %v3979
        %v4499 = vunpack.c.l.b16 %v3980
        %v4500 = vunpack.c.l.b16 %v3981
        %v4501 = vunpack.c.l.b16 %v3982
        %v4502 = vunpack.c.l.b16 %v3983
        %v4503 = vunpack.c.l.b16 %v3984
        %v4504 = vunpack.c.l.b16 %v3985
        %v4505 = vunpack.c.l.b16 %v3986
        %v4506 = vunpack.c.l.b16 %v3987
        %v4507 = vunpack.c.l.b16 %v3988
        %v4508 = vunpack.c.l.b16 %v3989
        %v4509 = vunpack.c.l.b16 %v3990
        %v4510 = vunpack.c.l.b16 %v3991
        %v4511 = vunpack.c.l.b16 %v3992
        %v4512 = vunpack.c.l.b16 %v3993
        %v4513 = vunpack.c.l.b16 %v3994
        %v4514 = vunpack.c.l.b16 %v3995
        %v4515 = vunpack.c.l.b16 %v3996
        %v4516 = vunpack.c.l.b16 %v3997
        %v4517 = vunpack.c.l.b16 %v3998
        %v4518 = vunpack.c.l.b16 %v3999
        %v4519 = vunpack.c.l.b16 %v4000
        %v4520 = vunpack.c.l.b16 %v4001
        %v4521 = vunpack.c.l.b16 %v4002
        %v4522 = vunpack.c.l.b16 %v4003
        %v4523 = vunpack.c.l.b16 %v4004
        %v4524 = vunpack.c.l.b16 %v4005
        %v4525 = vunpack.c.l.b16 %v4006
        %v4526 = vunpack.c.l.b16 %v4007
        %v4527 = vunpack.c.l.b16 %v4008
        %v4528 = vunpack.c.l.b16 %v4009
        %v4529 = vpack.c.b16 %v4274, %v4273
        %v4530 = vpack.c.b16 %v4276, %v4275
        %v4531 = vpack.c.b16 %v4278, %v4277
        %v4532 = vpack.c.b16 %v4280, %v4279
        %v4533 = vpack.c.b16 %v4282, %v4281
        %v4534 = vpack.c.b16 %v4284, %v4283
        %v4535 = vpack.c.b16 %v4286, %v4285
        %v4536 = vpack.c.b16 %v4288, %v4287
        %v4537 = vpack.c.b16 %v4290, %v4289
        %v4538 = vpack.c.b16 %v4292, %v4291
        %v4539 = vpack.c.b16 %v4294, %v4293
        %v4540 = vpack.c.b16 %v4296, %v4295
        %v4541 = vpack.c.b16 %v4298, %v4297
        %v4542 = vpack.c.b16 %v4300, %v4299
        %v4543 = vpack.c.b16 %v4302, %v4301
        %v4544 = vpack.c.b16 %v4304, %v4303
        %v4545 = vpack.c.b16 %v4306, %v4305
        %v4546 = vpack.c.b16 %v4308, %v4307
        %v4547 = vpack.c.b16 %v4310, %v4309
        %v4548 = vpack.c.b16 %v4312, %v4311
        %v4549 = vpack.c.b16 %v4314, %v4313
        %v4550 = vpack.c.b16 %v4316, %v4315
        %v4551 = vpack.c.b16 %v4318, %v4317
        %v4552 = vpack.c.b16 %v4320, %v4319
        %v4553 = vpack.c.b16 %v4322, %v4321
        %v4554 = vpack.c.b16 %v4324, %v4323
        %v4555 = vpack.c.b16 %v4326, %v4325
        %v4556 = vpack.c.b16 %v4328, %v4327
        %v4557 = vpack.c.b16 %v4330, %v4329
        %v4558 = vpack.c.b16 %v4332, %v4331
        %v4559 = vpack.c.b16 %v4334, %v4333
        %v4560 = vpack.c.b16 %v4336, %v4335
        %v4561 = vpack.c.b16 %v4338, %v4337
        %v4562 = vpack.c.b16 %v4340, %v4339
        %v4563 = vpack.c.b16 %v4342, %v4341
        %v4564 = vpack.c.b16 %v4344, %v4343
        %v4565 = vpack.c.b16 %v4346, %v4345
        %v4566 = vpack.c.b16 %v4348, %v4347
        %v4567 = vpack.c.b16 %v4350, %v4349
        %v4568 = vpack.c.b16 %v4352, %v4351
        %v4569 = vpack.c.b16 %v4354, %v4353
        %v4570 = vpack.c.b16 %v4356, %v4355
        %v4571 = vpack.c.b16 %v4358, %v4357
        %v4572 = vpack.c.b16 %v4360, %v4359
        %v4573 = vpack.c.b16 %v4362, %v4361
        %v4574 = vpack.c.b16 %v4364, %v4363
        %v4575 = vpack.c.b16 %v4366, %v4365
        %v4576 = vpack.c.b16 %v4368, %v4367
        %v4577 = vpack.c.b16 %v4370, %v4369
        %v4578 = vpack.c.b16 %v4372, %v4371
        %v4579 = vpack.c.b16 %v4374, %v4373
        %v4580 = vpack.c.b16 %v4376, %v4375
        %v4581 = vpack.c.b16 %v4378, %v4377
        %v4582 = vpack.c.b16 %v4380, %v4379
        %v4583 = vpack.c.b16 %v4382, %v4381
        %v4584 = vpack.c.b16 %v4384, %v4383
        %v4585 = vpack.c.b16 %v4386, %v4385
        %v4586 = vpack.c.b16 %v4388, %v4387
        %v4587 = vpack.c.b16 %v4390, %v4389
        %v4588 = vpack.c.b16 %v4392, %v4391
        %v4589 = vpack.c.b16 %v4394, %v4393
        %v4590 = vpack.c.b16 %v4396, %v4395
        %v4591 = vpack.c.b16 %v4398, %v4397
        %v4592 = vpack.c.b16 %v4400, %v4399
        %v4593 = vpack.c.b16 %v4402, %v4401
        %v4594 = vpack.c.b16 %v4404, %v4403
        %v4595 = vpack.c.b16 %v4406, %v4405
        %v4596 = vpack.c.b16 %v4408, %v4407
        %v4597 = vpack.c.b16 %v4410, %v4409
        %v4598 = vpack.c.b16 %v4412, %v4411
        %v4599 = vpack.c.b16 %v4414, %v4413
        %v4600 = vpack.c.b16 %v4416, %v4415
        %v4601 = vpack.c.b16 %v4418, %v4417
        %v4602 = vpack.c.b16 %v4420, %v4419
        %v4603 = vpack.c.b16 %v4422, %v4421
        %v4604 = vpack.c.b16 %v4424, %v4423
        %v4605 = vpack.c.b16 %v4426, %v4425
        %v4606 = vpack.c.b16 %v4428, %v4427
        %v4607 = vpack.c.b16 %v4430, %v4429
        %v4608 = vpack.c.b16 %v4432, %v4431
        %v4609 = vpack.c.b16 %v4434, %v4433
        %v4610 = vpack.c.b16 %v4436, %v4435
        %v4611 = vpack.c.b16 %v4438, %v4437
        %v4612 = vpack.c.b16 %v4440, %v4439
        %v4613 = vpack.c.b16 %v4442, %v4441
        %v4614 = vpack.c.b16 %v4444, %v4443
        %v4615 = vpack.c.b16 %v4446, %v4445
        %v4616 = vpack.c.b16 %v4448, %v4447
        %v4617 = vpack.c.b16 %v4450, %v4449
        %v4618 = vpack.c.b16 %v4452, %v4451
        %v4619 = vpack.c.b16 %v4454, %v4453
        %v4620 = vpack.c.b16 %v4456, %v4455
        %v4621 = vpack.c.b16 %v4458, %v4457
        %v4622 = vpack.c.b16 %v4460, %v4459
        %v4623 = vpack.c.b16 %v4462, %v4461
        %v4624 = vpack.c.b16 %v4464, %v4463
        %v4625 = vpack.c.b16 %v4466, %v4465
        %v4626 = vpack.c.b16 %v4468, %v4467
        %v4627 = vpack.c.b16 %v4470, %v4469
        %v4628 = vpack.c.b16 %v4472, %v4471
        %v4629 = vpack.c.b16 %v4474, %v4473
        %v4630 = vpack.c.b16 %v4476, %v4475
        %v4631 = vpack.c.b16 %v4478, %v4477
        %v4632 = vpack.c.b16 %v4480, %v4479
        %v4633 = vpack.c.b16 %v4482, %v4481
        %v4634 = vpack.c.b16 %v4484, %v4483
        %v4635 = vpack.c.b16 %v4486, %v4485
        %v4636 = vpack.c.b16 %v4488, %v4487
        %v4637 = vpack.c.b16 %v4490, %v4489
        %v4638 = vpack.c.b16 %v4492, %v4491
        %v4639 = vpack.c.b16 %v4494, %v4493
        %v4640 = vpack.c.b16 %v4496, %v4495
        %v4641 = vpack.c.b16 %v4498, %v4497
        %v4642 = vpack.c.b16 %v4500, %v4499
        %v4643 = vpack.c.b16 %v4502, %v4501
        %v4644 = vpack.c.b16 %v4504, %v4503
        %v4645 = vpack.c.b16 %v4506, %v4505
        %v4646 = vpack.c.b16 %v4508, %v4507
        %v4647 = vpack.c.b16 %v4510, %v4509
        %v4648 = vpack.c.b16 %v4512, %v4511
        %v4649 = vpack.c.b16 %v4514, %v4513
        %v4650 = vpack.c.b16 %v4516, %v4515
        %v4651 = vpack.c.b16 %v4518, %v4517
        %v4652 = vpack.c.b16 %v4520, %v4519
        %v4653 = vpack.c.b16 %v4522, %v4521
        %v4654 = vpack.c.b16 %v4524, %v4523
        %v4655 = vpack.c.b16 %v4526, %v4525
        %v4656 = vpack.c.b16 %v4528, %v4527
        %4785 = vmatprep.subr.bf16.mxu0 0
        %4786 = vmatpush1.bf16.msra.mxu0 %v4529
        %4787 = vmatprep.subr.bf16.mxu0 0
        %4788 = vmatpush1.bf16.msra.mxu0 %v4530
        %4789 = vmatprep.subr.bf16.mxu0 0
        %4790 = vmatpush1.bf16.msra.mxu0 %v4531
        %4791 = vmatprep.subr.bf16.mxu0 0
        %4792 = vmatpush1.bf16.msra.mxu0 %v4532
        %4793 = vmatprep.subr.bf16.mxu0 0
        %4794 = vmatpush1.bf16.msra.mxu0 %v4533
        %4795 = vmatprep.subr.bf16.mxu0 0
        %4796 = vmatpush1.bf16.msra.mxu0 %v4534
        %4797 = vmatprep.subr.bf16.mxu0 0
        %4798 = vmatpush1.bf16.msra.mxu0 %v4535
        %4799 = vmatprep.subr.bf16.mxu0 0
        %4800 = vmatpush1.bf16.msra.mxu0 %v4536
        %4801 = vmatprep.subr.bf16.mxu0 0
        %4802 = vmatpush1.bf16.msra.mxu0 %v4537
        %4803 = vmatprep.subr.bf16.mxu0 0
        %4804 = vmatpush1.bf16.msra.mxu0 %v4538
        %4805 = vmatprep.subr.bf16.mxu0 0
        %4806 = vmatpush1.bf16.msra.mxu0 %v4539
        %4807 = vmatprep.subr.bf16.mxu0 0
        %4808 = vmatpush1.bf16.msra.mxu0 %v4540
        %4809 = vmatprep.subr.bf16.mxu0 0
        %4810 = vmatpush1.bf16.msra.mxu0 %v4541
        %4811 = vmatprep.subr.bf16.mxu0 0
        %4812 = vmatpush1.bf16.msra.mxu0 %v4542
        %4813 = vmatprep.subr.bf16.mxu0 0
        %4814 = vmatpush1.bf16.msra.mxu0 %v4543
        %4815 = vmatprep.subr.bf16.mxu0 0
        %4816 = vmatpush1.bf16.msra.mxu0 %v4544
        %4817 = vmatprep.mubr.bf16.mxu0 %v3739
        %4818 = vmatmul.mubr.bf16.gmra.mrb[0].mxu0 %v3738
        %v4819 = vpop.f32.mrb[0].mxu0
        %v4820 = vadd.f32 %v4015, %v4819
        %v4821 = vpop.f32.mrb[0].mxu0
        %v4822 = vpop.f32.mrb[0].mxu0
        %v4823 = vadd.f32 %v4015, %v4822
        %v4824 = vpop.f32.mrb[0].mxu0
        %4825 = vdwg.mxu0
        %4826 = vmatprep.subr.bf16.mxu0 0
        %4827 = vmatpush1.bf16.msra.mxu0 %v4545
        %4828 = vmatprep.subr.bf16.mxu0 0
        %4829 = vmatpush1.bf16.msra.mxu0 %v4546
        %4830 = vmatprep.subr.bf16.mxu0 0
        %4831 = vmatpush1.bf16.msra.mxu0 %v4547
        %4832 = vmatprep.subr.bf16.mxu0 0
        %4833 = vmatpush1.bf16.msra.mxu0 %v4548
        %4834 = vmatprep.subr.bf16.mxu0 0
        %4835 = vmatpush1.bf16.msra.mxu0 %v4549
        %4836 = vmatprep.subr.bf16.mxu0 0
        %4837 = vmatpush1.bf16.msra.mxu0 %v4550
        %4838 = vmatprep.subr.bf16.mxu0 0
        %4839 = vmatpush1.bf16.msra.mxu0 %v4551
        %4840 = vmatprep.subr.bf16.mxu0 0
        %4841 = vmatpush1.bf16.msra.mxu0 %v4552
        %4842 = vmatprep.subr.bf16.mxu0 0
        %4843 = vmatpush1.bf16.msra.mxu0 %v4553
        %4844 = vmatprep.subr.bf16.mxu0 0
        %4845 = vmatpush1.bf16.msra.mxu0 %v4554
        %4846 = vmatprep.subr.bf16.mxu0 0
        %4847 = vmatpush1.bf16.msra.mxu0 %v4555
        %4848 = vmatprep.subr.bf16.mxu0 0
        %4849 = vmatpush1.bf16.msra.mxu0 %v4556
        %4850 = vmatprep.subr.bf16.mxu0 0
        %4851 = vmatpush1.bf16.msra.mxu0 %v4557
        %4852 = vmatprep.subr.bf16.mxu0 0
        %4853 = vmatpush1.bf16.msra.mxu0 %v4558
        %4854 = vmatprep.subr.bf16.mxu0 0
        %4855 = vmatpush1.bf16.msra.mxu0 %v4559
        %4856 = vmatprep.subr.bf16.mxu0 0
        %4857 = vmatpush1.bf16.msra.mxu0 %v4560
        %4858 = vmatprep.mubr.bf16.mxu0 %v3741
        %4859 = vmatmul.mubr.bf16.gmra.mrb[0].mxu0 %v3740
        %v4860 = vpop.f32.mrb[0].mxu0
        %v4861 = vadd.f32 %v4820, %v4860
        %v4862 = vpop.f32.mrb[0].mxu0
        %v4863 = vpop.f32.mrb[0].mxu0
        %v4864 = vadd.f32 %v4823, %v4863
        %v4865 = vpop.f32.mrb[0].mxu0
        %4866 = vdwg.mxu0
        %4867 = vmatprep.subr.bf16.mxu0 0
        %4868 = vmatpush1.bf16.msra.mxu0 %v4561
        %4869 = vmatprep.subr.bf16.mxu0 0
        %4870 = vmatpush1.bf16.msra.mxu0 %v4562
        %4871 = vmatprep.subr.bf16.mxu0 0
        %4872 = vmatpush1.bf16.msra.mxu0 %v4563
        %4873 = vmatprep.subr.bf16.mxu0 0
        %4874 = vmatpush1.bf16.msra.mxu0 %v4564
        %4875 = vmatprep.subr.bf16.mxu0 0
        %4876 = vmatpush1.bf16.msra.mxu0 %v4565
        %4877 = vmatprep.subr.bf16.mxu0 0
        %4878 = vmatpush1.bf16.msra.mxu0 %v4566
        %4879 = vmatprep.subr.bf16.mxu0 0
        %4880 = vmatpush1.bf16.msra.mxu0 %v4567
        %4881 = vmatprep.subr.bf16.mxu0 0
        %4882 = vmatpush1.bf16.msra.mxu0 %v4568
        %4883 = vmatprep.subr.bf16.mxu0 0
        %4884 = vmatpush1.bf16.msra.mxu0 %v4569
        %4885 = vmatprep.subr.bf16.mxu0 0
        %4886 = vmatpush1.bf16.msra.mxu0 %v4570
        %4887 = vmatprep.subr.bf16.mxu0 0
        %4888 = vmatpush1.bf16.msra.mxu0 %v4571
        %4889 = vmatprep.subr.bf16.mxu0 0
        %4890 = vmatpush1.bf16.msra.mxu0 %v4572
        %4891 = vmatprep.subr.bf16.mxu0 0
        %4892 = vmatpush1.bf16.msra.mxu0 %v4573
        %4893 = vmatprep.subr.bf16.mxu0 0
        %4894 = vmatpush1.bf16.msra.mxu0 %v4574
        %4895 = vmatprep.subr.bf16.mxu0 0
        %4896 = vmatpush1.bf16.msra.mxu0 %v4575
        %4897 = vmatprep.subr.bf16.mxu0 0
        %4898 = vmatpush1.bf16.msra.mxu0 %v4576
        %4899 = vmatprep.mubr.bf16.mxu0 %v3743
        %4900 = vmatmul.mubr.bf16.gmra.mrb[0].mxu0 %v3742
        %v4901 = vpop.f32.mrb[0].mxu0
        %v4902 = vadd.f32 %v4861, %v4901
        %v4903 = vpop.f32.mrb[0].mxu0
        %v4904 = vpop.f32.mrb[0].mxu0
        %v4905 = vadd.f32 %v4864, %v4904
        %v4906 = vpop.f32.mrb[0].mxu0
        %4907 = vdwg.mxu0
        %4908 = vmatprep.subr.bf16.mxu0 0
        %4909 = vmatpush1.bf16.msra.mxu0 %v4577
        %4910 = vmatprep.subr.bf16.mxu0 0
        %4911 = vmatpush1.bf16.msra.mxu0 %v4578
        %4912 = vmatprep.subr.bf16.mxu0 0
        %4913 = vmatpush1.bf16.msra.mxu0 %v4579
        %4914 = vmatprep.subr.bf16.mxu0 0
        %4915 = vmatpush1.bf16.msra.mxu0 %v4580
        %4916 = vmatprep.subr.bf16.mxu0 0
        %4917 = vmatpush1.bf16.msra.mxu0 %v4581
        %4918 = vmatprep.subr.bf16.mxu0 0
        %4919 = vmatpush1.bf16.msra.mxu0 %v4582
        %4920 = vmatprep.subr.bf16.mxu0 0
        %4921 = vmatpush1.bf16.msra.mxu0 %v4583
        %4922 = vmatprep.subr.bf16.mxu0 0
        %4923 = vmatpush1.bf16.msra.mxu0 %v4584
        %4924 = vmatprep.subr.bf16.mxu0 0
        %4925 = vmatpush1.bf16.msra.mxu0 %v4585
        %4926 = vmatprep.subr.bf16.mxu0 0
        %4927 = vmatpush1.bf16.msra.mxu0 %v4586
        %4928 = vmatprep.subr.bf16.mxu0 0
        %4929 = vmatpush1.bf16.msra.mxu0 %v4587
        %4930 = vmatprep.subr.bf16.mxu0 0
        %4931 = vmatpush1.bf16.msra.mxu0 %v4588
        %4932 = vmatprep.subr.bf16.mxu0 0
        %4933 = vmatpush1.bf16.msra.mxu0 %v4589
        %4934 = vmatprep.subr.bf16.mxu0 0
        %4935 = vmatpush1.bf16.msra.mxu0 %v4590
        %4936 = vmatprep.subr.bf16.mxu0 0
        %4937 = vmatpush1.bf16.msra.mxu0 %v4591
        %4938 = vmatprep.subr.bf16.mxu0 0
        %4939 = vmatpush1.bf16.msra.mxu0 %v4592
        %4940 = vmatprep.mubr.bf16.mxu0 %v3745
        %4941 = vmatmul.mubr.bf16.gmra.mrb[0].mxu0 %v3744
        %v4942 = vpop.f32.mrb[0].mxu0
        %v4943 = vadd.f32 %v4902, %v4942
        %v4944 = vpop.f32.mrb[0].mxu0
        %v4945 = vpop.f32.mrb[0].mxu0
        %v4946 = vadd.f32 %v4905, %v4945
        %v4947 = vpop.f32.mrb[0].mxu0
        %4948 = vdwg.mxu0
        %4949 = vmatprep.subr.bf16.mxu0 0
        %4950 = vmatpush1.bf16.msra.mxu0 %v4593
        %4951 = vmatprep.subr.bf16.mxu0 0
        %4952 = vmatpush1.bf16.msra.mxu0 %v4594
        %4953 = vmatprep.subr.bf16.mxu0 0
        %4954 = vmatpush1.bf16.msra.mxu0 %v4595
        %4955 = vmatprep.subr.bf16.mxu0 0
        %4956 = vmatpush1.bf16.msra.mxu0 %v4596
        %4957 = vmatprep.subr.bf16.mxu0 0
        %4958 = vmatpush1.bf16.msra.mxu0 %v4597
        %4959 = vmatprep.subr.bf16.mxu0 0
        %4960 = vmatpush1.bf16.msra.mxu0 %v4598
        %4961 = vmatprep.subr.bf16.mxu0 0
        %4962 = vmatpush1.bf16.msra.mxu0 %v4599
        %4963 = vmatprep.subr.bf16.mxu0 0
        %4964 = vmatpush1.bf16.msra.mxu0 %v4600
        %4965 = vmatprep.subr.bf16.mxu0 0
        %4966 = vmatpush1.bf16.msra.mxu0 %v4601
        %4967 = vmatprep.subr.bf16.mxu0 0
        %4968 = vmatpush1.bf16.msra.mxu0 %v4602
        %4969 = vmatprep.subr.bf16.mxu0 0
        %4970 = vmatpush1.bf16.msra.mxu0 %v4603
        %4971 = vmatprep.subr.bf16.mxu0 0
        %4972 = vmatpush1.bf16.msra.mxu0 %v4604
        %4973 = vmatprep.subr.bf16.mxu0 0
        %4974 = vmatpush1.bf16.msra.mxu0 %v4605
        %4975 = vmatprep.subr.bf16.mxu0 0
        %4976 = vmatpush1.bf16.msra.mxu0 %v4606
        %4977 = vmatprep.subr.bf16.mxu0 0
        %4978 = vmatpush1.bf16.msra.mxu0 %v4607
        %4979 = vmatprep.subr.bf16.mxu0 0
        %4980 = vmatpush1.bf16.msra.mxu0 %v4608
        %4981 = vmatprep.mubr.bf16.mxu0 %v3747
        %4982 = vmatmul.mubr.bf16.gmra.mrb[0].mxu0 %v3746
        %v4983 = vpop.f32.mrb[0].mxu0
        %v4984 = vadd.f32 %v4943, %v4983
        %v4985 = vpop.f32.mrb[0].mxu0
        %v4986 = vpop.f32.mrb[0].mxu0
        %v4987 = vadd.f32 %v4946, %v4986
        %v4988 = vpop.f32.mrb[0].mxu0
        %4989 = vdwg.mxu0
        %4990 = vmatprep.subr.bf16.mxu0 0
        %4991 = vmatpush1.bf16.msra.mxu0 %v4609
        %4992 = vmatprep.subr.bf16.mxu0 0
        %4993 = vmatpush1.bf16.msra.mxu0 %v4610
        %4994 = vmatprep.subr.bf16.mxu0 0
        %4995 = vmatpush1.bf16.msra.mxu0 %v4611
        %4996 = vmatprep.subr.bf16.mxu0 0
        %4997 = vmatpush1.bf16.msra.mxu0 %v4612
        %4998 = vmatprep.subr.bf16.mxu0 0
        %4999 = vmatpush1.bf16.msra.mxu0 %v4613
        %5000 = vmatprep.subr.bf16.mxu0 0
        %5001 = vmatpush1.bf16.msra.mxu0 %v4614
        %5002 = vmatprep.subr.bf16.mxu0 0
        %5003 = vmatpush1.bf16.msra.mxu0 %v4615
        %5004 = vmatprep.subr.bf16.mxu0 0
        %5005 = vmatpush1.bf16.msra.mxu0 %v4616
        %5006 = vmatprep.subr.bf16.mxu0 0
        %5007 = vmatpush1.bf16.msra.mxu0 %v4617
        %5008 = vmatprep.subr.bf16.mxu0 0
        %5009 = vmatpush1.bf16.msra.mxu0 %v4618
        %5010 = vmatprep.subr.bf16.mxu0 0
        %5011 = vmatpush1.bf16.msra.mxu0 %v4619
        %5012 = vmatprep.subr.bf16.mxu0 0
        %5013 = vmatpush1.bf16.msra.mxu0 %v4620
        %5014 = vmatprep.subr.bf16.mxu0 0
        %5015 = vmatpush1.bf16.msra.mxu0 %v4621
        %5016 = vmatprep.subr.bf16.mxu0 0
        %5017 = vmatpush1.bf16.msra.mxu0 %v4622
        %5018 = vmatprep.subr.bf16.mxu0 0
        %5019 = vmatpush1.bf16.msra.mxu0 %v4623
        %5020 = vmatprep.subr.bf16.mxu0 0
        %5021 = vmatpush1.bf16.msra.mxu0 %v4624
        %5022 = vmatprep.mubr.bf16.mxu0 %v3749
        %5023 = vmatmul.mubr.bf16.gmra.mrb[0].mxu0 %v3748
        %v5024 = vpop.f32.mrb[0].mxu0
        %v5025 = vadd.f32 %v4984, %v5024
        %v5026 = vpop.f32.mrb[0].mxu0
        %v5027 = vpop.f32.mrb[0].mxu0
        %v5028 = vadd.f32 %v4987, %v5027
        %v5029 = vpop.f32.mrb[0].mxu0
        %5030 = vdwg.mxu0
        %5031 = vmatprep.subr.bf16.mxu0 0
        %5032 = vmatpush1.bf16.msra.mxu0 %v4625
        %5033 = vmatprep.subr.bf16.mxu0 0
        %5034 = vmatpush1.bf16.msra.mxu0 %v4626
        %5035 = vmatprep.subr.bf16.mxu0 0
        %5036 = vmatpush1.bf16.msra.mxu0 %v4627
        %5037 = vmatprep.subr.bf16.mxu0 0
        %5038 = vmatpush1.bf16.msra.mxu0 %v4628
        %5039 = vmatprep.subr.bf16.mxu0 0
        %5040 = vmatpush1.bf16.msra.mxu0 %v4629
        %5041 = vmatprep.subr.bf16.mxu0 0
        %5042 = vmatpush1.bf16.msra.mxu0 %v4630
        %5043 = vmatprep.subr.bf16.mxu0 0
        %5044 = vmatpush1.bf16.msra.mxu0 %v4631
        %5045 = vmatprep.subr.bf16.mxu0 0
        %5046 = vmatpush1.bf16.msra.mxu0 %v4632
        %5047 = vmatprep.subr.bf16.mxu0 0
        %5048 = vmatpush1.bf16.msra.mxu0 %v4633
        %5049 = vmatprep.subr.bf16.mxu0 0
        %5050 = vmatpush1.bf16.msra.mxu0 %v4634
        %5051 = vmatprep.subr.bf16.mxu0 0
        %5052 = vmatpush1.bf16.msra.mxu0 %v4635
        %5053 = vmatprep.subr.bf16.mxu0 0
        %5054 = vmatpush1.bf16.msra.mxu0 %v4636
        %5055 = vmatprep.subr.bf16.mxu0 0
        %5056 = vmatpush1.bf16.msra.mxu0 %v4637
        %5057 = vmatprep.subr.bf16.mxu0 0
        %5058 = vmatpush1.bf16.msra.mxu0 %v4638
        %5059 = vmatprep.subr.bf16.mxu0 0
        %5060 = vmatpush1.bf16.msra.mxu0 %v4639
        %5061 = vmatprep.subr.bf16.mxu0 0
        %5062 = vmatpush1.bf16.msra.mxu0 %v4640
        %5063 = vmatprep.mubr.bf16.mxu0 %v3751
        %5064 = vmatmul.mubr.bf16.gmra.mrb[0].mxu0 %v3750
        %v5065 = vpop.f32.mrb[0].mxu0
        %v5066 = vadd.f32 %v5025, %v5065
        %v5067 = vpop.f32.mrb[0].mxu0
        %v5068 = vpop.f32.mrb[0].mxu0
        %v5069 = vadd.f32 %v5028, %v5068
        %v5070 = vpop.f32.mrb[0].mxu0
        %5071 = vdwg.mxu0
        %5072 = vmatprep.subr.bf16.mxu0 0
        %5073 = vmatpush1.bf16.msra.mxu0 %v4641
        %5074 = vmatprep.subr.bf16.mxu0 0
        %5075 = vmatpush1.bf16.msra.mxu0 %v4642
        %5076 = vmatprep.subr.bf16.mxu0 0
        %5077 = vmatpush1.bf16.msra.mxu0 %v4643
        %5078 = vmatprep.subr.bf16.mxu0 0
        %5079 = vmatpush1.bf16.msra.mxu0 %v4644
        %5080 = vmatprep.subr.bf16.mxu0 0
        %5081 = vmatpush1.bf16.msra.mxu0 %v4645
        %5082 = vmatprep.subr.bf16.mxu0 0
        %5083 = vmatpush1.bf16.msra.mxu0 %v4646
        %5084 = vmatprep.subr.bf16.mxu0 0
        %5085 = vmatpush1.bf16.msra.mxu0 %v4647
        %5086 = vmatprep.subr.bf16.mxu0 0
        %5087 = vmatpush1.bf16.msra.mxu0 %v4648
        %5088 = vmatprep.subr.bf16.mxu0 0
        %5089 = vmatpush1.bf16.msra.mxu0 %v4649
        %5090 = vmatprep.subr.bf16.mxu0 0
        %5091 = vmatpush1.bf16.msra.mxu0 %v4650
        %5092 = vmatprep.subr.bf16.mxu0 0
        %5093 = vmatpush1.bf16.msra.mxu0 %v4651
        %5094 = vmatprep.subr.bf16.mxu0 0
        %5095 = vmatpush1.bf16.msra.mxu0 %v4652
        %5096 = vmatprep.subr.bf16.mxu0 0
        %5097 = vmatpush1.bf16.msra.mxu0 %v4653
        %5098 = vmatprep.subr.bf16.mxu0 0
        %5099 = vmatpush1.bf16.msra.mxu0 %v4654
        %5100 = vmatprep.subr.bf16.mxu0 0
        %5101 = vmatpush1.bf16.msra.mxu0 %v4655
        %5102 = vmatprep.subr.bf16.mxu0 0
        %5103 = vmatpush1.bf16.msra.mxu0 %v4656
        %5104 = vmatprep.mubr.bf16.mxu0 %v3753
        %5105 = vmatmul.mubr.bf16.gmra.mrb[0].mxu0 %v3752
        %v5106 = vpop.f32.mrb[0].mxu0
        %v5107 = vadd.f32 %v5066, %v5106
        %v5108 = vpop.f32.mrb[0].mxu0
        %v5109 = vpop.f32.mrb[0].mxu0
        %v5110 = vadd.f32 %v5069, %v5109
        %v5111 = vpop.f32.mrb[0].mxu0
        %5112 = vdwg.mxu0
        %v5113 = vadd.f32 %v2507, %v5107
        %v5114 = vadd.f32 %v2508, %v5110
        %v5115 = vld [vmem:[%s862] sm:$0x1]
        %v5116 = vld [vmem:[%s870] sm:$0x1]
        %5117 = vadd.xlane.f32.xlu0 %v5113
        %v5118 = vpop.xlane.xlu0 %5117
        %5119 = vadd.xlane.f32.xlu0 %v5114
        %v5120 = vpop.xlane.xlu0 %5119
        %v5121 = vmul.f32 %v5118, %v2470
        %v5122 = vmul.f32 %v5120, %v2470
        %v5123 = vmul.f32 %v5113, %v5113
        %v5124 = vmul.f32 %v5114, %v5114
        %5125 = vadd.xlane.f32.xlu0 %v5123
        %v5126 = vpop.xlane.xlu0 %5125
        %5127 = vadd.xlane.f32.xlu0 %v5124
        %v5128 = vpop.xlane.xlu0 %5127
        %v5129 = vmul.f32 %v5126, %v2470
        %v5130 = vmul.f32 %v5128, %v2470
        %v5131 = vmul.f32 %v5121, %v5121
        %v5132 = vmul.f32 %v5122, %v5122
        %v5133 = vsub.f32 %v5129, %v5131
        %v5134 = vsub.f32 %v5130, %v5132
        %v5135 = vsub.f32 %v5113, %v5121
        %v5136 = vsub.f32 %v5114, %v5122
        %v5137 = vadd.f32 %v5133, 1e-05
        %v5138 = vadd.f32 %v5134, 1e-05
        %v5139 = vrsqrt.pop %v5137
        %v5140 = vrsqrt.pop %v5138
        %v5141 = vmul.f32 %v5135, %v5139
        %v5142 = vmul.f32 %v5136, %v5140
        %v5144 = vlaneseq
        %v5145 = vshrl.u32 %v5144, 7
        %v5146 = vsub.s32 0, %v5145
        %v5147 = vrot.slane %v5115, %v5146
        %v5149 = vmul.f32 %v5141, %v5147
        %v5150 = vmul.f32 %v5142, %v5147
        %v5152 = vlaneseq
        %v5153 = vshrl.u32 %v5152, 7
        %v5154 = vsub.s32 0, %v5153
        %v5155 = vrot.slane %v5116, %v5154
        %v5157 = vadd.f32 %v5149, %v5155
        %v5158 = vadd.f32 %v5150, %v5155
        %5159 = vst [vmem:[#allocation2] sm:$0xff] %v5157
        %5160 = vst [vmem:[#allocation2 + $0x8] sm:$0xff] %v5158
        %p5161 = scmp.eq.s32.totalorder %s53, 1
        // Predicated region
        $region145: #{event_transformer_forward.1} parent=87 // pred_check
          %p5162 = pneg %p5161
        $region146: #{event_transformer_forward.1} parent=87 // pred_check_branch
          %5164 = sbr.rel (%p5162) target = $region148
        $region147: #{event_transformer_forward.1} parent=87 // pred_region
          %v5165 = vrot.slane %v5157, 4
          %v5166 = vadd.f32 %v5157, %v5165
          %v5167 = vrot.slane %v5166, 2
          %v5168 = vadd.f32 %v5166, %v5167
          %v5169 = vrot.slane %v5168, 1
          %v5170 = vadd.f32 %v5168, %v5169
          %v5171 = vrot.slane %v5158, 4
          %v5172 = vadd.f32 %v5158, %v5171
          %v5173 = vrot.slane %v5172, 2
          %v5174 = vadd.f32 %v5172, %v5173
          %v5175 = vrot.slane %v5174, 1
          %v5176 = vadd.f32 %v5174, %v5175
          %v5177 = vrcp.pop 8.0
          %v5178 = vmul.f32 %v5170, %v5177
          %v5179 = vmul.f32 %v5176, %v5177
          %v5180 = vpack.c.bf16 %v5178, %v5178
          %v5181 = vpack.c.bf16 %v5179, %v5179
          %v5182 = vld [vmem:[%s15] sm:$0xf]
          %v5183 = vld [vmem:[%s15 + $0x4] sm:$0xf]
          %v5184 = vld [vmem:[%s15 + $0x8] sm:$0xf]
          %v5185 = vld [vmem:[%s15 + $0xc] sm:$0xf]
          %v5186 = vld [vmem:[%s15 + $0x10] sm:$0xf]
          %v5187 = vld [vmem:[%s15 + $0x14] sm:$0xf]
          %v5188 = vld [vmem:[%s15 + $0x18] sm:$0xf]
          %v5189 = vld [vmem:[%s15 + $0x1c] sm:$0xf]
          %v5190 = vld [vmem:[%s15 + $0x20] sm:$0xf]
          %v5191 = vld [vmem:[%s15 + $0x24] sm:$0xf]
          %v5192 = vld [vmem:[%s15 + $0x28] sm:$0xf]
          %v5193 = vld [vmem:[%s15 + $0x2c] sm:$0xf]
          %v5194 = vld [vmem:[%s15 + $0x30] sm:$0xf]
          %v5195 = vld [vmem:[%s15 + $0x34] sm:$0xf]
          %v5196 = vld [vmem:[%s15 + $0x38] sm:$0xf]
          %v5197 = vld [vmem:[%s15 + $0x3c] sm:$0xf]
          %v5198 = vld [vmem:[#allocation23] sm:$0x1]
          %v5200 = vlaneseq
          %v5201 = vshrl.u32 %v5200, 7
          %v5202 = vsub.s32 0, %v5201
          %v5203 = vrot.slane %v5198, %v5202
          %v5207 = vunpack.c.l.b16 %v5180
          %v5208 = vunpack.c.l.b16 %v5181
          %vm5209 = vcmask 1041409
          %v5210 = vsel %vm5209, %v5208, %v5207
          %v5211 = vpack.c.b16 %v5210, %v5210
          %v5229 = vunpack.c.l.b16 %v5182
          %v5230 = vunpack.c.l.b16 %v5183
          %v5231 = vunpack.c.l.b16 %v5184
          %v5232 = vunpack.c.l.b16 %v5185
          %v5233 = vunpack.c.l.b16 %v5186
          %v5234 = vunpack.c.l.b16 %v5187
          %v5235 = vunpack.c.l.b16 %v5188
          %v5236 = vunpack.c.l.b16 %v5189
          %v5237 = vunpack.c.l.b16 %v5190
          %v5238 = vunpack.c.l.b16 %v5191
          %v5239 = vunpack.c.l.b16 %v5192
          %v5240 = vunpack.c.l.b16 %v5193
          %v5241 = vunpack.c.l.b16 %v5194
          %v5242 = vunpack.c.l.b16 %v5195
          %v5243 = vunpack.c.l.b16 %v5196
          %v5244 = vunpack.c.l.b16 %v5197
          %v5245 = vpack.c.b16 %v5230, %v5229
          %v5246 = vpack.c.b16 %v5232, %v5231
          %v5247 = vpack.c.b16 %v5234, %v5233
          %v5248 = vpack.c.b16 %v5236, %v5235
          %v5249 = vpack.c.b16 %v5238, %v5237
          %v5250 = vpack.c.b16 %v5240, %v5239
          %v5251 = vpack.c.b16 %v5242, %v5241
          %v5252 = vpack.c.b16 %v5244, %v5243
          %5261 = vmatprep.subr.bf16.mxu0 0
          %5262 = vmatpush1.bf16.msra.mxu0 %v5245
          %5263 = vmatprep.subr.bf16.mxu0 0
          %5264 = vmatpush1.bf16.msra.mxu0 %v5246
          %5265 = vmatprep.subr.bf16.mxu0 0
          %5266 = vmatpush1.bf16.msra.mxu0 %v5247
          %5267 = vmatprep.subr.bf16.mxu0 0
          %5268 = vmatpush1.bf16.msra.mxu0 %v5248
          %5269 = vmatprep.subr.bf16.mxu0 0
          %5270 = vmatpush1.bf16.msra.mxu0 %v5249
          %5271 = vmatprep.subr.bf16.mxu0 0
          %5272 = vmatpush1.bf16.msra.mxu0 %v5250
          %5273 = vmatprep.subr.bf16.mxu0 0
          %5274 = vmatpush1.bf16.msra.mxu0 %v5251
          %5275 = vmatprep.subr.bf16.mxu0 0
          %5276 = vmatpush1.bf16.msra.mxu0 %v5252
          %5277 = vmatprep.subr.bf16.mxu0 0
          %5278 = vmatpush1.bf16.msra.mxu0 0
          %5279 = vmatprep.subr.bf16.mxu0 0
          %5280 = vmatpush1.bf16.msra.mxu0 0
          %5281 = vmatprep.subr.bf16.mxu0 0
          %5282 = vmatpush1.bf16.msra.mxu0 0
          %5283 = vmatprep.subr.bf16.mxu0 0
          %5284 = vmatpush1.bf16.msra.mxu0 0
          %5285 = vmatprep.subr.bf16.mxu0 0
          %5286 = vmatpush1.bf16.msra.mxu0 0
          %5287 = vmatprep.subr.bf16.mxu0 0
          %5288 = vmatpush1.bf16.msra.mxu0 0
          %5289 = vmatprep.subr.bf16.mxu0 0
          %5290 = vmatpush1.bf16.msra.mxu0 0
          %5291 = vmatprep.subr.bf16.mxu0 0
          %5292 = vmatpush1.bf16.msra.mxu0 0
          %5293 = vmatprep.mubr.bf16.mxu0 0
          %5294 = vmatmul.mubr.bf16.gmra.mrb[0].mxu0 %v5211
          %v5295 = vpop.f32.mrb[0].mxu0
          %v5296 = vadd.f32 %v5203, %v5295
          %v5297 = vpop.f32.mrb[0].mxu0
          %v5298 = vpop.f32.mrb[0].mxu0
          %v5299 = vpop.f32.mrb[0].mxu0
          %5300 = vdwg.mxu0
          %5301 = vst [vmem:[#allocation24] sm:$0x3] %v5296
        $region148: #{event_transformer_forward.1} parent=87 // pred_fallthru
          _
        // Predicated region
        $region149: #{event_transformer_forward.1} parent=87 // pred_check
          %p5302 = pneg %p500
        $region150: #{event_transformer_forward.1} parent=87 // pred_check_branch
          %5304 = sbr.rel (%p5302) target = $region152
        $region151: #{event_transformer_forward.1} parent=87 // pred_region
          %s5306 = ssub.s32 32, 32
          %5307 = vsyncadd [#allocation5], %s5306
          %s5308 = smul.addr %s52, 32
          %s5309 = scalar_lea.hbm %s17, %s5308
          %s5311 = sshll.u32 [#allocation24], 4
          %s5312 = int_to_ptr.vmem [resolvable:$true] %s5311
          %5314 = dma.vmem_to_hbm [thread:$0]  %s5312, 32, %s5309, [#allocation5]
        $region152: #{event_transformer_forward.1} parent=87 // pred_fallthru
          _
        // Predicated region
        $region153: #{event_transformer_forward.1} parent=87 // pred_check
          %p5315 = pneg %p500
        $region154: #{event_transformer_forward.1} parent=87 // pred_check_branch
          %5317 = sbr.rel (%p5315) target = $region156
        $region155: #{event_transformer_forward.1} parent=87 // pred_region
          %5318 = dma.done [#allocation5], 32
        $region156: #{event_transformer_forward.1} parent=87 // pred_fallthru
          _
      $region88: #{event_transformer_forward.1} parent=5 // pred_fallthru
        _
      %p5319 = scmp.le.s32.totalorder 2, %s43
      // Predicated region
      $region157: #{event_transformer_forward.1} parent=5 // pred_check
        %p5320 = pneg %p5319
      $region158: #{event_transformer_forward.1} parent=5 // pred_check_branch
        %5322 = sbr.rel (%p5320) target = $region160
      $region159: #{event_transformer_forward.1} parent=5 // pred_region
        %s5323 = ssub.s32 %s43, 2
      $region160: #{event_transformer_forward.1} parent=5 // pred_fallthru
        _
    $region6: #{event_transformer_forward.1} parent=1 // loop_footer
      %s47 = sadd.s32 1, %s43
    $region7: #{event_transformer_forward.1} parent=1 // loop_footer_branch
      %42 = sbr.rel target = $region3
    $region8: #{event_transformer_forward.1} parent=1 // loop_exit
      _
    %5324 = vsyncpa [#allocation4], 1
    %s5325 = scalar_lea.sflag [#allocation4], 1
    %5326 = vsyncpa %s5325, 1
    %5327 = vsyncpa [#allocation7], 1
    %s5328 = scalar_lea.sflag [#allocation7], 1
    %5329 = vsyncpa %s5328, 1
    %5330 = vsyncpa [#allocation10], 1
    %s5331 = scalar_lea.sflag [#allocation10], 1
    %5332 = vsyncpa %s5331, 1
    %5333 = vsyncpa [#allocation13], 1
    %s5334 = scalar_lea.sflag [#allocation13], 1
    %5335 = vsyncpa %s5334, 1
    %5336 = vsyncpa [#allocation16], 1
    %s5337 = scalar_lea.sflag [#allocation16], 1
    %5338 = vsyncpa %s5337, 1
    %5339 = vsyncpa [#allocation19], 1
    %s5340 = scalar_lea.sflag [#allocation19], 1
    %5341 = vsyncpa %s5340, 1
    %5342 = vsyncpa [#allocation22], 1
    %s5343 = scalar_lea.sflag [#allocation22], 1
    %5344 = vsyncpa %s5343, 1
    %5345 = vsyncpa [#allocation5], 1
    %s5346 = scalar_lea.sflag [#allocation5], 1
    %5347 = vsyncpa %s5346, 1

</llo_original>
